<compile_context>
chip_gen: v5e
topology: v5e:2x2
jax: 0.10.0
libtpu: 0.0.40
codegen_flags: <defaults>
</compile_context>

<pallas_src>
import functools

import jax
import jax.numpy as jnp
from jax.experimental import pallas as pl
from jax.experimental.pallas import tpu as pltpu


def rdecoder_kernel(xcT_ref, bias_ref, wcT_ref, w1T_ref, b1_ref,
                    w2T_ref, b2_ref, woT_ref, bo_ref, out_ref, *, act_dtype):
    # xcT_ref : (1, 2, TN)  pixel coords, pixel axis on lanes
    # bias_ref: (1, H, 1)   per-batch column = b_coord + z @ w_latent (hoisted)
    # wcT_ref : (H, 2) f32  fc_coord weight, transposed
    # w1T/w2T : (H, H) bf16 fc-layer weights, transposed (resident)
    # b1/b2   : (H, 1) f32  fc-layer biases as columns
    # woT_ref : (1, H) bf16 output head weight, transposed
    # bo_ref  : (1, 1) f32  output head bias
    # out_ref : (1, 1, TN)  sigmoid output, lane-dense
    xc = xcT_ref[0]                                            # (2, TN) f32

    # coord_latent: two rank-1 broadcast FMAs on the VPU instead of a K=2 MXU
    # matmul; the latent contribution is already folded into bias_ref.
    pre = (wcT_ref[:, 0:1] * xc[0:1, :]
           + wcT_ref[:, 1:2] * xc[1:2, :]
           + bias_ref[0])                                      # (H, TN) f32
    h = jnp.tanh(pre.astype(act_dtype))                        # act_dtype

    # fc_layers: two (Linear + tanh) blocks. bf16 MXU operands, f32
    # accumulation + bias add, single cast, tanh in act_dtype (bf16 on
    # v6e/v7x halves EUP work; f32 on v5e).
    h1 = jnp.dot(w1T_ref[...], h.astype(jnp.bfloat16),
                 preferred_element_type=jnp.float32) + b1_ref[...]
    h = jnp.tanh(h1.astype(act_dtype))
    h2 = jnp.dot(w2T_ref[...], h.astype(jnp.bfloat16),
                 preferred_element_type=jnp.float32) + b2_ref[...]
    h = jnp.tanh(h2.astype(act_dtype))

    # Output head: (1, H) bf16 @ (H, TN) bf16 -> f32, lane-dense result/store.
    logits = (jnp.dot(woT_ref[...], h.astype(jnp.bfloat16),
                      preferred_element_type=jnp.float32)
              + bo_ref[...])                                   # (1, TN) f32
    out_ref[0] = jax.nn.sigmoid(logits)


def _tpu_generation(default=6):
    """Best-effort chip-generation detection (5 = v5e, 6 = v6e, 7 = v7x)."""
    try:
        kind = jax.devices()[0].device_kind.lower()
    except Exception:
        return default
    if "v7" in kind or "7x" in kind:
        return 7
    if "v6" in kind:
        return 6
    if "v5" in kind:
        return 5
    return default


def _vmem_limit_bytes(gen):
    """~75% of physical VMEM: 48 MiB on v7x, up to ~100 MiB on v5e/v6e."""
    try:
        cap = int(pltpu.get_tpu_info().vmem_capacity_bytes)
    except Exception:
        cap = (64 if gen >= 7 else 128) * 1024 * 1024
    return max(32 * 1024 * 1024, min(int(0.75 * cap), 100 * 1024 * 1024))


def _vmem_estimate(H, TN):
    """Rough live-VMEM estimate (bytes) for a (H, TN) working set."""
    acts = 4 * H * TN * 4                        # a few live (H, TN) f32 temps
    io = 2 * (2 * TN * 4) + 2 * (TN * 4)         # double-buffered coord + out tiles
    consts = 2 * (2 * H * H * 2 + 4 * H * 4 + 2 * H * 2 + 16)  # weights/biases (2-buffered)
    return acts + io + consts


def _choose_tn(n_padded, batch, H, gen, vmem_limit):
    """Largest 128-multiple tile dividing the padded N that fits the VMEM
    budget; on v7x also keep >= 4 grid steps so both TensorCores get work."""
    tn = 128
    for cand in (2048, 1024, 512, 256, 128):
        if n_padded % cand == 0:
            tn = cand
            break
    while tn > 128 and _vmem_estimate(H, tn) > vmem_limit:
        tn //= 2
    if gen >= 7:
        while tn > 128 and batch * (n_padded // tn) < 4:
            tn //= 2
    return tn


def rdecoder_forward(x_coord, z, params, reshape):
    """x_coord: (B, N, 2) f32, z: (B, L) f32 -> (B, *reshape) f32."""
    B, N, _ = x_coord.shape
    H = params["w1"].shape[0]

    gen = _tpu_generation()
    vmem_limit = _vmem_limit_bytes(gen)

    # Pad the pixel axis to a lane-aligned multiple of 128; tail is sliced off
    # after the kernel (replaces the old TN=N fallback that could blow VMEM).
    Np = ((N + 127) // 128) * 128
    TN = _choose_tn(Np, B, H, gen, vmem_limit)

    # bf16 tanh/activations on v6e/v7x; f32 on v5e (no bf16 VPU/EUP there).
    act_dtype = jnp.bfloat16 if gen >= 6 else jnp.float32

    # ---- wrapper-side layout plumbing + hoisted tiny matmul -----------------
    xcT = jnp.transpose(x_coord, (0, 2, 1)).astype(jnp.float32)        # (B, 2, N)
    if Np != N:
        xcT = jnp.pad(xcT, ((0, 0), (0, 0), (0, Np - N)))              # (B, 2, Np)

    bias = params["b_coord"] + z.astype(jnp.float32) @ params["w_latent"]   # (B, H)
    bias_col = bias[:, :, None].astype(jnp.float32)                    # (B, H, 1)

    wcT = params["w_coord"].T.astype(jnp.float32)                      # (H, 2)
    w1T = params["w1"].T.astype(jnp.bfloat16)                          # (H, H)
    w2T = params["w2"].T.astype(jnp.bfloat16)
    b1c = params["b1"].reshape(H, 1).astype(jnp.float32)
    b2c = params["b2"].reshape(H, 1).astype(jnp.float32)
    woT = params["w_out"].T.astype(jnp.bfloat16)                       # (1, H) bf16 head
    bo = params["b_out"].reshape(1, 1).astype(jnp.float32)

    # Constant (grid-invariant) inputs. NOTE: pipeline_mode=pl.Buffered(1) was
    # intentionally not applied (noise at H=128; kept maximally portable).
    def const(shape):
        return pl.BlockSpec(shape, lambda b, n: (0,) * len(shape))

    cost = pl.CostEstimate(
        flops=int(2 * B * Np * (2 * H + 2 * H * H + H)),
        transcendentals=int(B * Np * (3 * H + 1)),
        bytes_accessed=int(4 * (B * Np * 2 + B * H + 2 * H + 2 * H + 1 + B * Np)
                           + 2 * (2 * H * H + H)),
    )

    kernel = functools.partial(rdecoder_kernel, act_dtype=act_dtype)

    out = pl.pallas_call(
        kernel,
        out_shape=jax.ShapeDtypeStruct((B, 1, Np), jnp.float32),
        grid_spec=pltpu.PrefetchScalarGridSpec(
            num_scalar_prefetch=0,
            grid=(B, Np // TN),
            in_specs=[
                pl.BlockSpec((1, 2, TN), lambda b, n: (b, 0, n)),   # coords (lane-dense)
                pl.BlockSpec((1, H, 1), lambda b, n: (b, 0, 0)),    # per-batch bias col
                const((H, 2)),       # wcT
                const((H, H)),       # w1T (bf16), resident across grid
                const((H, 1)),       # b1
                const((H, H)),       # w2T (bf16), resident across grid
                const((H, 1)),       # b2
                const((1, H)),       # woT (bf16)
                const((1, 1)),       # bo
            ],
            out_specs=pl.BlockSpec((1, 1, TN), lambda b, n: (b, 0, n)),
        ),
        compiler_params=pltpu.CompilerParams(
            dimension_semantics=("parallel", "parallel"),
            vmem_limit_bytes=vmem_limit,
        ),
        cost_estimate=cost,
    )(xcT, bias_col, wcT, w1T, b1c, w2T, b2c, woT, bo)

    out = out[:, 0, :N]                      # drop lane padding
    return out.reshape(B, *reshape)


def init_params(key, latent_dim, hidden_dim):
    """Deterministic synthetic init; weights stored as (in_dim, out_dim)."""
    ks = jax.random.split(key, 6)
    s = 0.1
    return {
        "w_coord":  s * jax.random.normal(ks[0], (2, hidden_dim), jnp.float32),
        "b_coord":  jnp.zeros((1, hidden_dim), jnp.float32),
        "w_latent": s * jax.random.normal(ks[1], (latent_dim, hidden_dim), jnp.float32),
        "w1":       s * jax.random.normal(ks[2], (hidden_dim, hidden_dim), jnp.float32),
        "b1":       jnp.zeros((1, hidden_dim), jnp.float32),
        "w2":       s * jax.random.normal(ks[3], (hidden_dim, hidden_dim), jnp.float32),
        "b2":       jnp.zeros((1, hidden_dim), jnp.float32),
        "w_out":    s * jax.random.normal(ks[4], (hidden_dim, 1), jnp.float32),
        "b_out":    jnp.zeros((1, 1), jnp.float32),
    }


def jax_reference(x_coord, z, p, reshape):
    """Pure-JAX f32 reference matching the PyTorch forward semantics."""
    B, N, _ = x_coord.shape
    h_x = x_coord.reshape(B * N, 2) @ p["w_coord"] + p["b_coord"]
    h_x = h_x.reshape(B, N, -1)
    h_z = z @ p["w_latent"]
    h = jnp.tanh(h_x + h_z[:, None, :]).reshape(B * N, -1)
    h = jnp.tanh(h @ p["w1"] + p["b1"])
    h = jnp.tanh(h @ p["w2"] + p["b2"])
    out = jax.nn.sigmoid(h @ p["w_out"] + p["b_out"])
    return out.reshape(-1, *reshape)


if __name__ == "__main__":
    key = jax.random.PRNGKey(0)
    k_coord, k_z, k_params = jax.random.split(key, 3)

    B = 2
    H_img, W_img = 25, 40        # self.reshape = (h, w); N = 1000 exercises padding
    N = H_img * W_img            # flattened spatial grid size (padded + tiled in kernel)
    latent_dim = 8
    hidden_dim = 128

    # Coordinate grid in [-1, 1] x [-1, 1], plus a small per-batch perturbation.
    ys, xs = jnp.meshgrid(jnp.linspace(-1.0, 1.0, H_img),
                          jnp.linspace(-1.0, 1.0, W_img), indexing="ij")
    grid_xy = jnp.stack([ys.ravel(), xs.ravel()], axis=-1)           # (N, 2)
    x_coord = jnp.broadcast_to(grid_xy, (B, N, 2)).astype(jnp.float32)
    x_coord = x_coord + 0.01 * jax.random.normal(k_coord, (B, N, 2), jnp.float32)

    z = jax.random.normal(k_z, (B, latent_dim), jnp.float32)
    params = init_params(k_params, latent_dim, hidden_dim)

    out = rdecoder_forward(x_coord, z, params, (H_img, W_img))
    jax.block_until_ready(out)

    ref = jax_reference(x_coord, z, params, (H_img, W_img))
    assert out.shape == (B, H_img, W_img), out.shape
    # bf16 matmul operands (all gens) + bf16 tanh/activations (v6e/v7x only)
    # give ~1e-3..1e-2 deviation from the pure-f32 reference.
    err = float(jnp.max(jnp.abs(out - ref)))
    assert err < 3e-2, err

    print("KERNEL_OK")
</pallas_src>

<mosaic_0001>
module attributes {stable_mosaic.version = 11 : i64} {
  func.func @rdecoder_kernel(%arg0: i32, %arg1: i32, %arg2: memref<1x2x1024xf32, #tpu.memory_space<vmem>>, %arg3: memref<1x128x1xf32, #tpu.memory_space<vmem>>, %arg4: memref<128x2xf32, #tpu.memory_space<vmem>>, %arg5: memref<128x128xbf16, #tpu.memory_space<vmem>>, %arg6: memref<128x1xf32, #tpu.memory_space<vmem>>, %arg7: memref<128x128xbf16, #tpu.memory_space<vmem>>, %arg8: memref<128x1xf32, #tpu.memory_space<vmem>>, %arg9: memref<1x128xbf16, #tpu.memory_space<vmem>>, %arg10: memref<1x1xf32, #tpu.memory_space<vmem>>, %arg11: memref<1x1x1024xf32, #tpu.memory_space<vmem>>) attributes {dimension_semantics = [#tpu.dimension_semantics<parallel>, #tpu.dimension_semantics<parallel>], iteration_bounds = array<i64: 2, 1>, scalar_prefetch = 0 : i64, scratch_operands = 0 : i64, tpu.core_type = #tpu.core_type<tc>, window_params = [{transform_indices = @transform_0, window_bounds = array<i64: 1, 2, 1024>}, {transform_indices = @transform_1, window_bounds = array<i64: 1, 128, 1>}, {pipeline_mode = #tpu.pipeline_mode<synchronous>, transform_indices = @transform_2, window_bounds = array<i64: 128, 2>}, {pipeline_mode = #tpu.pipeline_mode<synchronous>, transform_indices = @transform_3, window_bounds = array<i64: 128, 128>}, {pipeline_mode = #tpu.pipeline_mode<synchronous>, transform_indices = @transform_4, window_bounds = array<i64: 128, 1>}, {pipeline_mode = #tpu.pipeline_mode<synchronous>, transform_indices = @transform_5, window_bounds = array<i64: 128, 128>}, {pipeline_mode = #tpu.pipeline_mode<synchronous>, transform_indices = @transform_6, window_bounds = array<i64: 128, 1>}, {pipeline_mode = #tpu.pipeline_mode<synchronous>, transform_indices = @transform_7, window_bounds = array<i64: 1, 128>}, {pipeline_mode = #tpu.pipeline_mode<synchronous>, transform_indices = @transform_8, window_bounds = array<i64: 1, 1>}, {transform_indices = @transform_9, window_bounds = array<i64: 1, 1, 1024>}]} {
    %c0 = arith.constant 0 : index
    %c0_0 = arith.constant 0 : index
    %c0_1 = arith.constant 0 : index
    %0 = vector.load %arg2[%c0, %c0_0, %c0_1] : memref<1x2x1024xf32, #tpu.memory_space<vmem>>, vector<1x2x1024xf32>
    %1 = vector.shape_cast %0 : vector<1x2x1024xf32> to vector<2x1024xf32>
    %c0_2 = arith.constant 0 : index
    %c0_3 = arith.constant 0 : index
    %2 = vector.load %arg4[%c0_2, %c0_3] : memref<128x2xf32, #tpu.memory_space<vmem>>, vector<128x1xf32>
    %3 = vector.extract_strided_slice %1 {offsets = [0, 0], sizes = [1, 1024], strides = [1, 1]} : vector<2x1024xf32> to vector<1x1024xf32>
    %4 = vector.broadcast %2 : vector<128x1xf32> to vector<128x1024xf32>
    %5 = vector.broadcast %3 : vector<1x1024xf32> to vector<128x1024xf32>
    %6 = arith.mulf %4, %5 : vector<128x1024xf32>
    %c0_4 = arith.constant 0 : index
    %c1 = arith.constant 1 : index
    %7 = vector.load %arg4[%c0_4, %c1] : memref<128x2xf32, #tpu.memory_space<vmem>>, vector<128x1xf32>
    %8 = vector.extract_strided_slice %1 {offsets = [1, 0], sizes = [1, 1024], strides = [1, 1]} : vector<2x1024xf32> to vector<1x1024xf32>
    %9 = vector.broadcast %7 : vector<128x1xf32> to vector<128x1024xf32>
    %10 = vector.broadcast %8 : vector<1x1024xf32> to vector<128x1024xf32>
    %11 = arith.mulf %9, %10 : vector<128x1024xf32>
    %12 = arith.addf %6, %11 : vector<128x1024xf32>
    %c0_5 = arith.constant 0 : index
    %c0_6 = arith.constant 0 : index
    %c0_7 = arith.constant 0 : index
    %13 = vector.load %arg3[%c0_5, %c0_6, %c0_7] : memref<1x128x1xf32, #tpu.memory_space<vmem>>, vector<1x128x1xf32>
    %14 = vector.shape_cast %13 : vector<1x128x1xf32> to vector<128x1xf32>
    %15 = vector.broadcast %14 : vector<128x1xf32> to vector<128x1024xf32>
    %16 = arith.addf %12, %15 : vector<128x1024xf32>
    %17 = arith.truncf %16 : vector<128x1024xf32> to vector<128x1024xbf16>
    %18 = math.tanh %17 : vector<128x1024xbf16>
    %c0_8 = arith.constant 0 : index
    %c0_9 = arith.constant 0 : index
    %19 = vector.load %arg5[%c0_8, %c0_9] : memref<128x128xbf16, #tpu.memory_space<vmem>>, vector<128x128xbf16>
    %cst = arith.constant dense<0.000000e+00> : vector<128x1024xf32>
    %20 = tpu.matmul %19, %18, %cst {dimension_numbers = #tpu.dot_dimension_numbers<[1], [0], [0], [1], [0, 0, 1, 1], [], []>} : vector<128x128xbf16>, vector<128x1024xbf16>, vector<128x1024xf32> -> vector<128x1024xf32>
    %c0_10 = arith.constant 0 : index
    %c0_11 = arith.constant 0 : index
    %21 = vector.load %arg6[%c0_10, %c0_11] : memref<128x1xf32, #tpu.memory_space<vmem>>, vector<128x1xf32>
    %22 = vector.broadcast %21 : vector<128x1xf32> to vector<128x1024xf32>
    %23 = arith.addf %20, %22 : vector<128x1024xf32>
    %24 = arith.truncf %23 : vector<128x1024xf32> to vector<128x1024xbf16>
    %25 = math.tanh %24 : vector<128x1024xbf16>
    %c0_12 = arith.constant 0 : index
    %c0_13 = arith.constant 0 : index
    %26 = vector.load %arg7[%c0_12, %c0_13] : memref<128x128xbf16, #tpu.memory_space<vmem>>, vector<128x128xbf16>
    %cst_14 = arith.constant dense<0.000000e+00> : vector<128x1024xf32>
    %27 = tpu.matmul %26, %25, %cst_14 {dimension_numbers = #tpu.dot_dimension_numbers<[1], [0], [0], [1], [0, 0, 1, 1], [], []>} : vector<128x128xbf16>, vector<128x1024xbf16>, vector<128x1024xf32> -> vector<128x1024xf32>
    %c0_15 = arith.constant 0 : index
    %c0_16 = arith.constant 0 : index
    %28 = vector.load %arg8[%c0_15, %c0_16] : memref<128x1xf32, #tpu.memory_space<vmem>>, vector<128x1xf32>
    %29 = vector.broadcast %28 : vector<128x1xf32> to vector<128x1024xf32>
    %30 = arith.addf %27, %29 : vector<128x1024xf32>
    %31 = arith.truncf %30 : vector<128x1024xf32> to vector<128x1024xbf16>
    %32 = math.tanh %31 : vector<128x1024xbf16>
    %c0_17 = arith.constant 0 : index
    %c0_18 = arith.constant 0 : index
    %33 = vector.load %arg9[%c0_17, %c0_18] : memref<1x128xbf16, #tpu.memory_space<vmem>>, vector<1x128xbf16>
    %cst_19 = arith.constant dense<0.000000e+00> : vector<1x1024xf32>
    %34 = tpu.matmul %33, %32, %cst_19 {dimension_numbers = #tpu.dot_dimension_numbers<[1], [0], [0], [1], [0, 0, 1, 1], [], []>} : vector<1x128xbf16>, vector<128x1024xbf16>, vector<1x1024xf32> -> vector<1x1024xf32>
    %c0_20 = arith.constant 0 : index
    %c0_21 = arith.constant 0 : index
    %35 = vector.load %arg10[%c0_20, %c0_21] : memref<1x1xf32, #tpu.memory_space<vmem>>, vector<1x1xf32>
    %36 = vector.broadcast %35 : vector<1x1xf32> to vector<1x1024xf32>
    %37 = arith.addf %34, %36 : vector<1x1024xf32>
    %38 = arith.negf %37 : vector<1x1024xf32>
    %39 = math.exp %38 : vector<1x1024xf32>
    %cst_22 = arith.constant 1.000000e+00 : f32
    %40 = vector.broadcast %cst_22 : f32 to vector<1x1024xf32>
    %41 = arith.addf %40, %39 : vector<1x1024xf32>
    %42 = arith.divf %40, %41 : vector<1x1024xf32>
    %c0_23 = arith.constant 0 : index
    %c0_24 = arith.constant 0 : index
    %c0_25 = arith.constant 0 : index
    %43 = vector.load %arg11[%c0_23, %c0_24, %c0_25] : memref<1x1x1024xf32, #tpu.memory_space<vmem>>, vector<1x1x1024xf32>
    %44 = vector.shape_cast %43 : vector<1x1x1024xf32> to vector<1x1024xf32>
    %45 = vector.shape_cast %42 : vector<1x1024xf32> to vector<1x1x1024xf32>
    tpu.vector_store %arg11[%c0_23, %c0_24, %c0_25], %45 {strides = array<i32>} : memref<1x1x1024xf32, #tpu.memory_space<vmem>>, vector<1x1x1024xf32>,
    return
  }
  func.func @transform_0(%arg0: i32, %arg1: i32) -> (i32, i32, i32) {
    %c0_i32 = arith.constant 0 : i32
    %c0_i32_0 = arith.constant 0 : i32
    return %arg0, %c0_i32, %arg1 : i32, i32, i32
  }
  func.func @transform_1(%arg0: i32, %arg1: i32) -> (i32, i32, i32) {
    %c0_i32 = arith.constant 0 : i32
    %c0_i32_0 = arith.constant 0 : i32
    %c0_i32_1 = arith.constant 0 : i32
    return %arg0, %c0_i32, %c0_i32_0 : i32, i32, i32
  }
  func.func @transform_2(%arg0: i32, %arg1: i32) -> (i32, i32) {
    %c0_i32 = arith.constant 0 : i32
    %c0_i32_0 = arith.constant 0 : i32
    %c0_i32_1 = arith.constant 0 : i32
    return %c0_i32, %c0_i32_0 : i32, i32
  }
  func.func @transform_3(%arg0: i32, %arg1: i32) -> (i32, i32) {
    %c0_i32 = arith.constant 0 : i32
    %c0_i32_0 = arith.constant 0 : i32
    %c0_i32_1 = arith.constant 0 : i32
    return %c0_i32, %c0_i32_0 : i32, i32
  }
  func.func @transform_4(%arg0: i32, %arg1: i32) -> (i32, i32) {
    %c0_i32 = arith.constant 0 : i32
    %c0_i32_0 = arith.constant 0 : i32
    %c0_i32_1 = arith.constant 0 : i32
    return %c0_i32, %c0_i32_0 : i32, i32
  }
  func.func @transform_5(%arg0: i32, %arg1: i32) -> (i32, i32) {
    %c0_i32 = arith.constant 0 : i32
    %c0_i32_0 = arith.constant 0 : i32
    %c0_i32_1 = arith.constant 0 : i32
    return %c0_i32, %c0_i32_0 : i32, i32
  }
  func.func @transform_6(%arg0: i32, %arg1: i32) -> (i32, i32) {
    %c0_i32 = arith.constant 0 : i32
    %c0_i32_0 = arith.constant 0 : i32
    %c0_i32_1 = arith.constant 0 : i32
    return %c0_i32, %c0_i32_0 : i32, i32
  }
  func.func @transform_7(%arg0: i32, %arg1: i32) -> (i32, i32) {
    %c0_i32 = arith.constant 0 : i32
    %c0_i32_0 = arith.constant 0 : i32
    %c0_i32_1 = arith.constant 0 : i32
    return %c0_i32, %c0_i32_0 : i32, i32
  }
  func.func @transform_8(%arg0: i32, %arg1: i32) -> (i32, i32) {
    %c0_i32 = arith.constant 0 : i32
    %c0_i32_0 = arith.constant 0 : i32
    %c0_i32_1 = arith.constant 0 : i32
    return %c0_i32, %c0_i32_0 : i32, i32
  }
  func.func @transform_9(%arg0: i32, %arg1: i32) -> (i32, i32, i32) {
    %c0_i32 = arith.constant 0 : i32
    %c0_i32_0 = arith.constant 0 : i32
    return %arg0, %c0_i32, %arg1 : i32, i32, i32
  }
}

</mosaic_0001>

<llo_original>
// kernel: tpu_custom_call.1
$region0: #{tpu_custom_call.1}
  #allocation0 [shape = 'u32[]', space=smem, size = 0x4, offset = 0x4, fixed_abs, tag = 'smem constant byte address 0x4 - core index']
  #allocation1 [shape = 'u32[72,128]{1,0:T(1,128)}', space=vmem, size = 0x9000, scoped, tag = 'internal scratch']
  #allocation2 [shape = 'f32[1,1]{1,0:T(1,128)S(1)}', space=vmem, size = 0x200, scoped, tag = 'scoped memory for tpu_custom_call.1']
  %s0 = inlined_call_operand.vmem [shape: f32[2,2,1024], index: 0, kind: input, shape index: {}]
  %s1 = inlined_call_operand.vmem [shape: f32[2,128,1], index: 1, kind: input, shape index: {}]
  %s2 = inlined_call_operand.vmem [shape: f32[128,2], index: 2, kind: input, shape index: {}]
  %s3 = inlined_call_operand.vmem [shape: bf16[128,128], index: 3, kind: input, shape index: {}]
  %s4 = inlined_call_operand.vmem [shape: f32[128,1], index: 4, kind: input, shape index: {}]
  %s5 = inlined_call_operand.vmem [shape: bf16[128,128], index: 5, kind: input, shape index: {}]
  %s6 = inlined_call_operand.vmem [shape: f32[128,1], index: 6, kind: input, shape index: {}]
  %s7 = inlined_call_operand.vmem [shape: bf16[1,128], index: 7, kind: input, shape index: {}]
  %s8 = inlined_call_operand.<no memory space> [shape: f32[1,1], index: 8, kind: input, shape index: {}]
  %s9 = inlined_call_operand.hbm [shape: f32[2,1,1024], index: 9, kind: output, shape index: {}]
  %s10 = sld [smem:[#allocation0]]
  $region69: #{tpu_custom_call.1} parent=0
    _
  %s12 = ssub.s32 1, %s10
  %s13 = scalar_select 0, %s12, %s10
  %v14 = vstv %s8
  %15 = vst [vmem:[#allocation2] sm:$0x1] %v14
  $region1: #{tpu_custom_call.1} parent=0
    #allocation3 [shape = 'u8[8192]{0}', space=vmem, size = 0x2000, scoped, tag = 'output window, operand 0']
    #allocation4 [shape = 's32[2]{0}', space=sflag, size = 0x8, scoped, tag = 'scoped memory for tpu_custom_call.1']
    %16 = vsyncpa [#allocation4], 0
    %s17 = scalar_lea.sflag [#allocation4], 1
    %18 = vsyncpa %s17, 0
    loop: start=0, step=1, limit=4
    $region2: #{tpu_custom_call.1} parent=1 // loop_pre_header
      _
    $region3: #{tpu_custom_call.1} parent=1 // loop_header
      %s20 = sphi 0, %s24
      %p21 = scmp.ge.s32.totalorder %s20, 4
      %s27 = sphi 0, %s39
      %s28 = sphi 0, %s35
      %s29 = sphi 0, %s27
      %s30 = sphi 0, %s28
      %s31 = sphi 0, %s29
      %s32 = sphi 0, %s30
      %s44 = sphi 0, %s46
      %s47 = sphi 0, %s44
      %s48 = sphi 0, %s47
      %s64 = sphi 0, %s48
      %s70 = sphi 0, %s72
      %s73 = sphi 0, %s70
      %s74 = sphi 0, %s73
      %s90 = sphi 0, %s74
      %s94 = sphi 0, %s94
      %s96 = sphi 0, %s94
      %s97 = sphi 0, %s96
      %s111 = sphi 0, %s97
      %s115 = sphi 0, %s115
      %s117 = sphi 0, %s115
      %s118 = sphi 0, %s117
      %s132 = sphi 0, %s118
      %s136 = sphi 0, %s136
      %s138 = sphi 0, %s136
      %s139 = sphi 0, %s138
      %s153 = sphi 0, %s139
      %s157 = sphi 0, %s157
      %s159 = sphi 0, %s157
      %s160 = sphi 0, %s159
      %s174 = sphi 0, %s160
      %s178 = sphi 0, %s178
      %s180 = sphi 0, %s178
      %s181 = sphi 0, %s180
      %s195 = sphi 0, %s181
      %s199 = sphi 0, %s199
      %s201 = sphi 0, %s199
      %s202 = sphi 0, %s201
      %s216 = sphi 0, %s202
      %s220 = sphi 0, %s220
      %s222 = sphi 0, %s220
      %s223 = sphi 0, %s222
      %s237 = sphi 0, %s223
      %s245 = sphi 0, %s247
      %s248 = sphi 0, %s245
      %s249 = sphi 0, %s248
      %s265 = sphi 0, %s249
    $region4: #{tpu_custom_call.1} parent=1 // loop_header_branch
      %23 = sbr.rel (%p21) target = $region8
    $region5: #{tpu_custom_call.1} parent=1 // loop_body
      %s25 = ssub.s32 %s20, 1
      %s26 = ssub.s32 %s20, 2
      %s33 = sadd.s32 1, %s28
      %p34 = scmp.ge.s32.totalorder %s33, 1
      %s35 = scalar_select %p34, 0, %s33
      %s36 = sadd.s32 1, %s27
      %s37 = scalar_select %p34, %s36, %s27
      %p38 = scmp.ge.s32.totalorder %s37, 2
      %s39 = scalar_select %p38, 0, %s37
      %s40 = ssub.s32 %s27, %s39
      %s41 = ssub.s32 %s28, %s35
      %s42 = sor.u32 %s40, %s41
      %p43 = scmp.eq.s32.totalorder %s42, 0
      %s45 = sadd.s32 %s44, 1
      %s46 = scalar_select %p43, %s44, %s45
      %p49 = pneg %p43
      %p50 = scmp.eq.s32.totalorder %s20, 1
      %p51 = por %p49, %p50
      %p52 = scmp.ne.s32.totalorder %s44, %s47
      %p53 = scmp.eq.s32.totalorder %s20, 0
      %p54 = por %p52, %p53
      %p55 = scmp.ne.s32.totalorder %s44, %s47
      %p56 = scmp.eq.s32.totalorder %s25, 1
      %p57 = por %p55, %p56
      %p58 = scmp.ne.s32.totalorder %s47, %s48
      %p59 = scmp.eq.s32.totalorder %s25, 0
      %p60 = por %p58, %p59
      %p61 = scmp.ne.s32.totalorder %s47, %s48
      %p62 = scmp.eq.s32.totalorder %s26, 1
      %p63 = por %p61, %p62
      %p65 = scmp.ne.s32.totalorder %s48, %s64
      %p66 = scmp.eq.s32.totalorder %s26, 0
      %p67 = por %p65, %p66
      %s68 = ssub.s32 %s27, %s39
      %p69 = scmp.eq.s32.totalorder %s68, 0
      %s71 = sadd.s32 %s70, 1
      %s72 = scalar_select %p69, %s70, %s71
      %p75 = pneg %p69
      %p76 = scmp.eq.s32.totalorder %s20, 1
      %p77 = por %p75, %p76
      %p78 = scmp.ne.s32.totalorder %s70, %s73
      %p79 = scmp.eq.s32.totalorder %s20, 0
      %p80 = por %p78, %p79
      %p81 = scmp.ne.s32.totalorder %s70, %s73
      %p82 = scmp.eq.s32.totalorder %s25, 1
      %p83 = por %p81, %p82
      %p84 = scmp.ne.s32.totalorder %s73, %s74
      %p85 = scmp.eq.s32.totalorder %s25, 0
      %p86 = por %p84, %p85
      %p87 = scmp.ne.s32.totalorder %s73, %s74
      %p88 = scmp.eq.s32.totalorder %s26, 1
      %p89 = por %p87, %p88
      %p91 = scmp.ne.s32.totalorder %s74, %s90
      %p92 = scmp.eq.s32.totalorder %s26, 0
      %p93 = por %p91, %p92
      %s95 = sadd.s32 %s94, 1
      %p98 = scmp.eq.s32.totalorder %s20, 1
      %p99 = scmp.ne.s32.totalorder %s94, %s96
      %p100 = scmp.eq.s32.totalorder %s20, 0
      %p101 = por %p99, %p100
      %p102 = scmp.ne.s32.totalorder %s94, %s96
      %p103 = scmp.eq.s32.totalorder %s25, 1
      %p104 = por %p102, %p103
      %p105 = scmp.ne.s32.totalorder %s96, %s97
      %p106 = scmp.eq.s32.totalorder %s25, 0
      %p107 = por %p105, %p106
      %p108 = scmp.ne.s32.totalorder %s96, %s97
      %p109 = scmp.eq.s32.totalorder %s26, 1
      %p110 = por %p108, %p109
      %p112 = scmp.ne.s32.totalorder %s97, %s111
      %p113 = scmp.eq.s32.totalorder %s26, 0
      %p114 = por %p112, %p113
      %s116 = sadd.s32 %s115, 1
      %p119 = scmp.eq.s32.totalorder %s20, 1
      %p120 = scmp.ne.s32.totalorder %s115, %s117
      %p121 = scmp.eq.s32.totalorder %s20, 0
      %p122 = por %p120, %p121
      %p123 = scmp.ne.s32.totalorder %s115, %s117
      %p124 = scmp.eq.s32.totalorder %s25, 1
      %p125 = por %p123, %p124
      %p126 = scmp.ne.s32.totalorder %s117, %s118
      %p127 = scmp.eq.s32.totalorder %s25, 0
      %p128 = por %p126, %p127
      %p129 = scmp.ne.s32.totalorder %s117, %s118
      %p130 = scmp.eq.s32.totalorder %s26, 1
      %p131 = por %p129, %p130
      %p133 = scmp.ne.s32.totalorder %s118, %s132
      %p134 = scmp.eq.s32.totalorder %s26, 0
      %p135 = por %p133, %p134
      %s137 = sadd.s32 %s136, 1
      %p140 = scmp.eq.s32.totalorder %s20, 1
      %p141 = scmp.ne.s32.totalorder %s136, %s138
      %p142 = scmp.eq.s32.totalorder %s20, 0
      %p143 = por %p141, %p142
      %p144 = scmp.ne.s32.totalorder %s136, %s138
      %p145 = scmp.eq.s32.totalorder %s25, 1
      %p146 = por %p144, %p145
      %p147 = scmp.ne.s32.totalorder %s138, %s139
      %p148 = scmp.eq.s32.totalorder %s25, 0
      %p149 = por %p147, %p148
      %p150 = scmp.ne.s32.totalorder %s138, %s139
      %p151 = scmp.eq.s32.totalorder %s26, 1
      %p152 = por %p150, %p151
      %p154 = scmp.ne.s32.totalorder %s139, %s153
      %p155 = scmp.eq.s32.totalorder %s26, 0
      %p156 = por %p154, %p155
      %s158 = sadd.s32 %s157, 1
      %p161 = scmp.eq.s32.totalorder %s20, 1
      %p162 = scmp.ne.s32.totalorder %s157, %s159
      %p163 = scmp.eq.s32.totalorder %s20, 0
      %p164 = por %p162, %p163
      %p165 = scmp.ne.s32.totalorder %s157, %s159
      %p166 = scmp.eq.s32.totalorder %s25, 1
      %p167 = por %p165, %p166
      %p168 = scmp.ne.s32.totalorder %s159, %s160
      %p169 = scmp.eq.s32.totalorder %s25, 0
      %p170 = por %p168, %p169
      %p171 = scmp.ne.s32.totalorder %s159, %s160
      %p172 = scmp.eq.s32.totalorder %s26, 1
      %p173 = por %p171, %p172
      %p175 = scmp.ne.s32.totalorder %s160, %s174
      %p176 = scmp.eq.s32.totalorder %s26, 0
      %p177 = por %p175, %p176
      %s179 = sadd.s32 %s178, 1
      %p182 = scmp.eq.s32.totalorder %s20, 1
      %p183 = scmp.ne.s32.totalorder %s178, %s180
      %p184 = scmp.eq.s32.totalorder %s20, 0
      %p185 = por %p183, %p184
      %p186 = scmp.ne.s32.totalorder %s178, %s180
      %p187 = scmp.eq.s32.totalorder %s25, 1
      %p188 = por %p186, %p187
      %p189 = scmp.ne.s32.totalorder %s180, %s181
      %p190 = scmp.eq.s32.totalorder %s25, 0
      %p191 = por %p189, %p190
      %p192 = scmp.ne.s32.totalorder %s180, %s181
      %p193 = scmp.eq.s32.totalorder %s26, 1
      %p194 = por %p192, %p193
      %p196 = scmp.ne.s32.totalorder %s181, %s195
      %p197 = scmp.eq.s32.totalorder %s26, 0
      %p198 = por %p196, %p197
      %s200 = sadd.s32 %s199, 1
      %p203 = scmp.eq.s32.totalorder %s20, 1
      %p204 = scmp.ne.s32.totalorder %s199, %s201
      %p205 = scmp.eq.s32.totalorder %s20, 0
      %p206 = por %p204, %p205
      %p207 = scmp.ne.s32.totalorder %s199, %s201
      %p208 = scmp.eq.s32.totalorder %s25, 1
      %p209 = por %p207, %p208
      %p210 = scmp.ne.s32.totalorder %s201, %s202
      %p211 = scmp.eq.s32.totalorder %s25, 0
      %p212 = por %p210, %p211
      %p213 = scmp.ne.s32.totalorder %s201, %s202
      %p214 = scmp.eq.s32.totalorder %s26, 1
      %p215 = por %p213, %p214
      %p217 = scmp.ne.s32.totalorder %s202, %s216
      %p218 = scmp.eq.s32.totalorder %s26, 0
      %p219 = por %p217, %p218
      %s221 = sadd.s32 %s220, 1
      %p224 = scmp.eq.s32.totalorder %s20, 1
      %p225 = scmp.ne.s32.totalorder %s220, %s222
      %p226 = scmp.eq.s32.totalorder %s20, 0
      %p227 = por %p225, %p226
      %p228 = scmp.ne.s32.totalorder %s220, %s222
      %p229 = scmp.eq.s32.totalorder %s25, 1
      %p230 = por %p228, %p229
      %p231 = scmp.ne.s32.totalorder %s222, %s223
      %p232 = scmp.eq.s32.totalorder %s25, 0
      %p233 = por %p231, %p232
      %p234 = scmp.ne.s32.totalorder %s222, %s223
      %p235 = scmp.eq.s32.totalorder %s26, 1
      %p236 = por %p234, %p235
      %p238 = scmp.ne.s32.totalorder %s223, %s237
      %p239 = scmp.eq.s32.totalorder %s26, 0
      %p240 = por %p238, %p239
      %s241 = ssub.s32 %s27, %s39
      %s242 = ssub.s32 %s28, %s35
      %s243 = sor.u32 %s241, %s242
      %p244 = scmp.eq.s32.totalorder %s243, 0
      %s246 = sadd.s32 %s245, 1
      %s247 = scalar_select %p244, %s245, %s246
      %p250 = pneg %p244
      %p251 = scmp.eq.s32.totalorder %s20, 1
      %p252 = por %p250, %p251
      %p253 = scmp.ne.s32.totalorder %s245, %s248
      %p254 = scmp.eq.s32.totalorder %s20, 0
      %p255 = por %p253, %p254
      %p256 = scmp.ne.s32.totalorder %s245, %s248
      %p257 = scmp.eq.s32.totalorder %s25, 1
      %p258 = por %p256, %p257
      %p259 = scmp.ne.s32.totalorder %s248, %s249
      %p260 = scmp.eq.s32.totalorder %s25, 0
      %p261 = por %p259, %p260
      %p262 = scmp.ne.s32.totalorder %s248, %s249
      %p263 = scmp.eq.s32.totalorder %s26, 1
      %p264 = por %p262, %p263
      %p266 = scmp.ne.s32.totalorder %s249, %s265
      %p267 = scmp.eq.s32.totalorder %s26, 0
      %p268 = por %p266, %p267
      %p269 = scmp.le.s32.totalorder 1, %s20
      %p270 = scmp.lt.s32.totalorder %s20, 3
      %p271 = pnand %p269, %p270
      %p272 = pneg %p271
      // Predicated region
      $region9: #{tpu_custom_call.1} parent=5 // pred_check
        _
      $region10: #{tpu_custom_call.1} parent=5 // pred_check_branch
        %274 = sbr.rel (%p271) target = $region12
      $region11: #{tpu_custom_call.1} parent=5 // pred_region
        %s275 = ssub.s32 %s20, 1
        // Predicated region
        $region13: #{tpu_custom_call.1} parent=11 // pred_check
          %p276 = pneg %p107
        $region14: #{tpu_custom_call.1} parent=11 // pred_check_branch
          %278 = sbr.rel (%p276) target = $region16
        $region15: #{tpu_custom_call.1} parent=11 // pred_region
          _
        $region16: #{tpu_custom_call.1} parent=11 // pred_fallthru
          _
        // Predicated region
        $region17: #{tpu_custom_call.1} parent=11 // pred_check
          %p279 = pneg %p128
        $region18: #{tpu_custom_call.1} parent=11 // pred_check_branch
          %281 = sbr.rel (%p279) target = $region20
        $region19: #{tpu_custom_call.1} parent=11 // pred_region
          _
        $region20: #{tpu_custom_call.1} parent=11 // pred_fallthru
          _
        // Predicated region
        $region21: #{tpu_custom_call.1} parent=11 // pred_check
          %p282 = pneg %p149
        $region22: #{tpu_custom_call.1} parent=11 // pred_check_branch
          %284 = sbr.rel (%p282) target = $region24
        $region23: #{tpu_custom_call.1} parent=11 // pred_region
          _
        $region24: #{tpu_custom_call.1} parent=11 // pred_fallthru
          _
        // Predicated region
        $region25: #{tpu_custom_call.1} parent=11 // pred_check
          %p285 = pneg %p170
        $region26: #{tpu_custom_call.1} parent=11 // pred_check_branch
          %287 = sbr.rel (%p285) target = $region28
        $region27: #{tpu_custom_call.1} parent=11 // pred_region
          _
        $region28: #{tpu_custom_call.1} parent=11 // pred_fallthru
          _
        // Predicated region
        $region29: #{tpu_custom_call.1} parent=11 // pred_check
          %p288 = pneg %p191
        $region30: #{tpu_custom_call.1} parent=11 // pred_check_branch
          %290 = sbr.rel (%p288) target = $region32
        $region31: #{tpu_custom_call.1} parent=11 // pred_region
          _
        $region32: #{tpu_custom_call.1} parent=11 // pred_fallthru
          _
        // Predicated region
        $region33: #{tpu_custom_call.1} parent=11 // pred_check
          %p291 = pneg %p212
        $region34: #{tpu_custom_call.1} parent=11 // pred_check_branch
          %293 = sbr.rel (%p291) target = $region36
        $region35: #{tpu_custom_call.1} parent=11 // pred_region
          _
        $region36: #{tpu_custom_call.1} parent=11 // pred_fallthru
          _
        // Predicated region
        $region37: #{tpu_custom_call.1} parent=11 // pred_check
          %p294 = pneg %p233
        $region38: #{tpu_custom_call.1} parent=11 // pred_check_branch
          %296 = sbr.rel (%p294) target = $region40
        $region39: #{tpu_custom_call.1} parent=11 // pred_region
          _
        $region40: #{tpu_custom_call.1} parent=11 // pred_fallthru
          _
      $region12: #{tpu_custom_call.1} parent=5 // pred_fallthru
        _
      %p297 = scmp.lt.s32.totalorder %s20, 2
      // Predicated region
      $region41: #{tpu_custom_call.1} parent=5 // pred_check
        %p298 = pneg %p297
      $region42: #{tpu_custom_call.1} parent=5 // pred_check_branch
        %300 = sbr.rel (%p298) target = $region44
      $region43: #{tpu_custom_call.1} parent=5 // pred_region
        // Predicated region
        $region45: #{tpu_custom_call.1} parent=43 // pred_check
          %p301 = pneg %p54
        $region46: #{tpu_custom_call.1} parent=43 // pred_check_branch
          %303 = sbr.rel (%p301) target = $region48
        $region47: #{tpu_custom_call.1} parent=43 // pred_region
          %s304 = smul.u32 8, %s28
          %p305 = scmp.lt.s32.totalorder %s27, 1
          %s306 = scalar_select %p305, %s27, 1
          %p307 = scmp.lt.s32.totalorder %s304, 7
          %s308 = scalar_select %p307, %s304, 7
          %s309 = smul.addr %s306, 8
          %s310 = sadd.s32 %s308, %s309
          %s311 = smul.addr %s310, 2
          %s312 = scalar_lea.vmem %s0, %s311
          %s313 = smul.u32 8, %s28
        $region48: #{tpu_custom_call.1} parent=43 // pred_fallthru
          _
        // Predicated region
        $region49: #{tpu_custom_call.1} parent=43 // pred_check
          %p314 = pneg %p80
        $region50: #{tpu_custom_call.1} parent=43 // pred_check_branch
          %316 = sbr.rel (%p314) target = $region52
        $region51: #{tpu_custom_call.1} parent=43 // pred_region
          %p317 = scmp.lt.s32.totalorder %s27, 1
          %s318 = scalar_select %p317, %s27, 1
          %s319 = smul.addr %s318, 16
          %s320 = smul.addr %s319, 8
          %s321 = scalar_lea.vmem %s1, %s320
        $region52: #{tpu_custom_call.1} parent=43 // pred_fallthru
          _
      $region44: #{tpu_custom_call.1} parent=5 // pred_fallthru
        _
      %p322 = scmp.le.s32.totalorder 1, %s20
      %p323 = scmp.lt.s32.totalorder %s20, 3
      %p324 = pnand %p322, %p323
      %p325 = pneg %p324
      // Predicated region
      $region53: #{tpu_custom_call.1} parent=5 // pred_check
        _
      $region54: #{tpu_custom_call.1} parent=5 // pred_check_branch
        %327 = sbr.rel (%p324) target = $region56
      $region55: #{tpu_custom_call.1} parent=5 // pred_region
        %s328 = ssub.s32 %s20, 1
        %s329 = smul.u32 8, %s30
        %p330 = scmp.lt.s32.totalorder %s29, 1
        %s331 = scalar_select %p330, %s29, 1
        %p332 = scmp.lt.s32.totalorder %s329, 7
        %s333 = scalar_select %p332, %s329, 7
        %s334 = smul.addr %s331, 8
        %s335 = sadd.s32 %s333, %s334
        %s336 = smul.addr %s335, 2
        %s337 = scalar_lea.vmem %s0, %s336
        %p338 = pneg %p60
        %p339 = pneg %p57
        %p340 = scmp.lt.s32.totalorder %s29, 1
        %s341 = scalar_select %p340, %s29, 1
        %s342 = smul.addr %s341, 16
        %s343 = smul.addr %s342, 8
        %s344 = scalar_lea.vmem %s1, %s343
        %p345 = pneg %p86
        %p346 = pneg %p83
        %p347 = pneg %p107
        %p348 = pneg %p104
        %p349 = pneg %p128
        %p350 = pneg %p125
        %p351 = pneg %p149
        %p352 = pneg %p146
        %p353 = pneg %p170
        %p354 = pneg %p167
        %p355 = pneg %p191
        %p356 = pneg %p188
        %p357 = pneg %p212
        %p358 = pneg %p209
        %p359 = pneg %p233
        %p360 = pneg %p230
        %p361 = pneg %p261
        %p362 = pneg %p258
        %s363 = sand.u32 %s248, 1
        %s364 = scalar_lea.sflag [#allocation4], %s363
        %s365 = sand.u32 %s248, 1
        %s366 = smul.addr %s365, 8
        %s367 = scalar_lea.vmem [#allocation3], %s366
        %s368 = smul.u32 8, %s30
        %p369 = scmp.lt.s32.totalorder %s29, 1
        %s370 = scalar_select %p369, %s29, 1
        %p371 = scmp.lt.s32.totalorder %s368, 7
        %s372 = scalar_select %p371, %s368, 7
        %s373 = smul.addr %s370, 8
        %s374 = sadd.s32 %s372, %s373
        %s375 = smul.addr %s374, 2
        %s376 = scalar_lea.vmem %s0, %s375
        %s377 = smul.u32 8, %s30
        %p378 = scmp.lt.s32.totalorder %s29, 1
        %s379 = scalar_select %p378, %s29, 1
        %s380 = smul.addr %s379, 16
        %s381 = smul.addr %s380, 8
        %s382 = scalar_lea.vmem %s1, %s381
        %s383 = smul.u32 8, %s30
        %v384 = vld [vmem:[%s376] sm:$0xff]
        %v385 = vld [vmem:[%s376 + $0x8] sm:$0xff]
        %v386 = vld [vmem:[%s2] sm:$0xff]
        %v387 = vld [vmem:[%s2 + $0x8] sm:$0xff]
        %v388 = vld [vmem:[%s2 + $0x10] sm:$0xff]
        %v389 = vld [vmem:[%s2 + $0x18] sm:$0xff]
        %v390 = vld [vmem:[%s2 + $0x20] sm:$0xff]
        %v391 = vld [vmem:[%s2 + $0x28] sm:$0xff]
        %v392 = vld [vmem:[%s2 + $0x30] sm:$0xff]
        %v393 = vld [vmem:[%s2 + $0x38] sm:$0xff]
        %v394 = vld [vmem:[%s2 + $0x40] sm:$0xff]
        %v395 = vld [vmem:[%s2 + $0x48] sm:$0xff]
        %v396 = vld [vmem:[%s2 + $0x50] sm:$0xff]
        %v397 = vld [vmem:[%s2 + $0x58] sm:$0xff]
        %v398 = vld [vmem:[%s2 + $0x60] sm:$0xff]
        %v399 = vld [vmem:[%s2 + $0x68] sm:$0xff]
        %v400 = vld [vmem:[%s2 + $0x70] sm:$0xff]
        %v401 = vld [vmem:[%s2 + $0x78] sm:$0xff]
        %403 = vset.pattern.permute.xlu0 0
        %404 = vperm.xlu0 %403, %v386
        %v405 = vpop.permute.xlu0 %404
        %408 = vset.pattern.permute.xlu0 0
        %409 = vperm.xlu0 %408, %v387
        %v410 = vpop.permute.xlu0 %409
        %413 = vset.pattern.permute.xlu0 0
        %414 = vperm.xlu0 %413, %v388
        %v415 = vpop.permute.xlu0 %414
        %418 = vset.pattern.permute.xlu0 0
        %419 = vperm.xlu0 %418, %v389
        %v420 = vpop.permute.xlu0 %419
        %423 = vset.pattern.permute.xlu0 0
        %424 = vperm.xlu0 %423, %v390
        %v425 = vpop.permute.xlu0 %424
        %428 = vset.pattern.permute.xlu0 0
        %429 = vperm.xlu0 %428, %v391
        %v430 = vpop.permute.xlu0 %429
        %433 = vset.pattern.permute.xlu0 0
        %434 = vperm.xlu0 %433, %v392
        %v435 = vpop.permute.xlu0 %434
        %438 = vset.pattern.permute.xlu0 0
        %439 = vperm.xlu0 %438, %v393
        %v440 = vpop.permute.xlu0 %439
        %443 = vset.pattern.permute.xlu0 0
        %444 = vperm.xlu0 %443, %v394
        %v445 = vpop.permute.xlu0 %444
        %448 = vset.pattern.permute.xlu0 0
        %449 = vperm.xlu0 %448, %v395
        %v450 = vpop.permute.xlu0 %449
        %453 = vset.pattern.permute.xlu0 0
        %454 = vperm.xlu0 %453, %v396
        %v455 = vpop.permute.xlu0 %454
        %458 = vset.pattern.permute.xlu0 0
        %459 = vperm.xlu0 %458, %v397
        %v460 = vpop.permute.xlu0 %459
        %463 = vset.pattern.permute.xlu0 0
        %464 = vperm.xlu0 %463, %v398
        %v465 = vpop.permute.xlu0 %464
        %468 = vset.pattern.permute.xlu0 0
        %469 = vperm.xlu0 %468, %v399
        %v470 = vpop.permute.xlu0 %469
        %473 = vset.pattern.permute.xlu0 0
        %474 = vperm.xlu0 %473, %v400
        %v475 = vpop.permute.xlu0 %474
        %478 = vset.pattern.permute.xlu0 0
        %479 = vperm.xlu0 %478, %v401
        %v480 = vpop.permute.xlu0 %479
        %v484 = vperm.slane %v384, 0
        %v485 = vperm.slane %v384, 2
        %v486 = vperm.slane %v384, 4
        %v487 = vperm.slane %v384, 6
        %v488 = vperm.slane %v385, 0
        %v489 = vperm.slane %v385, 2
        %v490 = vperm.slane %v385, 4
        %v491 = vperm.slane %v385, 6
        %v500 = vperm.slane %v484, 0
        %v501 = vperm.slane %v485, 0
        %v502 = vperm.slane %v486, 0
        %v503 = vperm.slane %v487, 0
        %v504 = vperm.slane %v488, 0
        %v505 = vperm.slane %v489, 0
        %v506 = vperm.slane %v490, 0
        %v507 = vperm.slane %v491, 0
        %v508 = vmul.f32 %v405, %v500
        %v509 = vmul.f32 %v405, %v501
        %v510 = vmul.f32 %v405, %v502
        %v511 = vmul.f32 %v405, %v503
        %v512 = vmul.f32 %v405, %v504
        %v513 = vmul.f32 %v405, %v505
        %v514 = vmul.f32 %v405, %v506
        %v515 = vmul.f32 %v405, %v507
        %v516 = vmul.f32 %v410, %v500
        %v517 = vmul.f32 %v410, %v501
        %v518 = vmul.f32 %v410, %v502
        %v519 = vmul.f32 %v410, %v503
        %v520 = vmul.f32 %v410, %v504
        %v521 = vmul.f32 %v410, %v505
        %v522 = vmul.f32 %v410, %v506
        %v523 = vmul.f32 %v410, %v507
        %v524 = vmul.f32 %v415, %v500
        %v525 = vmul.f32 %v415, %v501
        %v526 = vmul.f32 %v415, %v502
        %v527 = vmul.f32 %v415, %v503
        %v528 = vmul.f32 %v415, %v504
        %v529 = vmul.f32 %v415, %v505
        %v530 = vmul.f32 %v415, %v506
        %v531 = vmul.f32 %v415, %v507
        %v532 = vmul.f32 %v420, %v500
        %v533 = vmul.f32 %v420, %v501
        %v534 = vmul.f32 %v420, %v502
        %v535 = vmul.f32 %v420, %v503
        %v536 = vmul.f32 %v420, %v504
        %v537 = vmul.f32 %v420, %v505
        %v538 = vmul.f32 %v420, %v506
        %v539 = vmul.f32 %v420, %v507
        %v540 = vmul.f32 %v425, %v500
        %v541 = vmul.f32 %v425, %v501
        %v542 = vmul.f32 %v425, %v502
        %v543 = vmul.f32 %v425, %v503
        %v544 = vmul.f32 %v425, %v504
        %v545 = vmul.f32 %v425, %v505
        %v546 = vmul.f32 %v425, %v506
        %v547 = vmul.f32 %v425, %v507
        %v548 = vmul.f32 %v430, %v500
        %v549 = vmul.f32 %v430, %v501
        %v550 = vmul.f32 %v430, %v502
        %v551 = vmul.f32 %v430, %v503
        %v552 = vmul.f32 %v430, %v504
        %v553 = vmul.f32 %v430, %v505
        %v554 = vmul.f32 %v430, %v506
        %v555 = vmul.f32 %v430, %v507
        %v556 = vmul.f32 %v435, %v500
        %v557 = vmul.f32 %v435, %v501
        %v558 = vmul.f32 %v435, %v502
        %v559 = vmul.f32 %v435, %v503
        %v560 = vmul.f32 %v435, %v504
        %v561 = vmul.f32 %v435, %v505
        %v562 = vmul.f32 %v435, %v506
        %v563 = vmul.f32 %v435, %v507
        %v564 = vmul.f32 %v440, %v500
        %v565 = vmul.f32 %v440, %v501
        %v566 = vmul.f32 %v440, %v502
        %v567 = vmul.f32 %v440, %v503
        %v568 = vmul.f32 %v440, %v504
        %v569 = vmul.f32 %v440, %v505
        %v570 = vmul.f32 %v440, %v506
        %v571 = vmul.f32 %v440, %v507
        %v572 = vmul.f32 %v445, %v500
        %v573 = vmul.f32 %v445, %v501
        %v574 = vmul.f32 %v445, %v502
        %v575 = vmul.f32 %v445, %v503
        %v576 = vmul.f32 %v445, %v504
        %v577 = vmul.f32 %v445, %v505
        %v578 = vmul.f32 %v445, %v506
        %v579 = vmul.f32 %v445, %v507
        %v580 = vmul.f32 %v450, %v500
        %v581 = vmul.f32 %v450, %v501
        %v582 = vmul.f32 %v450, %v502
        %v583 = vmul.f32 %v450, %v503
        %v584 = vmul.f32 %v450, %v504
        %v585 = vmul.f32 %v450, %v505
        %v586 = vmul.f32 %v450, %v506
        %v587 = vmul.f32 %v450, %v507
        %v588 = vmul.f32 %v455, %v500
        %v589 = vmul.f32 %v455, %v501
        %v590 = vmul.f32 %v455, %v502
        %v591 = vmul.f32 %v455, %v503
        %v592 = vmul.f32 %v455, %v504
        %v593 = vmul.f32 %v455, %v505
        %v594 = vmul.f32 %v455, %v506
        %v595 = vmul.f32 %v455, %v507
        %v596 = vmul.f32 %v460, %v500
        %v597 = vmul.f32 %v460, %v501
        %v598 = vmul.f32 %v460, %v502
        %v599 = vmul.f32 %v460, %v503
        %v600 = vmul.f32 %v460, %v504
        %v601 = vmul.f32 %v460, %v505
        %v602 = vmul.f32 %v460, %v506
        %v603 = vmul.f32 %v460, %v507
        %v604 = vmul.f32 %v465, %v500
        %v605 = vmul.f32 %v465, %v501
        %v606 = vmul.f32 %v465, %v502
        %v607 = vmul.f32 %v465, %v503
        %v608 = vmul.f32 %v465, %v504
        %v609 = vmul.f32 %v465, %v505
        %v610 = vmul.f32 %v465, %v506
        %v611 = vmul.f32 %v465, %v507
        %v612 = vmul.f32 %v470, %v500
        %v613 = vmul.f32 %v470, %v501
        %v614 = vmul.f32 %v470, %v502
        %v615 = vmul.f32 %v470, %v503
        %v616 = vmul.f32 %v470, %v504
        %v617 = vmul.f32 %v470, %v505
        %v618 = vmul.f32 %v470, %v506
        %v619 = vmul.f32 %v470, %v507
        %v620 = vmul.f32 %v475, %v500
        %v621 = vmul.f32 %v475, %v501
        %v622 = vmul.f32 %v475, %v502
        %v623 = vmul.f32 %v475, %v503
        %v624 = vmul.f32 %v475, %v504
        %v625 = vmul.f32 %v475, %v505
        %v626 = vmul.f32 %v475, %v506
        %v627 = vmul.f32 %v475, %v507
        %v628 = vmul.f32 %v480, %v500
        %v629 = vmul.f32 %v480, %v501
        %v630 = vmul.f32 %v480, %v502
        %v631 = vmul.f32 %v480, %v503
        %v632 = vmul.f32 %v480, %v504
        %v633 = vmul.f32 %v480, %v505
        %v634 = vmul.f32 %v480, %v506
        %v635 = vmul.f32 %v480, %v507
        %636 = vset.pattern.permute.xlu0 1
        %637 = vperm.xlu0 %636, %v386
        %v638 = vpop.permute.xlu0 %637
        %640 = vset.pattern.permute.xlu0 1
        %641 = vperm.xlu0 %640, %v387
        %v642 = vpop.permute.xlu0 %641
        %644 = vset.pattern.permute.xlu0 1
        %645 = vperm.xlu0 %644, %v388
        %v646 = vpop.permute.xlu0 %645
        %648 = vset.pattern.permute.xlu0 1
        %649 = vperm.xlu0 %648, %v389
        %v650 = vpop.permute.xlu0 %649
        %652 = vset.pattern.permute.xlu0 1
        %653 = vperm.xlu0 %652, %v390
        %v654 = vpop.permute.xlu0 %653
        %656 = vset.pattern.permute.xlu0 1
        %657 = vperm.xlu0 %656, %v391
        %v658 = vpop.permute.xlu0 %657
        %660 = vset.pattern.permute.xlu0 1
        %661 = vperm.xlu0 %660, %v392
        %v662 = vpop.permute.xlu0 %661
        %664 = vset.pattern.permute.xlu0 1
        %665 = vperm.xlu0 %664, %v393
        %v666 = vpop.permute.xlu0 %665
        %668 = vset.pattern.permute.xlu0 1
        %669 = vperm.xlu0 %668, %v394
        %v670 = vpop.permute.xlu0 %669
        %672 = vset.pattern.permute.xlu0 1
        %673 = vperm.xlu0 %672, %v395
        %v674 = vpop.permute.xlu0 %673
        %676 = vset.pattern.permute.xlu0 1
        %677 = vperm.xlu0 %676, %v396
        %v678 = vpop.permute.xlu0 %677
        %680 = vset.pattern.permute.xlu0 1
        %681 = vperm.xlu0 %680, %v397
        %v682 = vpop.permute.xlu0 %681
        %684 = vset.pattern.permute.xlu0 1
        %685 = vperm.xlu0 %684, %v398
        %v686 = vpop.permute.xlu0 %685
        %688 = vset.pattern.permute.xlu0 1
        %689 = vperm.xlu0 %688, %v399
        %v690 = vpop.permute.xlu0 %689
        %692 = vset.pattern.permute.xlu0 1
        %693 = vperm.xlu0 %692, %v400
        %v694 = vpop.permute.xlu0 %693
        %696 = vset.pattern.permute.xlu0 1
        %697 = vperm.xlu0 %696, %v401
        %v698 = vpop.permute.xlu0 %697
        %v700 = vperm.slane %v384, 1
        %v701 = vperm.slane %v384, 3
        %v702 = vperm.slane %v384, 5
        %v703 = vperm.slane %v384, 7
        %v704 = vperm.slane %v385, 1
        %v705 = vperm.slane %v385, 3
        %v706 = vperm.slane %v385, 5
        %v707 = vperm.slane %v385, 7
        %v716 = vperm.slane %v700, 1
        %v717 = vperm.slane %v701, 1
        %v718 = vperm.slane %v702, 1
        %v719 = vperm.slane %v703, 1
        %v720 = vperm.slane %v704, 1
        %v721 = vperm.slane %v705, 1
        %v722 = vperm.slane %v706, 1
        %v723 = vperm.slane %v707, 1
        %v724 = vmul.f32 %v638, %v716
        %v725 = vmul.f32 %v638, %v717
        %v726 = vmul.f32 %v638, %v718
        %v727 = vmul.f32 %v638, %v719
        %v728 = vmul.f32 %v638, %v720
        %v729 = vmul.f32 %v638, %v721
        %v730 = vmul.f32 %v638, %v722
        %v731 = vmul.f32 %v638, %v723
        %v732 = vmul.f32 %v642, %v716
        %v733 = vmul.f32 %v642, %v717
        %v734 = vmul.f32 %v642, %v718
        %v735 = vmul.f32 %v642, %v719
        %v736 = vmul.f32 %v642, %v720
        %v737 = vmul.f32 %v642, %v721
        %v738 = vmul.f32 %v642, %v722
        %v739 = vmul.f32 %v642, %v723
        %v740 = vmul.f32 %v646, %v716
        %v741 = vmul.f32 %v646, %v717
        %v742 = vmul.f32 %v646, %v718
        %v743 = vmul.f32 %v646, %v719
        %v744 = vmul.f32 %v646, %v720
        %v745 = vmul.f32 %v646, %v721
        %v746 = vmul.f32 %v646, %v722
        %v747 = vmul.f32 %v646, %v723
        %v748 = vmul.f32 %v650, %v716
        %v749 = vmul.f32 %v650, %v717
        %v750 = vmul.f32 %v650, %v718
        %v751 = vmul.f32 %v650, %v719
        %v752 = vmul.f32 %v650, %v720
        %v753 = vmul.f32 %v650, %v721
        %v754 = vmul.f32 %v650, %v722
        %v755 = vmul.f32 %v650, %v723
        %v756 = vmul.f32 %v654, %v716
        %v757 = vmul.f32 %v654, %v717
        %v758 = vmul.f32 %v654, %v718
        %v759 = vmul.f32 %v654, %v719
        %v760 = vmul.f32 %v654, %v720
        %v761 = vmul.f32 %v654, %v721
        %v762 = vmul.f32 %v654, %v722
        %v763 = vmul.f32 %v654, %v723
        %v764 = vmul.f32 %v658, %v716
        %v765 = vmul.f32 %v658, %v717
        %v766 = vmul.f32 %v658, %v718
        %v767 = vmul.f32 %v658, %v719
        %v768 = vmul.f32 %v658, %v720
        %v769 = vmul.f32 %v658, %v721
        %v770 = vmul.f32 %v658, %v722
        %v771 = vmul.f32 %v658, %v723
        %v772 = vmul.f32 %v662, %v716
        %v773 = vmul.f32 %v662, %v717
        %v774 = vmul.f32 %v662, %v718
        %v775 = vmul.f32 %v662, %v719
        %v776 = vmul.f32 %v662, %v720
        %v777 = vmul.f32 %v662, %v721
        %v778 = vmul.f32 %v662, %v722
        %v779 = vmul.f32 %v662, %v723
        %v780 = vmul.f32 %v666, %v716
        %v781 = vmul.f32 %v666, %v717
        %v782 = vmul.f32 %v666, %v718
        %v783 = vmul.f32 %v666, %v719
        %v784 = vmul.f32 %v666, %v720
        %v785 = vmul.f32 %v666, %v721
        %v786 = vmul.f32 %v666, %v722
        %v787 = vmul.f32 %v666, %v723
        %v788 = vmul.f32 %v670, %v716
        %v789 = vmul.f32 %v670, %v717
        %v790 = vmul.f32 %v670, %v718
        %v791 = vmul.f32 %v670, %v719
        %v792 = vmul.f32 %v670, %v720
        %v793 = vmul.f32 %v670, %v721
        %v794 = vmul.f32 %v670, %v722
        %v795 = vmul.f32 %v670, %v723
        %v796 = vmul.f32 %v674, %v716
        %v797 = vmul.f32 %v674, %v717
        %v798 = vmul.f32 %v674, %v718
        %v799 = vmul.f32 %v674, %v719
        %v800 = vmul.f32 %v674, %v720
        %v801 = vmul.f32 %v674, %v721
        %v802 = vmul.f32 %v674, %v722
        %v803 = vmul.f32 %v674, %v723
        %v804 = vmul.f32 %v678, %v716
        %v805 = vmul.f32 %v678, %v717
        %v806 = vmul.f32 %v678, %v718
        %v807 = vmul.f32 %v678, %v719
        %v808 = vmul.f32 %v678, %v720
        %v809 = vmul.f32 %v678, %v721
        %v810 = vmul.f32 %v678, %v722
        %v811 = vmul.f32 %v678, %v723
        %v812 = vmul.f32 %v682, %v716
        %v813 = vmul.f32 %v682, %v717
        %v814 = vmul.f32 %v682, %v718
        %v815 = vmul.f32 %v682, %v719
        %v816 = vmul.f32 %v682, %v720
        %v817 = vmul.f32 %v682, %v721
        %v818 = vmul.f32 %v682, %v722
        %v819 = vmul.f32 %v682, %v723
        %v820 = vmul.f32 %v686, %v716
        %v821 = vmul.f32 %v686, %v717
        %v822 = vmul.f32 %v686, %v718
        %v823 = vmul.f32 %v686, %v719
        %v824 = vmul.f32 %v686, %v720
        %v825 = vmul.f32 %v686, %v721
        %v826 = vmul.f32 %v686, %v722
        %v827 = vmul.f32 %v686, %v723
        %v828 = vmul.f32 %v690, %v716
        %v829 = vmul.f32 %v690, %v717
        %v830 = vmul.f32 %v690, %v718
        %v831 = vmul.f32 %v690, %v719
        %v832 = vmul.f32 %v690, %v720
        %v833 = vmul.f32 %v690, %v721
        %v834 = vmul.f32 %v690, %v722
        %v835 = vmul.f32 %v690, %v723
        %v836 = vmul.f32 %v694, %v716
        %v837 = vmul.f32 %v694, %v717
        %v838 = vmul.f32 %v694, %v718
        %v839 = vmul.f32 %v694, %v719
        %v840 = vmul.f32 %v694, %v720
        %v841 = vmul.f32 %v694, %v721
        %v842 = vmul.f32 %v694, %v722
        %v843 = vmul.f32 %v694, %v723
        %v844 = vmul.f32 %v698, %v716
        %v845 = vmul.f32 %v698, %v717
        %v846 = vmul.f32 %v698, %v718
        %v847 = vmul.f32 %v698, %v719
        %v848 = vmul.f32 %v698, %v720
        %v849 = vmul.f32 %v698, %v721
        %v850 = vmul.f32 %v698, %v722
        %v851 = vmul.f32 %v698, %v723
        %v852 = vadd.f32 %v508, %v724
        %v853 = vadd.f32 %v509, %v725
        %v854 = vadd.f32 %v510, %v726
        %v855 = vadd.f32 %v511, %v727
        %v856 = vadd.f32 %v512, %v728
        %v857 = vadd.f32 %v513, %v729
        %v858 = vadd.f32 %v514, %v730
        %v859 = vadd.f32 %v515, %v731
        %v860 = vadd.f32 %v516, %v732
        %v861 = vadd.f32 %v517, %v733
        %v862 = vadd.f32 %v518, %v734
        %v863 = vadd.f32 %v519, %v735
        %v864 = vadd.f32 %v520, %v736
        %v865 = vadd.f32 %v521, %v737
        %v866 = vadd.f32 %v522, %v738
        %v867 = vadd.f32 %v523, %v739
        %v868 = vadd.f32 %v524, %v740
        %v869 = vadd.f32 %v525, %v741
        %v870 = vadd.f32 %v526, %v742
        %v871 = vadd.f32 %v527, %v743
        %v872 = vadd.f32 %v528, %v744
        %v873 = vadd.f32 %v529, %v745
        %v874 = vadd.f32 %v530, %v746
        %v875 = vadd.f32 %v531, %v747
        %v876 = vadd.f32 %v532, %v748
        %v877 = vadd.f32 %v533, %v749
        %v878 = vadd.f32 %v534, %v750
        %v879 = vadd.f32 %v535, %v751
        %v880 = vadd.f32 %v536, %v752
        %v881 = vadd.f32 %v537, %v753
        %v882 = vadd.f32 %v538, %v754
        %v883 = vadd.f32 %v539, %v755
        %v884 = vadd.f32 %v540, %v756
        %v885 = vadd.f32 %v541, %v757
        %v886 = vadd.f32 %v542, %v758
        %v887 = vadd.f32 %v543, %v759
        %v888 = vadd.f32 %v544, %v760
        %v889 = vadd.f32 %v545, %v761
        %v890 = vadd.f32 %v546, %v762
        %v891 = vadd.f32 %v547, %v763
        %v892 = vadd.f32 %v548, %v764
        %v893 = vadd.f32 %v549, %v765
        %v894 = vadd.f32 %v550, %v766
        %v895 = vadd.f32 %v551, %v767
        %v896 = vadd.f32 %v552, %v768
        %v897 = vadd.f32 %v553, %v769
        %v898 = vadd.f32 %v554, %v770
        %v899 = vadd.f32 %v555, %v771
        %v900 = vadd.f32 %v556, %v772
        %v901 = vadd.f32 %v557, %v773
        %v902 = vadd.f32 %v558, %v774
        %v903 = vadd.f32 %v559, %v775
        %v904 = vadd.f32 %v560, %v776
        %v905 = vadd.f32 %v561, %v777
        %v906 = vadd.f32 %v562, %v778
        %v907 = vadd.f32 %v563, %v779
        %v908 = vadd.f32 %v564, %v780
        %v909 = vadd.f32 %v565, %v781
        %v910 = vadd.f32 %v566, %v782
        %v911 = vadd.f32 %v567, %v783
        %v912 = vadd.f32 %v568, %v784
        %v913 = vadd.f32 %v569, %v785
        %v914 = vadd.f32 %v570, %v786
        %v915 = vadd.f32 %v571, %v787
        %v916 = vadd.f32 %v572, %v788
        %v917 = vadd.f32 %v573, %v789
        %v918 = vadd.f32 %v574, %v790
        %v919 = vadd.f32 %v575, %v791
        %v920 = vadd.f32 %v576, %v792
        %v921 = vadd.f32 %v577, %v793
        %v922 = vadd.f32 %v578, %v794
        %v923 = vadd.f32 %v579, %v795
        %v924 = vadd.f32 %v580, %v796
        %v925 = vadd.f32 %v581, %v797
        %v926 = vadd.f32 %v582, %v798
        %v927 = vadd.f32 %v583, %v799
        %v928 = vadd.f32 %v584, %v800
        %v929 = vadd.f32 %v585, %v801
        %v930 = vadd.f32 %v586, %v802
        %v931 = vadd.f32 %v587, %v803
        %v932 = vadd.f32 %v588, %v804
        %v933 = vadd.f32 %v589, %v805
        %v934 = vadd.f32 %v590, %v806
        %v935 = vadd.f32 %v591, %v807
        %v936 = vadd.f32 %v592, %v808
        %v937 = vadd.f32 %v593, %v809
        %v938 = vadd.f32 %v594, %v810
        %v939 = vadd.f32 %v595, %v811
        %v940 = vadd.f32 %v596, %v812
        %v941 = vadd.f32 %v597, %v813
        %v942 = vadd.f32 %v598, %v814
        %v943 = vadd.f32 %v599, %v815
        %v944 = vadd.f32 %v600, %v816
        %v945 = vadd.f32 %v601, %v817
        %v946 = vadd.f32 %v602, %v818
        %v947 = vadd.f32 %v603, %v819
        %v948 = vadd.f32 %v604, %v820
        %v949 = vadd.f32 %v605, %v821
        %v950 = vadd.f32 %v606, %v822
        %v951 = vadd.f32 %v607, %v823
        %v952 = vadd.f32 %v608, %v824
        %v953 = vadd.f32 %v609, %v825
        %v954 = vadd.f32 %v610, %v826
        %v955 = vadd.f32 %v611, %v827
        %v956 = vadd.f32 %v612, %v828
        %v957 = vadd.f32 %v613, %v829
        %v958 = vadd.f32 %v614, %v830
        %v959 = vadd.f32 %v615, %v831
        %v960 = vadd.f32 %v616, %v832
        %v961 = vadd.f32 %v617, %v833
        %v962 = vadd.f32 %v618, %v834
        %v963 = vadd.f32 %v619, %v835
        %v964 = vadd.f32 %v620, %v836
        %v965 = vadd.f32 %v621, %v837
        %v966 = vadd.f32 %v622, %v838
        %v967 = vadd.f32 %v623, %v839
        %v968 = vadd.f32 %v624, %v840
        %v969 = vadd.f32 %v625, %v841
        %v970 = vadd.f32 %v626, %v842
        %v971 = vadd.f32 %v627, %v843
        %v972 = vadd.f32 %v628, %v844
        %v973 = vadd.f32 %v629, %v845
        %v974 = vadd.f32 %v630, %v846
        %v975 = vadd.f32 %v631, %v847
        %v976 = vadd.f32 %v632, %v848
        %v977 = vadd.f32 %v633, %v849
        %v978 = vadd.f32 %v634, %v850
        %v979 = vadd.f32 %v635, %v851
        %v980 = vld [vmem:[%s382] sm:$0xff]
        %v981 = vld [vmem:[%s382 + $0x8] sm:$0xff]
        %v982 = vld [vmem:[%s382 + $0x10] sm:$0xff]
        %v983 = vld [vmem:[%s382 + $0x18] sm:$0xff]
        %v984 = vld [vmem:[%s382 + $0x20] sm:$0xff]
        %v985 = vld [vmem:[%s382 + $0x28] sm:$0xff]
        %v986 = vld [vmem:[%s382 + $0x30] sm:$0xff]
        %v987 = vld [vmem:[%s382 + $0x38] sm:$0xff]
        %v988 = vld [vmem:[%s382 + $0x40] sm:$0xff]
        %v989 = vld [vmem:[%s382 + $0x48] sm:$0xff]
        %v990 = vld [vmem:[%s382 + $0x50] sm:$0xff]
        %v991 = vld [vmem:[%s382 + $0x58] sm:$0xff]
        %v992 = vld [vmem:[%s382 + $0x60] sm:$0xff]
        %v993 = vld [vmem:[%s382 + $0x68] sm:$0xff]
        %v994 = vld [vmem:[%s382 + $0x70] sm:$0xff]
        %v995 = vld [vmem:[%s382 + $0x78] sm:$0xff]
        %997 = vset.pattern.permute.xlu0 0
        %998 = vperm.xlu0 %997, %v980
        %v999 = vpop.permute.xlu0 %998
        %1002 = vset.pattern.permute.xlu0 0
        %1003 = vperm.xlu0 %1002, %v981
        %v1004 = vpop.permute.xlu0 %1003
        %1007 = vset.pattern.permute.xlu0 0
        %1008 = vperm.xlu0 %1007, %v982
        %v1009 = vpop.permute.xlu0 %1008
        %1012 = vset.pattern.permute.xlu0 0
        %1013 = vperm.xlu0 %1012, %v983
        %v1014 = vpop.permute.xlu0 %1013
        %1017 = vset.pattern.permute.xlu0 0
        %1018 = vperm.xlu0 %1017, %v984
        %v1019 = vpop.permute.xlu0 %1018
        %1022 = vset.pattern.permute.xlu0 0
        %1023 = vperm.xlu0 %1022, %v985
        %v1024 = vpop.permute.xlu0 %1023
        %1027 = vset.pattern.permute.xlu0 0
        %1028 = vperm.xlu0 %1027, %v986
        %v1029 = vpop.permute.xlu0 %1028
        %1032 = vset.pattern.permute.xlu0 0
        %1033 = vperm.xlu0 %1032, %v987
        %v1034 = vpop.permute.xlu0 %1033
        %1037 = vset.pattern.permute.xlu0 0
        %1038 = vperm.xlu0 %1037, %v988
        %v1039 = vpop.permute.xlu0 %1038
        %1042 = vset.pattern.permute.xlu0 0
        %1043 = vperm.xlu0 %1042, %v989
        %v1044 = vpop.permute.xlu0 %1043
        %1047 = vset.pattern.permute.xlu0 0
        %1048 = vperm.xlu0 %1047, %v990
        %v1049 = vpop.permute.xlu0 %1048
        %1052 = vset.pattern.permute.xlu0 0
        %1053 = vperm.xlu0 %1052, %v991
        %v1054 = vpop.permute.xlu0 %1053
        %1057 = vset.pattern.permute.xlu0 0
        %1058 = vperm.xlu0 %1057, %v992
        %v1059 = vpop.permute.xlu0 %1058
        %1062 = vset.pattern.permute.xlu0 0
        %1063 = vperm.xlu0 %1062, %v993
        %v1064 = vpop.permute.xlu0 %1063
        %1067 = vset.pattern.permute.xlu0 0
        %1068 = vperm.xlu0 %1067, %v994
        %v1069 = vpop.permute.xlu0 %1068
        %1072 = vset.pattern.permute.xlu0 0
        %1073 = vperm.xlu0 %1072, %v995
        %v1074 = vpop.permute.xlu0 %1073
        %v1076 = vadd.f32 %v852, %v999
        %v1077 = vadd.f32 %v853, %v999
        %v1078 = vadd.f32 %v854, %v999
        %v1079 = vadd.f32 %v855, %v999
        %v1080 = vadd.f32 %v856, %v999
        %v1081 = vadd.f32 %v857, %v999
        %v1082 = vadd.f32 %v858, %v999
        %v1083 = vadd.f32 %v859, %v999
        %v1084 = vadd.f32 %v860, %v1004
        %v1085 = vadd.f32 %v861, %v1004
        %v1086 = vadd.f32 %v862, %v1004
        %v1087 = vadd.f32 %v863, %v1004
        %v1088 = vadd.f32 %v864, %v1004
        %v1089 = vadd.f32 %v865, %v1004
        %v1090 = vadd.f32 %v866, %v1004
        %v1091 = vadd.f32 %v867, %v1004
        %v1092 = vadd.f32 %v868, %v1009
        %v1093 = vadd.f32 %v869, %v1009
        %v1094 = vadd.f32 %v870, %v1009
        %v1095 = vadd.f32 %v871, %v1009
        %v1096 = vadd.f32 %v872, %v1009
        %v1097 = vadd.f32 %v873, %v1009
        %v1098 = vadd.f32 %v874, %v1009
        %v1099 = vadd.f32 %v875, %v1009
        %v1100 = vadd.f32 %v876, %v1014
        %v1101 = vadd.f32 %v877, %v1014
        %v1102 = vadd.f32 %v878, %v1014
        %v1103 = vadd.f32 %v879, %v1014
        %v1104 = vadd.f32 %v880, %v1014
        %v1105 = vadd.f32 %v881, %v1014
        %v1106 = vadd.f32 %v882, %v1014
        %v1107 = vadd.f32 %v883, %v1014
        %v1108 = vadd.f32 %v884, %v1019
        %v1109 = vadd.f32 %v885, %v1019
        %v1110 = vadd.f32 %v886, %v1019
        %v1111 = vadd.f32 %v887, %v1019
        %v1112 = vadd.f32 %v888, %v1019
        %v1113 = vadd.f32 %v889, %v1019
        %v1114 = vadd.f32 %v890, %v1019
        %v1115 = vadd.f32 %v891, %v1019
        %v1116 = vadd.f32 %v892, %v1024
        %v1117 = vadd.f32 %v893, %v1024
        %v1118 = vadd.f32 %v894, %v1024
        %v1119 = vadd.f32 %v895, %v1024
        %v1120 = vadd.f32 %v896, %v1024
        %v1121 = vadd.f32 %v897, %v1024
        %v1122 = vadd.f32 %v898, %v1024
        %v1123 = vadd.f32 %v899, %v1024
        %v1124 = vadd.f32 %v900, %v1029
        %v1125 = vadd.f32 %v901, %v1029
        %v1126 = vadd.f32 %v902, %v1029
        %v1127 = vadd.f32 %v903, %v1029
        %v1128 = vadd.f32 %v904, %v1029
        %v1129 = vadd.f32 %v905, %v1029
        %v1130 = vadd.f32 %v906, %v1029
        %v1131 = vadd.f32 %v907, %v1029
        %v1132 = vadd.f32 %v908, %v1034
        %v1133 = vadd.f32 %v909, %v1034
        %v1134 = vadd.f32 %v910, %v1034
        %v1135 = vadd.f32 %v911, %v1034
        %v1136 = vadd.f32 %v912, %v1034
        %v1137 = vadd.f32 %v913, %v1034
        %v1138 = vadd.f32 %v914, %v1034
        %v1139 = vadd.f32 %v915, %v1034
        %v1140 = vadd.f32 %v916, %v1039
        %v1141 = vadd.f32 %v917, %v1039
        %v1142 = vadd.f32 %v918, %v1039
        %v1143 = vadd.f32 %v919, %v1039
        %v1144 = vadd.f32 %v920, %v1039
        %v1145 = vadd.f32 %v921, %v1039
        %v1146 = vadd.f32 %v922, %v1039
        %v1147 = vadd.f32 %v923, %v1039
        %v1148 = vadd.f32 %v924, %v1044
        %v1149 = vadd.f32 %v925, %v1044
        %v1150 = vadd.f32 %v926, %v1044
        %v1151 = vadd.f32 %v927, %v1044
        %v1152 = vadd.f32 %v928, %v1044
        %v1153 = vadd.f32 %v929, %v1044
        %v1154 = vadd.f32 %v930, %v1044
        %v1155 = vadd.f32 %v931, %v1044
        %v1156 = vadd.f32 %v932, %v1049
        %v1157 = vadd.f32 %v933, %v1049
        %v1158 = vadd.f32 %v934, %v1049
        %v1159 = vadd.f32 %v935, %v1049
        %v1160 = vadd.f32 %v936, %v1049
        %v1161 = vadd.f32 %v937, %v1049
        %v1162 = vadd.f32 %v938, %v1049
        %v1163 = vadd.f32 %v939, %v1049
        %v1164 = vadd.f32 %v940, %v1054
        %v1165 = vadd.f32 %v941, %v1054
        %v1166 = vadd.f32 %v942, %v1054
        %v1167 = vadd.f32 %v943, %v1054
        %v1168 = vadd.f32 %v944, %v1054
        %v1169 = vadd.f32 %v945, %v1054
        %v1170 = vadd.f32 %v946, %v1054
        %v1171 = vadd.f32 %v947, %v1054
        %v1172 = vadd.f32 %v948, %v1059
        %v1173 = vadd.f32 %v949, %v1059
        %v1174 = vadd.f32 %v950, %v1059
        %v1175 = vadd.f32 %v951, %v1059
        %v1176 = vadd.f32 %v952, %v1059
        %v1177 = vadd.f32 %v953, %v1059
        %v1178 = vadd.f32 %v954, %v1059
        %v1179 = vadd.f32 %v955, %v1059
        %v1180 = vadd.f32 %v956, %v1064
        %v1181 = vadd.f32 %v957, %v1064
        %v1182 = vadd.f32 %v958, %v1064
        %v1183 = vadd.f32 %v959, %v1064
        %v1184 = vadd.f32 %v960, %v1064
        %v1185 = vadd.f32 %v961, %v1064
        %v1186 = vadd.f32 %v962, %v1064
        %v1187 = vadd.f32 %v963, %v1064
        %v1188 = vadd.f32 %v964, %v1069
        %v1189 = vadd.f32 %v965, %v1069
        %v1190 = vadd.f32 %v966, %v1069
        %v1191 = vadd.f32 %v967, %v1069
        %v1192 = vadd.f32 %v968, %v1069
        %v1193 = vadd.f32 %v969, %v1069
        %v1194 = vadd.f32 %v970, %v1069
        %v1195 = vadd.f32 %v971, %v1069
        %v1196 = vadd.f32 %v972, %v1074
        %v1197 = vadd.f32 %v973, %v1074
        %v1198 = vadd.f32 %v974, %v1074
        %v1199 = vadd.f32 %v975, %v1074
        %v1200 = vadd.f32 %v976, %v1074
        %v1201 = vadd.f32 %v977, %v1074
        %v1202 = vadd.f32 %v978, %v1074
        %v1203 = vadd.f32 %v979, %v1074
        %v1204 = vpack.c.bf16 %v1084, %v1076
        %v1205 = vpack.c.bf16 %v1085, %v1077
        %v1206 = vpack.c.bf16 %v1086, %v1078
        %v1207 = vpack.c.bf16 %v1087, %v1079
        %v1208 = vpack.c.bf16 %v1088, %v1080
        %v1209 = vpack.c.bf16 %v1089, %v1081
        %v1210 = vpack.c.bf16 %v1090, %v1082
        %v1211 = vpack.c.bf16 %v1091, %v1083
        %v1212 = vpack.c.bf16 %v1100, %v1092
        %v1213 = vpack.c.bf16 %v1101, %v1093
        %v1214 = vpack.c.bf16 %v1102, %v1094
        %v1215 = vpack.c.bf16 %v1103, %v1095
        %v1216 = vpack.c.bf16 %v1104, %v1096
        %v1217 = vpack.c.bf16 %v1105, %v1097
        %v1218 = vpack.c.bf16 %v1106, %v1098
        %v1219 = vpack.c.bf16 %v1107, %v1099
        %v1220 = vpack.c.bf16 %v1116, %v1108
        %v1221 = vpack.c.bf16 %v1117, %v1109
        %v1222 = vpack.c.bf16 %v1118, %v1110
        %v1223 = vpack.c.bf16 %v1119, %v1111
        %v1224 = vpack.c.bf16 %v1120, %v1112
        %v1225 = vpack.c.bf16 %v1121, %v1113
        %v1226 = vpack.c.bf16 %v1122, %v1114
        %v1227 = vpack.c.bf16 %v1123, %v1115
        %v1228 = vpack.c.bf16 %v1132, %v1124
        %v1229 = vpack.c.bf16 %v1133, %v1125
        %v1230 = vpack.c.bf16 %v1134, %v1126
        %v1231 = vpack.c.bf16 %v1135, %v1127
        %v1232 = vpack.c.bf16 %v1136, %v1128
        %v1233 = vpack.c.bf16 %v1137, %v1129
        %v1234 = vpack.c.bf16 %v1138, %v1130
        %v1235 = vpack.c.bf16 %v1139, %v1131
        %v1236 = vpack.c.bf16 %v1148, %v1140
        %v1237 = vpack.c.bf16 %v1149, %v1141
        %v1238 = vpack.c.bf16 %v1150, %v1142
        %v1239 = vpack.c.bf16 %v1151, %v1143
        %v1240 = vpack.c.bf16 %v1152, %v1144
        %v1241 = vpack.c.bf16 %v1153, %v1145
        %v1242 = vpack.c.bf16 %v1154, %v1146
        %v1243 = vpack.c.bf16 %v1155, %v1147
        %v1244 = vpack.c.bf16 %v1164, %v1156
        %v1245 = vpack.c.bf16 %v1165, %v1157
        %v1246 = vpack.c.bf16 %v1166, %v1158
        %v1247 = vpack.c.bf16 %v1167, %v1159
        %v1248 = vpack.c.bf16 %v1168, %v1160
        %v1249 = vpack.c.bf16 %v1169, %v1161
        %v1250 = vpack.c.bf16 %v1170, %v1162
        %v1251 = vpack.c.bf16 %v1171, %v1163
        %v1252 = vpack.c.bf16 %v1180, %v1172
        %v1253 = vpack.c.bf16 %v1181, %v1173
        %v1254 = vpack.c.bf16 %v1182, %v1174
        %v1255 = vpack.c.bf16 %v1183, %v1175
        %v1256 = vpack.c.bf16 %v1184, %v1176
        %v1257 = vpack.c.bf16 %v1185, %v1177
        %v1258 = vpack.c.bf16 %v1186, %v1178
        %v1259 = vpack.c.bf16 %v1187, %v1179
        %v1260 = vpack.c.bf16 %v1196, %v1188
        %v1261 = vpack.c.bf16 %v1197, %v1189
        %v1262 = vpack.c.bf16 %v1198, %v1190
        %v1263 = vpack.c.bf16 %v1199, %v1191
        %v1264 = vpack.c.bf16 %v1200, %v1192
        %v1265 = vpack.c.bf16 %v1201, %v1193
        %v1266 = vpack.c.bf16 %v1202, %v1194
        %v1267 = vpack.c.bf16 %v1203, %v1195
        %v1268 = vunpack.c.l.bf16 %v1204
        %v1269 = vunpack.c.l.bf16 %v1205
        %v1270 = vunpack.c.l.bf16 %v1206
        %v1271 = vunpack.c.l.bf16 %v1207
        %v1272 = vunpack.c.l.bf16 %v1208
        %v1273 = vunpack.c.l.bf16 %v1209
        %v1274 = vunpack.c.l.bf16 %v1210
        %v1275 = vunpack.c.l.bf16 %v1211
        %v1276 = vunpack.c.h.bf16 %v1204
        %v1277 = vunpack.c.h.bf16 %v1205
        %v1278 = vunpack.c.h.bf16 %v1206
        %v1279 = vunpack.c.h.bf16 %v1207
        %v1280 = vunpack.c.h.bf16 %v1208
        %v1281 = vunpack.c.h.bf16 %v1209
        %v1282 = vunpack.c.h.bf16 %v1210
        %v1283 = vunpack.c.h.bf16 %v1211
        %v1284 = vunpack.c.l.bf16 %v1212
        %v1285 = vunpack.c.l.bf16 %v1213
        %v1286 = vunpack.c.l.bf16 %v1214
        %v1287 = vunpack.c.l.bf16 %v1215
        %v1288 = vunpack.c.l.bf16 %v1216
        %v1289 = vunpack.c.l.bf16 %v1217
        %v1290 = vunpack.c.l.bf16 %v1218
        %v1291 = vunpack.c.l.bf16 %v1219
        %v1292 = vunpack.c.h.bf16 %v1212
        %v1293 = vunpack.c.h.bf16 %v1213
        %v1294 = vunpack.c.h.bf16 %v1214
        %v1295 = vunpack.c.h.bf16 %v1215
        %v1296 = vunpack.c.h.bf16 %v1216
        %v1297 = vunpack.c.h.bf16 %v1217
        %v1298 = vunpack.c.h.bf16 %v1218
        %v1299 = vunpack.c.h.bf16 %v1219
        %v1300 = vunpack.c.l.bf16 %v1220
        %v1301 = vunpack.c.l.bf16 %v1221
        %v1302 = vunpack.c.l.bf16 %v1222
        %v1303 = vunpack.c.l.bf16 %v1223
        %v1304 = vunpack.c.l.bf16 %v1224
        %v1305 = vunpack.c.l.bf16 %v1225
        %v1306 = vunpack.c.l.bf16 %v1226
        %v1307 = vunpack.c.l.bf16 %v1227
        %v1308 = vunpack.c.h.bf16 %v1220
        %v1309 = vunpack.c.h.bf16 %v1221
        %v1310 = vunpack.c.h.bf16 %v1222
        %v1311 = vunpack.c.h.bf16 %v1223
        %v1312 = vunpack.c.h.bf16 %v1224
        %v1313 = vunpack.c.h.bf16 %v1225
        %v1314 = vunpack.c.h.bf16 %v1226
        %v1315 = vunpack.c.h.bf16 %v1227
        %v1316 = vunpack.c.l.bf16 %v1228
        %v1317 = vunpack.c.l.bf16 %v1229
        %v1318 = vunpack.c.l.bf16 %v1230
        %v1319 = vunpack.c.l.bf16 %v1231
        %v1320 = vunpack.c.l.bf16 %v1232
        %v1321 = vunpack.c.l.bf16 %v1233
        %v1322 = vunpack.c.l.bf16 %v1234
        %v1323 = vunpack.c.l.bf16 %v1235
        %v1324 = vunpack.c.h.bf16 %v1228
        %v1325 = vunpack.c.h.bf16 %v1229
        %v1326 = vunpack.c.h.bf16 %v1230
        %v1327 = vunpack.c.h.bf16 %v1231
        %v1328 = vunpack.c.h.bf16 %v1232
        %v1329 = vunpack.c.h.bf16 %v1233
        %v1330 = vunpack.c.h.bf16 %v1234
        %v1331 = vunpack.c.h.bf16 %v1235
        %v1332 = vunpack.c.l.bf16 %v1236
        %v1333 = vunpack.c.l.bf16 %v1237
        %v1334 = vunpack.c.l.bf16 %v1238
        %v1335 = vunpack.c.l.bf16 %v1239
        %v1336 = vunpack.c.l.bf16 %v1240
        %v1337 = vunpack.c.l.bf16 %v1241
        %v1338 = vunpack.c.l.bf16 %v1242
        %v1339 = vunpack.c.l.bf16 %v1243
        %v1340 = vunpack.c.h.bf16 %v1236
        %v1341 = vunpack.c.h.bf16 %v1237
        %v1342 = vunpack.c.h.bf16 %v1238
        %v1343 = vunpack.c.h.bf16 %v1239
        %v1344 = vunpack.c.h.bf16 %v1240
        %v1345 = vunpack.c.h.bf16 %v1241
        %v1346 = vunpack.c.h.bf16 %v1242
        %v1347 = vunpack.c.h.bf16 %v1243
        %v1348 = vunpack.c.l.bf16 %v1244
        %v1349 = vunpack.c.l.bf16 %v1245
        %v1350 = vunpack.c.l.bf16 %v1246
        %v1351 = vunpack.c.l.bf16 %v1247
        %v1352 = vunpack.c.l.bf16 %v1248
        %v1353 = vunpack.c.l.bf16 %v1249
        %v1354 = vunpack.c.l.bf16 %v1250
        %v1355 = vunpack.c.l.bf16 %v1251
        %v1356 = vunpack.c.h.bf16 %v1244
        %v1357 = vunpack.c.h.bf16 %v1245
        %v1358 = vunpack.c.h.bf16 %v1246
        %v1359 = vunpack.c.h.bf16 %v1247
        %v1360 = vunpack.c.h.bf16 %v1248
        %v1361 = vunpack.c.h.bf16 %v1249
        %v1362 = vunpack.c.h.bf16 %v1250
        %v1363 = vunpack.c.h.bf16 %v1251
        %v1364 = vunpack.c.l.bf16 %v1252
        %v1365 = vunpack.c.l.bf16 %v1253
        %v1366 = vunpack.c.l.bf16 %v1254
        %v1367 = vunpack.c.l.bf16 %v1255
        %v1368 = vunpack.c.l.bf16 %v1256
        %v1369 = vunpack.c.l.bf16 %v1257
        %v1370 = vunpack.c.l.bf16 %v1258
        %v1371 = vunpack.c.l.bf16 %v1259
        %v1372 = vunpack.c.h.bf16 %v1252
        %v1373 = vunpack.c.h.bf16 %v1253
        %v1374 = vunpack.c.h.bf16 %v1254
        %v1375 = vunpack.c.h.bf16 %v1255
        %v1376 = vunpack.c.h.bf16 %v1256
        %v1377 = vunpack.c.h.bf16 %v1257
        %v1378 = vunpack.c.h.bf16 %v1258
        %v1379 = vunpack.c.h.bf16 %v1259
        %v1380 = vunpack.c.l.bf16 %v1260
        %v1381 = vunpack.c.l.bf16 %v1261
        %v1382 = vunpack.c.l.bf16 %v1262
        %v1383 = vunpack.c.l.bf16 %v1263
        %v1384 = vunpack.c.l.bf16 %v1264
        %v1385 = vunpack.c.l.bf16 %v1265
        %v1386 = vunpack.c.l.bf16 %v1266
        %v1387 = vunpack.c.l.bf16 %v1267
        %v1388 = vunpack.c.h.bf16 %v1260
        %v1389 = vunpack.c.h.bf16 %v1261
        %v1390 = vunpack.c.h.bf16 %v1262
        %v1391 = vunpack.c.h.bf16 %v1263
        %v1392 = vunpack.c.h.bf16 %v1264
        %v1393 = vunpack.c.h.bf16 %v1265
        %v1394 = vunpack.c.h.bf16 %v1266
        %v1395 = vunpack.c.h.bf16 %v1267
        %v1396 = vtanh.pop %v1268
        %v1397 = vtanh.pop %v1269
        %v1398 = vtanh.pop %v1270
        %v1399 = vtanh.pop %v1271
        %v1400 = vtanh.pop %v1272
        %v1401 = vtanh.pop %v1273
        %v1402 = vtanh.pop %v1274
        %v1403 = vtanh.pop %v1275
        %v1404 = vtanh.pop %v1276
        %v1405 = vtanh.pop %v1277
        %v1406 = vtanh.pop %v1278
        %v1407 = vtanh.pop %v1279
        %v1408 = vtanh.pop %v1280
        %v1409 = vtanh.pop %v1281
        %v1410 = vtanh.pop %v1282
        %v1411 = vtanh.pop %v1283
        %v1412 = vtanh.pop %v1284
        %v1413 = vtanh.pop %v1285
        %v1414 = vtanh.pop %v1286
        %v1415 = vtanh.pop %v1287
        %v1416 = vtanh.pop %v1288
        %v1417 = vtanh.pop %v1289
        %v1418 = vtanh.pop %v1290
        %v1419 = vtanh.pop %v1291
        %v1420 = vtanh.pop %v1292
        %v1421 = vtanh.pop %v1293
        %v1422 = vtanh.pop %v1294
        %v1423 = vtanh.pop %v1295
        %v1424 = vtanh.pop %v1296
        %v1425 = vtanh.pop %v1297
        %v1426 = vtanh.pop %v1298
        %v1427 = vtanh.pop %v1299
        %v1428 = vtanh.pop %v1300
        %v1429 = vtanh.pop %v1301
        %v1430 = vtanh.pop %v1302
        %v1431 = vtanh.pop %v1303
        %v1432 = vtanh.pop %v1304
        %v1433 = vtanh.pop %v1305
        %v1434 = vtanh.pop %v1306
        %v1435 = vtanh.pop %v1307
        %v1436 = vtanh.pop %v1308
        %v1437 = vtanh.pop %v1309
        %v1438 = vtanh.pop %v1310
        %v1439 = vtanh.pop %v1311
        %v1440 = vtanh.pop %v1312
        %v1441 = vtanh.pop %v1313
        %v1442 = vtanh.pop %v1314
        %v1443 = vtanh.pop %v1315
        %v1444 = vtanh.pop %v1316
        %v1445 = vtanh.pop %v1317
        %v1446 = vtanh.pop %v1318
        %v1447 = vtanh.pop %v1319
        %v1448 = vtanh.pop %v1320
        %v1449 = vtanh.pop %v1321
        %v1450 = vtanh.pop %v1322
        %v1451 = vtanh.pop %v1323
        %v1452 = vtanh.pop %v1324
        %v1453 = vtanh.pop %v1325
        %v1454 = vtanh.pop %v1326
        %v1455 = vtanh.pop %v1327
        %v1456 = vtanh.pop %v1328
        %v1457 = vtanh.pop %v1329
        %v1458 = vtanh.pop %v1330
        %v1459 = vtanh.pop %v1331
        %v1460 = vtanh.pop %v1332
        %v1461 = vtanh.pop %v1333
        %v1462 = vtanh.pop %v1334
        %v1463 = vtanh.pop %v1335
        %v1464 = vtanh.pop %v1336
        %v1465 = vtanh.pop %v1337
        %v1466 = vtanh.pop %v1338
        %v1467 = vtanh.pop %v1339
        %v1468 = vtanh.pop %v1340
        %v1469 = vtanh.pop %v1341
        %v1470 = vtanh.pop %v1342
        %v1471 = vtanh.pop %v1343
        %v1472 = vtanh.pop %v1344
        %v1473 = vtanh.pop %v1345
        %v1474 = vtanh.pop %v1346
        %v1475 = vtanh.pop %v1347
        %v1476 = vtanh.pop %v1348
        %v1477 = vtanh.pop %v1349
        %v1478 = vtanh.pop %v1350
        %v1479 = vtanh.pop %v1351
        %v1480 = vtanh.pop %v1352
        %v1481 = vtanh.pop %v1353
        %v1482 = vtanh.pop %v1354
        %v1483 = vtanh.pop %v1355
        %v1484 = vtanh.pop %v1356
        %v1485 = vtanh.pop %v1357
        %v1486 = vtanh.pop %v1358
        %v1487 = vtanh.pop %v1359
        %v1488 = vtanh.pop %v1360
        %v1489 = vtanh.pop %v1361
        %v1490 = vtanh.pop %v1362
        %v1491 = vtanh.pop %v1363
        %v1492 = vtanh.pop %v1364
        %v1493 = vtanh.pop %v1365
        %v1494 = vtanh.pop %v1366
        %v1495 = vtanh.pop %v1367
        %v1496 = vtanh.pop %v1368
        %v1497 = vtanh.pop %v1369
        %v1498 = vtanh.pop %v1370
        %v1499 = vtanh.pop %v1371
        %v1500 = vtanh.pop %v1372
        %v1501 = vtanh.pop %v1373
        %v1502 = vtanh.pop %v1374
        %v1503 = vtanh.pop %v1375
        %v1504 = vtanh.pop %v1376
        %v1505 = vtanh.pop %v1377
        %v1506 = vtanh.pop %v1378
        %v1507 = vtanh.pop %v1379
        %v1508 = vtanh.pop %v1380
        %v1509 = vtanh.pop %v1381
        %v1510 = vtanh.pop %v1382
        %v1511 = vtanh.pop %v1383
        %v1512 = vtanh.pop %v1384
        %v1513 = vtanh.pop %v1385
        %v1514 = vtanh.pop %v1386
        %v1515 = vtanh.pop %v1387
        %v1516 = vtanh.pop %v1388
        %v1517 = vtanh.pop %v1389
        %v1518 = vtanh.pop %v1390
        %v1519 = vtanh.pop %v1391
        %v1520 = vtanh.pop %v1392
        %v1521 = vtanh.pop %v1393
        %v1522 = vtanh.pop %v1394
        %v1523 = vtanh.pop %v1395
        %v1524 = vpack.c.bf16 %v1404, %v1396
        %v1525 = vpack.c.bf16 %v1405, %v1397
        %v1526 = vpack.c.bf16 %v1406, %v1398
        %v1527 = vpack.c.bf16 %v1407, %v1399
        %v1528 = vpack.c.bf16 %v1408, %v1400
        %v1529 = vpack.c.bf16 %v1409, %v1401
        %v1530 = vpack.c.bf16 %v1410, %v1402
        %v1531 = vpack.c.bf16 %v1411, %v1403
        %v1532 = vpack.c.bf16 %v1420, %v1412
        %v1533 = vpack.c.bf16 %v1421, %v1413
        %v1534 = vpack.c.bf16 %v1422, %v1414
        %v1535 = vpack.c.bf16 %v1423, %v1415
        %v1536 = vpack.c.bf16 %v1424, %v1416
        %v1537 = vpack.c.bf16 %v1425, %v1417
        %v1538 = vpack.c.bf16 %v1426, %v1418
        %v1539 = vpack.c.bf16 %v1427, %v1419
        %v1540 = vpack.c.bf16 %v1436, %v1428
        %v1541 = vpack.c.bf16 %v1437, %v1429
        %v1542 = vpack.c.bf16 %v1438, %v1430
        %v1543 = vpack.c.bf16 %v1439, %v1431
        %v1544 = vpack.c.bf16 %v1440, %v1432
        %v1545 = vpack.c.bf16 %v1441, %v1433
        %v1546 = vpack.c.bf16 %v1442, %v1434
        %v1547 = vpack.c.bf16 %v1443, %v1435
        %v1548 = vpack.c.bf16 %v1452, %v1444
        %v1549 = vpack.c.bf16 %v1453, %v1445
        %v1550 = vpack.c.bf16 %v1454, %v1446
        %v1551 = vpack.c.bf16 %v1455, %v1447
        %v1552 = vpack.c.bf16 %v1456, %v1448
        %v1553 = vpack.c.bf16 %v1457, %v1449
        %v1554 = vpack.c.bf16 %v1458, %v1450
        %v1555 = vpack.c.bf16 %v1459, %v1451
        %v1556 = vpack.c.bf16 %v1468, %v1460
        %v1557 = vpack.c.bf16 %v1469, %v1461
        %v1558 = vpack.c.bf16 %v1470, %v1462
        %v1559 = vpack.c.bf16 %v1471, %v1463
        %v1560 = vpack.c.bf16 %v1472, %v1464
        %v1561 = vpack.c.bf16 %v1473, %v1465
        %v1562 = vpack.c.bf16 %v1474, %v1466
        %v1563 = vpack.c.bf16 %v1475, %v1467
        %v1564 = vpack.c.bf16 %v1484, %v1476
        %v1565 = vpack.c.bf16 %v1485, %v1477
        %v1566 = vpack.c.bf16 %v1486, %v1478
        %v1567 = vpack.c.bf16 %v1487, %v1479
        %v1568 = vpack.c.bf16 %v1488, %v1480
        %v1569 = vpack.c.bf16 %v1489, %v1481
        %v1570 = vpack.c.bf16 %v1490, %v1482
        %v1571 = vpack.c.bf16 %v1491, %v1483
        %v1572 = vpack.c.bf16 %v1500, %v1492
        %v1573 = vpack.c.bf16 %v1501, %v1493
        %v1574 = vpack.c.bf16 %v1502, %v1494
        %v1575 = vpack.c.bf16 %v1503, %v1495
        %v1576 = vpack.c.bf16 %v1504, %v1496
        %v1577 = vpack.c.bf16 %v1505, %v1497
        %v1578 = vpack.c.bf16 %v1506, %v1498
        %v1579 = vpack.c.bf16 %v1507, %v1499
        %v1580 = vpack.c.bf16 %v1516, %v1508
        %v1581 = vpack.c.bf16 %v1517, %v1509
        %v1582 = vpack.c.bf16 %v1518, %v1510
        %v1583 = vpack.c.bf16 %v1519, %v1511
        %v1584 = vpack.c.bf16 %v1520, %v1512
        %v1585 = vpack.c.bf16 %v1521, %v1513
        %v1586 = vpack.c.bf16 %v1522, %v1514
        %v1587 = vpack.c.bf16 %v1523, %v1515
        %v1588 = vld [vmem:[%s3] sm:$0xf]
        %v1589 = vld [vmem:[%s3 + $0x4] sm:$0xf]
        %v1590 = vld [vmem:[%s3 + $0x8] sm:$0xf]
        %v1591 = vld [vmem:[%s3 + $0xc] sm:$0xf]
        %v1592 = vld [vmem:[%s3 + $0x10] sm:$0xf]
        %v1593 = vld [vmem:[%s3 + $0x14] sm:$0xf]
        %v1594 = vld [vmem:[%s3 + $0x18] sm:$0xf]
        %v1595 = vld [vmem:[%s3 + $0x1c] sm:$0xf]
        %v1596 = vld [vmem:[%s3 + $0x20] sm:$0xf]
        %v1597 = vld [vmem:[%s3 + $0x24] sm:$0xf]
        %v1598 = vld [vmem:[%s3 + $0x28] sm:$0xf]
        %v1599 = vld [vmem:[%s3 + $0x2c] sm:$0xf]
        %v1600 = vld [vmem:[%s3 + $0x30] sm:$0xf]
        %v1601 = vld [vmem:[%s3 + $0x34] sm:$0xf]
        %v1602 = vld [vmem:[%s3 + $0x38] sm:$0xf]
        %v1603 = vld [vmem:[%s3 + $0x3c] sm:$0xf]
        %v1604 = vld [vmem:[%s4] sm:$0xff]
        %v1605 = vld [vmem:[%s4 + $0x8] sm:$0xff]
        %v1606 = vld [vmem:[%s4 + $0x10] sm:$0xff]
        %v1607 = vld [vmem:[%s4 + $0x18] sm:$0xff]
        %v1608 = vld [vmem:[%s4 + $0x20] sm:$0xff]
        %v1609 = vld [vmem:[%s4 + $0x28] sm:$0xff]
        %v1610 = vld [vmem:[%s4 + $0x30] sm:$0xff]
        %v1611 = vld [vmem:[%s4 + $0x38] sm:$0xff]
        %v1612 = vld [vmem:[%s4 + $0x40] sm:$0xff]
        %v1613 = vld [vmem:[%s4 + $0x48] sm:$0xff]
        %v1614 = vld [vmem:[%s4 + $0x50] sm:$0xff]
        %v1615 = vld [vmem:[%s4 + $0x58] sm:$0xff]
        %v1616 = vld [vmem:[%s4 + $0x60] sm:$0xff]
        %v1617 = vld [vmem:[%s4 + $0x68] sm:$0xff]
        %v1618 = vld [vmem:[%s4 + $0x70] sm:$0xff]
        %v1619 = vld [vmem:[%s4 + $0x78] sm:$0xff]
        %1621 = vset.pattern.permute.xlu0 0
        %1622 = vperm.xlu0 %1621, %v1604
        %v1623 = vpop.permute.xlu0 %1622
        %1626 = vset.pattern.permute.xlu0 0
        %1627 = vperm.xlu0 %1626, %v1605
        %v1628 = vpop.permute.xlu0 %1627
        %1631 = vset.pattern.permute.xlu0 0
        %1632 = vperm.xlu0 %1631, %v1606
        %v1633 = vpop.permute.xlu0 %1632
        %1636 = vset.pattern.permute.xlu0 0
        %1637 = vperm.xlu0 %1636, %v1607
        %v1638 = vpop.permute.xlu0 %1637
        %1641 = vset.pattern.permute.xlu0 0
        %1642 = vperm.xlu0 %1641, %v1608
        %v1643 = vpop.permute.xlu0 %1642
        %1646 = vset.pattern.permute.xlu0 0
        %1647 = vperm.xlu0 %1646, %v1609
        %v1648 = vpop.permute.xlu0 %1647
        %1651 = vset.pattern.permute.xlu0 0
        %1652 = vperm.xlu0 %1651, %v1610
        %v1653 = vpop.permute.xlu0 %1652
        %1656 = vset.pattern.permute.xlu0 0
        %1657 = vperm.xlu0 %1656, %v1611
        %v1658 = vpop.permute.xlu0 %1657
        %1661 = vset.pattern.permute.xlu0 0
        %1662 = vperm.xlu0 %1661, %v1612
        %v1663 = vpop.permute.xlu0 %1662
        %1666 = vset.pattern.permute.xlu0 0
        %1667 = vperm.xlu0 %1666, %v1613
        %v1668 = vpop.permute.xlu0 %1667
        %1671 = vset.pattern.permute.xlu0 0
        %1672 = vperm.xlu0 %1671, %v1614
        %v1673 = vpop.permute.xlu0 %1672
        %1676 = vset.pattern.permute.xlu0 0
        %1677 = vperm.xlu0 %1676, %v1615
        %v1678 = vpop.permute.xlu0 %1677
        %1681 = vset.pattern.permute.xlu0 0
        %1682 = vperm.xlu0 %1681, %v1616
        %v1683 = vpop.permute.xlu0 %1682
        %1686 = vset.pattern.permute.xlu0 0
        %1687 = vperm.xlu0 %1686, %v1617
        %v1688 = vpop.permute.xlu0 %1687
        %1691 = vset.pattern.permute.xlu0 0
        %1692 = vperm.xlu0 %1691, %v1618
        %v1693 = vpop.permute.xlu0 %1692
        %1696 = vset.pattern.permute.xlu0 0
        %1697 = vperm.xlu0 %1696, %v1619
        %v1698 = vpop.permute.xlu0 %1697
        %v1716 = vunpack.c.l.b16 %v1588
        %v1717 = vunpack.c.l.b16 %v1589
        %v1718 = vunpack.c.l.b16 %v1590
        %v1719 = vunpack.c.l.b16 %v1591
        %v1720 = vunpack.c.l.b16 %v1592
        %v1721 = vunpack.c.l.b16 %v1593
        %v1722 = vunpack.c.l.b16 %v1594
        %v1723 = vunpack.c.l.b16 %v1595
        %v1724 = vunpack.c.l.b16 %v1596
        %v1725 = vunpack.c.l.b16 %v1597
        %v1726 = vunpack.c.l.b16 %v1598
        %v1727 = vunpack.c.l.b16 %v1599
        %v1728 = vunpack.c.l.b16 %v1600
        %v1729 = vunpack.c.l.b16 %v1601
        %v1730 = vunpack.c.l.b16 %v1602
        %v1731 = vunpack.c.l.b16 %v1603
        %v1732 = vpack.c.b16 %v1717, %v1716
        %v1733 = vpack.c.b16 %v1719, %v1718
        %v1734 = vpack.c.b16 %v1721, %v1720
        %v1735 = vpack.c.b16 %v1723, %v1722
        %v1736 = vpack.c.b16 %v1725, %v1724
        %v1737 = vpack.c.b16 %v1727, %v1726
        %v1738 = vpack.c.b16 %v1729, %v1728
        %v1739 = vpack.c.b16 %v1731, %v1730
        %1748 = vmatpush.bf16.msra.mxu0 %v1580
        %1749 = vmatpush.bf16.msra.mxu0 %v1572
        %1750 = vmatpush.bf16.msra.mxu0 %v1564
        %1751 = vmatpush.bf16.msra.mxu0 %v1556
        %1752 = vmatpush.bf16.msra.mxu0 %v1548
        %1753 = vmatpush.bf16.msra.mxu0 %v1540
        %1754 = vmatpush.bf16.msra.mxu0 %v1532
        %1755 = vmatpush.bf16.msra.mxu0 %v1524
        %1756 = vmatmul.bf16.gmra.mxu0 %v1732
        %v1757 = vpop.f32.mrf.mxu0
        %v1758 = vadd.f32 %v1623, %v1757
        %v1759 = vpop.f32.mrf.mxu0
        %v1760 = vadd.f32 %v1628, %v1759
        %1761 = vmatmul.bf16.gmra.mxu0 %v1733
        %v1762 = vpop.f32.mrf.mxu0
        %v1763 = vadd.f32 %v1633, %v1762
        %v1764 = vpop.f32.mrf.mxu0
        %v1765 = vadd.f32 %v1638, %v1764
        %1766 = vmatmul.bf16.gmra.mxu0 %v1734
        %v1767 = vpop.f32.mrf.mxu0
        %v1768 = vadd.f32 %v1643, %v1767
        %v1769 = vpop.f32.mrf.mxu0
        %v1770 = vadd.f32 %v1648, %v1769
        %1771 = vmatmul.bf16.gmra.mxu0 %v1735
        %v1772 = vpop.f32.mrf.mxu0
        %v1773 = vadd.f32 %v1653, %v1772
        %v1774 = vpop.f32.mrf.mxu0
        %v1775 = vadd.f32 %v1658, %v1774
        %1776 = vmatmul.bf16.gmra.mxu0 %v1736
        %v1777 = vpop.f32.mrf.mxu0
        %v1778 = vadd.f32 %v1663, %v1777
        %v1779 = vpop.f32.mrf.mxu0
        %v1780 = vadd.f32 %v1668, %v1779
        %1781 = vmatmul.bf16.gmra.mxu0 %v1737
        %v1782 = vpop.f32.mrf.mxu0
        %v1783 = vadd.f32 %v1673, %v1782
        %v1784 = vpop.f32.mrf.mxu0
        %v1785 = vadd.f32 %v1678, %v1784
        %1786 = vmatmul.bf16.gmra.mxu0 %v1738
        %v1787 = vpop.f32.mrf.mxu0
        %v1788 = vadd.f32 %v1683, %v1787
        %v1789 = vpop.f32.mrf.mxu0
        %v1790 = vadd.f32 %v1688, %v1789
        %1791 = vmatmul.bf16.gmra.mxu0 %v1739
        %v1792 = vpop.f32.mrf.mxu0
        %v1793 = vadd.f32 %v1693, %v1792
        %v1794 = vpop.f32.mrf.mxu0
        %v1795 = vadd.f32 %v1698, %v1794
        %1796 = vdwg.mxu0
        %1797 = vmatpush.bf16.msra.mxu0 %v1581
        %1798 = vmatpush.bf16.msra.mxu0 %v1573
        %1799 = vmatpush.bf16.msra.mxu0 %v1565
        %1800 = vmatpush.bf16.msra.mxu0 %v1557
        %1801 = vmatpush.bf16.msra.mxu0 %v1549
        %1802 = vmatpush.bf16.msra.mxu0 %v1541
        %1803 = vmatpush.bf16.msra.mxu0 %v1533
        %1804 = vmatpush.bf16.msra.mxu0 %v1525
        %1805 = vmatmul.bf16.gmra.mxu0 %v1732
        %v1806 = vpop.f32.mrf.mxu0
        %v1807 = vadd.f32 %v1623, %v1806
        %v1808 = vpop.f32.mrf.mxu0
        %v1809 = vadd.f32 %v1628, %v1808
        %1810 = vmatmul.bf16.gmra.mxu0 %v1733
        %v1811 = vpop.f32.mrf.mxu0
        %v1812 = vadd.f32 %v1633, %v1811
        %v1813 = vpop.f32.mrf.mxu0
        %v1814 = vadd.f32 %v1638, %v1813
        %1815 = vmatmul.bf16.gmra.mxu0 %v1734
        %v1816 = vpop.f32.mrf.mxu0
        %v1817 = vadd.f32 %v1643, %v1816
        %v1818 = vpop.f32.mrf.mxu0
        %v1819 = vadd.f32 %v1648, %v1818
        %1820 = vmatmul.bf16.gmra.mxu0 %v1735
        %v1821 = vpop.f32.mrf.mxu0
        %v1822 = vadd.f32 %v1653, %v1821
        %v1823 = vpop.f32.mrf.mxu0
        %v1824 = vadd.f32 %v1658, %v1823
        %1825 = vmatmul.bf16.gmra.mxu0 %v1736
        %v1826 = vpop.f32.mrf.mxu0
        %v1827 = vadd.f32 %v1663, %v1826
        %v1828 = vpop.f32.mrf.mxu0
        %v1829 = vadd.f32 %v1668, %v1828
        %1830 = vmatmul.bf16.gmra.mxu0 %v1737
        %v1831 = vpop.f32.mrf.mxu0
        %v1832 = vadd.f32 %v1673, %v1831
        %v1833 = vpop.f32.mrf.mxu0
        %v1834 = vadd.f32 %v1678, %v1833
        %1835 = vmatmul.bf16.gmra.mxu0 %v1738
        %v1836 = vpop.f32.mrf.mxu0
        %v1837 = vadd.f32 %v1683, %v1836
        %v1838 = vpop.f32.mrf.mxu0
        %v1839 = vadd.f32 %v1688, %v1838
        %1840 = vmatmul.bf16.gmra.mxu0 %v1739
        %v1841 = vpop.f32.mrf.mxu0
        %v1842 = vadd.f32 %v1693, %v1841
        %v1843 = vpop.f32.mrf.mxu0
        %v1844 = vadd.f32 %v1698, %v1843
        %1845 = vdwg.mxu0
        %1846 = vmatpush.bf16.msra.mxu0 %v1582
        %1847 = vmatpush.bf16.msra.mxu0 %v1574
        %1848 = vmatpush.bf16.msra.mxu0 %v1566
        %1849 = vmatpush.bf16.msra.mxu0 %v1558
        %1850 = vmatpush.bf16.msra.mxu0 %v1550
        %1851 = vmatpush.bf16.msra.mxu0 %v1542
        %1852 = vmatpush.bf16.msra.mxu0 %v1534
        %1853 = vmatpush.bf16.msra.mxu0 %v1526
        %1854 = vmatmul.bf16.gmra.mxu0 %v1732
        %v1855 = vpop.f32.mrf.mxu0
        %v1856 = vadd.f32 %v1623, %v1855
        %v1857 = vpop.f32.mrf.mxu0
        %v1858 = vadd.f32 %v1628, %v1857
        %1859 = vmatmul.bf16.gmra.mxu0 %v1733
        %v1860 = vpop.f32.mrf.mxu0
        %v1861 = vadd.f32 %v1633, %v1860
        %v1862 = vpop.f32.mrf.mxu0
        %v1863 = vadd.f32 %v1638, %v1862
        %1864 = vmatmul.bf16.gmra.mxu0 %v1734
        %v1865 = vpop.f32.mrf.mxu0
        %v1866 = vadd.f32 %v1643, %v1865
        %v1867 = vpop.f32.mrf.mxu0
        %v1868 = vadd.f32 %v1648, %v1867
        %1869 = vmatmul.bf16.gmra.mxu0 %v1735
        %v1870 = vpop.f32.mrf.mxu0
        %v1871 = vadd.f32 %v1653, %v1870
        %v1872 = vpop.f32.mrf.mxu0
        %v1873 = vadd.f32 %v1658, %v1872
        %1874 = vmatmul.bf16.gmra.mxu0 %v1736
        %v1875 = vpop.f32.mrf.mxu0
        %v1876 = vadd.f32 %v1663, %v1875
        %v1877 = vpop.f32.mrf.mxu0
        %v1878 = vadd.f32 %v1668, %v1877
        %1879 = vmatmul.bf16.gmra.mxu0 %v1737
        %v1880 = vpop.f32.mrf.mxu0
        %v1881 = vadd.f32 %v1673, %v1880
        %v1882 = vpop.f32.mrf.mxu0
        %v1883 = vadd.f32 %v1678, %v1882
        %1884 = vmatmul.bf16.gmra.mxu0 %v1738
        %v1885 = vpop.f32.mrf.mxu0
        %v1886 = vadd.f32 %v1683, %v1885
        %v1887 = vpop.f32.mrf.mxu0
        %v1888 = vadd.f32 %v1688, %v1887
        %1889 = vmatmul.bf16.gmra.mxu0 %v1739
        %v1890 = vpop.f32.mrf.mxu0
        %v1891 = vadd.f32 %v1693, %v1890
        %v1892 = vpop.f32.mrf.mxu0
        %v1893 = vadd.f32 %v1698, %v1892
        %1894 = vdwg.mxu0
        %1895 = vmatpush.bf16.msra.mxu0 %v1583
        %1896 = vmatpush.bf16.msra.mxu0 %v1575
        %1897 = vmatpush.bf16.msra.mxu0 %v1567
        %1898 = vmatpush.bf16.msra.mxu0 %v1559
        %1899 = vmatpush.bf16.msra.mxu0 %v1551
        %1900 = vmatpush.bf16.msra.mxu0 %v1543
        %1901 = vmatpush.bf16.msra.mxu0 %v1535
        %1902 = vmatpush.bf16.msra.mxu0 %v1527
        %1903 = vmatmul.bf16.gmra.mxu0 %v1732
        %v1904 = vpop.f32.mrf.mxu0
        %v1905 = vadd.f32 %v1623, %v1904
        %v1906 = vpop.f32.mrf.mxu0
        %v1907 = vadd.f32 %v1628, %v1906
        %1908 = vmatmul.bf16.gmra.mxu0 %v1733
        %v1909 = vpop.f32.mrf.mxu0
        %v1910 = vadd.f32 %v1633, %v1909
        %v1911 = vpop.f32.mrf.mxu0
        %v1912 = vadd.f32 %v1638, %v1911
        %1913 = vmatmul.bf16.gmra.mxu0 %v1734
        %v1914 = vpop.f32.mrf.mxu0
        %v1915 = vadd.f32 %v1643, %v1914
        %v1916 = vpop.f32.mrf.mxu0
        %v1917 = vadd.f32 %v1648, %v1916
        %1918 = vmatmul.bf16.gmra.mxu0 %v1735
        %v1919 = vpop.f32.mrf.mxu0
        %v1920 = vadd.f32 %v1653, %v1919
        %v1921 = vpop.f32.mrf.mxu0
        %v1922 = vadd.f32 %v1658, %v1921
        %1923 = vmatmul.bf16.gmra.mxu0 %v1736
        %v1924 = vpop.f32.mrf.mxu0
        %v1925 = vadd.f32 %v1663, %v1924
        %v1926 = vpop.f32.mrf.mxu0
        %v1927 = vadd.f32 %v1668, %v1926
        %1928 = vmatmul.bf16.gmra.mxu0 %v1737
        %v1929 = vpop.f32.mrf.mxu0
        %v1930 = vadd.f32 %v1673, %v1929
        %v1931 = vpop.f32.mrf.mxu0
        %v1932 = vadd.f32 %v1678, %v1931
        %1933 = vmatmul.bf16.gmra.mxu0 %v1738
        %v1934 = vpop.f32.mrf.mxu0
        %v1935 = vadd.f32 %v1683, %v1934
        %v1936 = vpop.f32.mrf.mxu0
        %v1937 = vadd.f32 %v1688, %v1936
        %1938 = vmatmul.bf16.gmra.mxu0 %v1739
        %v1939 = vpop.f32.mrf.mxu0
        %v1940 = vadd.f32 %v1693, %v1939
        %v1941 = vpop.f32.mrf.mxu0
        %v1942 = vadd.f32 %v1698, %v1941
        %1943 = vdwg.mxu0
        %1944 = vmatpush.bf16.msra.mxu0 %v1584
        %1945 = vmatpush.bf16.msra.mxu0 %v1576
        %1946 = vmatpush.bf16.msra.mxu0 %v1568
        %1947 = vmatpush.bf16.msra.mxu0 %v1560
        %1948 = vmatpush.bf16.msra.mxu0 %v1552
        %1949 = vmatpush.bf16.msra.mxu0 %v1544
        %1950 = vmatpush.bf16.msra.mxu0 %v1536
        %1951 = vmatpush.bf16.msra.mxu0 %v1528
        %1952 = vmatmul.bf16.gmra.mxu0 %v1732
        %v1953 = vpop.f32.mrf.mxu0
        %v1954 = vadd.f32 %v1623, %v1953
        %v1955 = vpop.f32.mrf.mxu0
        %v1956 = vadd.f32 %v1628, %v1955
        %1957 = vmatmul.bf16.gmra.mxu0 %v1733
        %v1958 = vpop.f32.mrf.mxu0
        %v1959 = vadd.f32 %v1633, %v1958
        %v1960 = vpop.f32.mrf.mxu0
        %v1961 = vadd.f32 %v1638, %v1960
        %1962 = vmatmul.bf16.gmra.mxu0 %v1734
        %v1963 = vpop.f32.mrf.mxu0
        %v1964 = vadd.f32 %v1643, %v1963
        %v1965 = vpop.f32.mrf.mxu0
        %v1966 = vadd.f32 %v1648, %v1965
        %1967 = vmatmul.bf16.gmra.mxu0 %v1735
        %v1968 = vpop.f32.mrf.mxu0
        %v1969 = vadd.f32 %v1653, %v1968
        %v1970 = vpop.f32.mrf.mxu0
        %v1971 = vadd.f32 %v1658, %v1970
        %1972 = vmatmul.bf16.gmra.mxu0 %v1736
        %v1973 = vpop.f32.mrf.mxu0
        %v1974 = vadd.f32 %v1663, %v1973
        %v1975 = vpop.f32.mrf.mxu0
        %v1976 = vadd.f32 %v1668, %v1975
        %1977 = vmatmul.bf16.gmra.mxu0 %v1737
        %v1978 = vpop.f32.mrf.mxu0
        %v1979 = vadd.f32 %v1673, %v1978
        %v1980 = vpop.f32.mrf.mxu0
        %v1981 = vadd.f32 %v1678, %v1980
        %1982 = vmatmul.bf16.gmra.mxu0 %v1738
        %v1983 = vpop.f32.mrf.mxu0
        %v1984 = vadd.f32 %v1683, %v1983
        %v1985 = vpop.f32.mrf.mxu0
        %v1986 = vadd.f32 %v1688, %v1985
        %1987 = vmatmul.bf16.gmra.mxu0 %v1739
        %v1988 = vpop.f32.mrf.mxu0
        %v1989 = vadd.f32 %v1693, %v1988
        %v1990 = vpop.f32.mrf.mxu0
        %v1991 = vadd.f32 %v1698, %v1990
        %1992 = vdwg.mxu0
        %1993 = vmatpush.bf16.msra.mxu0 %v1585
        %1994 = vmatpush.bf16.msra.mxu0 %v1577
        %1995 = vmatpush.bf16.msra.mxu0 %v1569
        %1996 = vmatpush.bf16.msra.mxu0 %v1561
        %1997 = vmatpush.bf16.msra.mxu0 %v1553
        %1998 = vmatpush.bf16.msra.mxu0 %v1545
        %1999 = vmatpush.bf16.msra.mxu0 %v1537
        %2000 = vmatpush.bf16.msra.mxu0 %v1529
        %2001 = vmatmul.bf16.gmra.mxu0 %v1732
        %v2002 = vpop.f32.mrf.mxu0
        %v2003 = vadd.f32 %v1623, %v2002
        %v2004 = vpop.f32.mrf.mxu0
        %v2005 = vadd.f32 %v1628, %v2004
        %2006 = vmatmul.bf16.gmra.mxu0 %v1733
        %v2007 = vpop.f32.mrf.mxu0
        %v2008 = vadd.f32 %v1633, %v2007
        %v2009 = vpop.f32.mrf.mxu0
        %v2010 = vadd.f32 %v1638, %v2009
        %2011 = vmatmul.bf16.gmra.mxu0 %v1734
        %v2012 = vpop.f32.mrf.mxu0
        %v2013 = vadd.f32 %v1643, %v2012
        %v2014 = vpop.f32.mrf.mxu0
        %v2015 = vadd.f32 %v1648, %v2014
        %2016 = vmatmul.bf16.gmra.mxu0 %v1735
        %v2017 = vpop.f32.mrf.mxu0
        %v2018 = vadd.f32 %v1653, %v2017
        %v2019 = vpop.f32.mrf.mxu0
        %v2020 = vadd.f32 %v1658, %v2019
        %2021 = vmatmul.bf16.gmra.mxu0 %v1736
        %v2022 = vpop.f32.mrf.mxu0
        %v2023 = vadd.f32 %v1663, %v2022
        %v2024 = vpop.f32.mrf.mxu0
        %v2025 = vadd.f32 %v1668, %v2024
        %2026 = vmatmul.bf16.gmra.mxu0 %v1737
        %v2027 = vpop.f32.mrf.mxu0
        %v2028 = vadd.f32 %v1673, %v2027
        %v2029 = vpop.f32.mrf.mxu0
        %v2030 = vadd.f32 %v1678, %v2029
        %2031 = vmatmul.bf16.gmra.mxu0 %v1738
        %v2032 = vpop.f32.mrf.mxu0
        %v2033 = vadd.f32 %v1683, %v2032
        %v2034 = vpop.f32.mrf.mxu0
        %v2035 = vadd.f32 %v1688, %v2034
        %2036 = vmatmul.bf16.gmra.mxu0 %v1739
        %v2037 = vpop.f32.mrf.mxu0
        %v2038 = vadd.f32 %v1693, %v2037
        %v2039 = vpop.f32.mrf.mxu0
        %v2040 = vadd.f32 %v1698, %v2039
        %2041 = vdwg.mxu0
        %2042 = vmatpush.bf16.msra.mxu0 %v1586
        %2043 = vmatpush.bf16.msra.mxu0 %v1578
        %2044 = vmatpush.bf16.msra.mxu0 %v1570
        %2045 = vmatpush.bf16.msra.mxu0 %v1562
        %2046 = vmatpush.bf16.msra.mxu0 %v1554
        %2047 = vmatpush.bf16.msra.mxu0 %v1546
        %2048 = vmatpush.bf16.msra.mxu0 %v1538
        %2049 = vmatpush.bf16.msra.mxu0 %v1530
        %2050 = vmatmul.bf16.gmra.mxu0 %v1732
        %v2051 = vpop.f32.mrf.mxu0
        %v2052 = vadd.f32 %v1623, %v2051
        %v2053 = vpop.f32.mrf.mxu0
        %v2054 = vadd.f32 %v1628, %v2053
        %2055 = vmatmul.bf16.gmra.mxu0 %v1733
        %v2056 = vpop.f32.mrf.mxu0
        %v2057 = vadd.f32 %v1633, %v2056
        %v2058 = vpop.f32.mrf.mxu0
        %v2059 = vadd.f32 %v1638, %v2058
        %2060 = vmatmul.bf16.gmra.mxu0 %v1734
        %v2061 = vpop.f32.mrf.mxu0
        %v2062 = vadd.f32 %v1643, %v2061
        %v2063 = vpop.f32.mrf.mxu0
        %v2064 = vadd.f32 %v1648, %v2063
        %2065 = vmatmul.bf16.gmra.mxu0 %v1735
        %v2066 = vpop.f32.mrf.mxu0
        %v2067 = vadd.f32 %v1653, %v2066
        %v2068 = vpop.f32.mrf.mxu0
        %v2069 = vadd.f32 %v1658, %v2068
        %2070 = vmatmul.bf16.gmra.mxu0 %v1736
        %v2071 = vpop.f32.mrf.mxu0
        %v2072 = vadd.f32 %v1663, %v2071
        %v2073 = vpop.f32.mrf.mxu0
        %v2074 = vadd.f32 %v1668, %v2073
        %2075 = vmatmul.bf16.gmra.mxu0 %v1737
        %v2076 = vpop.f32.mrf.mxu0
        %v2077 = vadd.f32 %v1673, %v2076
        %v2078 = vpop.f32.mrf.mxu0
        %v2079 = vadd.f32 %v1678, %v2078
        %2080 = vmatmul.bf16.gmra.mxu0 %v1738
        %v2081 = vpop.f32.mrf.mxu0
        %v2082 = vadd.f32 %v1683, %v2081
        %v2083 = vpop.f32.mrf.mxu0
        %v2084 = vadd.f32 %v1688, %v2083
        %2085 = vmatmul.bf16.gmra.mxu0 %v1739
        %v2086 = vpop.f32.mrf.mxu0
        %v2087 = vadd.f32 %v1693, %v2086
        %v2088 = vpop.f32.mrf.mxu0
        %v2089 = vadd.f32 %v1698, %v2088
        %2090 = vdwg.mxu0
        %2091 = vmatpush.bf16.msra.mxu0 %v1587
        %2092 = vmatpush.bf16.msra.mxu0 %v1579
        %2093 = vmatpush.bf16.msra.mxu0 %v1571
        %2094 = vmatpush.bf16.msra.mxu0 %v1563
        %2095 = vmatpush.bf16.msra.mxu0 %v1555
        %2096 = vmatpush.bf16.msra.mxu0 %v1547
        %2097 = vmatpush.bf16.msra.mxu0 %v1539
        %2098 = vmatpush.bf16.msra.mxu0 %v1531
        %2099 = vmatmul.bf16.gmra.mxu0 %v1732
        %v2100 = vpop.f32.mrf.mxu0
        %v2101 = vadd.f32 %v1623, %v2100
        %v2102 = vpop.f32.mrf.mxu0
        %v2103 = vadd.f32 %v1628, %v2102
        %2104 = vmatmul.bf16.gmra.mxu0 %v1733
        %v2105 = vpop.f32.mrf.mxu0
        %v2106 = vadd.f32 %v1633, %v2105
        %v2107 = vpop.f32.mrf.mxu0
        %v2108 = vadd.f32 %v1638, %v2107
        %2109 = vmatmul.bf16.gmra.mxu0 %v1734
        %v2110 = vpop.f32.mrf.mxu0
        %v2111 = vadd.f32 %v1643, %v2110
        %v2112 = vpop.f32.mrf.mxu0
        %v2113 = vadd.f32 %v1648, %v2112
        %2114 = vmatmul.bf16.gmra.mxu0 %v1735
        %v2115 = vpop.f32.mrf.mxu0
        %v2116 = vadd.f32 %v1653, %v2115
        %v2117 = vpop.f32.mrf.mxu0
        %v2118 = vadd.f32 %v1658, %v2117
        %2119 = vmatmul.bf16.gmra.mxu0 %v1736
        %v2120 = vpop.f32.mrf.mxu0
        %v2121 = vadd.f32 %v1663, %v2120
        %v2122 = vpop.f32.mrf.mxu0
        %v2123 = vadd.f32 %v1668, %v2122
        %2124 = vmatmul.bf16.gmra.mxu0 %v1737
        %v2125 = vpop.f32.mrf.mxu0
        %v2126 = vadd.f32 %v1673, %v2125
        %v2127 = vpop.f32.mrf.mxu0
        %v2128 = vadd.f32 %v1678, %v2127
        %2129 = vmatmul.bf16.gmra.mxu0 %v1738
        %v2130 = vpop.f32.mrf.mxu0
        %v2131 = vadd.f32 %v1683, %v2130
        %v2132 = vpop.f32.mrf.mxu0
        %v2133 = vadd.f32 %v1688, %v2132
        %2134 = vmatmul.bf16.gmra.mxu0 %v1739
        %v2135 = vpop.f32.mrf.mxu0
        %v2136 = vadd.f32 %v1693, %v2135
        %v2137 = vpop.f32.mrf.mxu0
        %v2138 = vadd.f32 %v1698, %v2137
        %2139 = vdwg.mxu0
        %v2140 = vpack.c.bf16 %v1760, %v1758
        %v2141 = vpack.c.bf16 %v1809, %v1807
        %v2142 = vpack.c.bf16 %v1858, %v1856
        %v2143 = vpack.c.bf16 %v1907, %v1905
        %v2144 = vpack.c.bf16 %v1956, %v1954
        %v2145 = vpack.c.bf16 %v2005, %v2003
        %v2146 = vpack.c.bf16 %v2054, %v2052
        %v2147 = vpack.c.bf16 %v2103, %v2101
        %v2148 = vpack.c.bf16 %v1765, %v1763
        %v2149 = vpack.c.bf16 %v1814, %v1812
        %v2150 = vpack.c.bf16 %v1863, %v1861
        %v2151 = vpack.c.bf16 %v1912, %v1910
        %v2152 = vpack.c.bf16 %v1961, %v1959
        %v2153 = vpack.c.bf16 %v2010, %v2008
        %v2154 = vpack.c.bf16 %v2059, %v2057
        %v2155 = vpack.c.bf16 %v2108, %v2106
        %v2156 = vpack.c.bf16 %v1770, %v1768
        %v2157 = vpack.c.bf16 %v1819, %v1817
        %v2158 = vpack.c.bf16 %v1868, %v1866
        %v2159 = vpack.c.bf16 %v1917, %v1915
        %v2160 = vpack.c.bf16 %v1966, %v1964
        %v2161 = vpack.c.bf16 %v2015, %v2013
        %v2162 = vpack.c.bf16 %v2064, %v2062
        %v2163 = vpack.c.bf16 %v2113, %v2111
        %v2164 = vpack.c.bf16 %v1775, %v1773
        %v2165 = vpack.c.bf16 %v1824, %v1822
        %v2166 = vpack.c.bf16 %v1873, %v1871
        %v2167 = vpack.c.bf16 %v1922, %v1920
        %v2168 = vpack.c.bf16 %v1971, %v1969
        %v2169 = vpack.c.bf16 %v2020, %v2018
        %v2170 = vpack.c.bf16 %v2069, %v2067
        %v2171 = vpack.c.bf16 %v2118, %v2116
        %v2172 = vpack.c.bf16 %v1780, %v1778
        %v2173 = vpack.c.bf16 %v1829, %v1827
        %v2174 = vpack.c.bf16 %v1878, %v1876
        %v2175 = vpack.c.bf16 %v1927, %v1925
        %v2176 = vpack.c.bf16 %v1976, %v1974
        %v2177 = vpack.c.bf16 %v2025, %v2023
        %v2178 = vpack.c.bf16 %v2074, %v2072
        %v2179 = vpack.c.bf16 %v2123, %v2121
        %v2180 = vpack.c.bf16 %v1785, %v1783
        %v2181 = vpack.c.bf16 %v1834, %v1832
        %v2182 = vpack.c.bf16 %v1883, %v1881
        %v2183 = vpack.c.bf16 %v1932, %v1930
        %v2184 = vpack.c.bf16 %v1981, %v1979
        %v2185 = vpack.c.bf16 %v2030, %v2028
        %v2186 = vpack.c.bf16 %v2079, %v2077
        %v2187 = vpack.c.bf16 %v2128, %v2126
        %v2188 = vpack.c.bf16 %v1790, %v1788
        %v2189 = vpack.c.bf16 %v1839, %v1837
        %v2190 = vpack.c.bf16 %v1888, %v1886
        %v2191 = vpack.c.bf16 %v1937, %v1935
        %v2192 = vpack.c.bf16 %v1986, %v1984
        %v2193 = vpack.c.bf16 %v2035, %v2033
        %v2194 = vpack.c.bf16 %v2084, %v2082
        %v2195 = vpack.c.bf16 %v2133, %v2131
        %v2196 = vpack.c.bf16 %v1795, %v1793
        %v2197 = vpack.c.bf16 %v1844, %v1842
        %v2198 = vpack.c.bf16 %v1893, %v1891
        %v2199 = vpack.c.bf16 %v1942, %v1940
        %v2200 = vpack.c.bf16 %v1991, %v1989
        %v2201 = vpack.c.bf16 %v2040, %v2038
        %v2202 = vpack.c.bf16 %v2089, %v2087
        %v2203 = vpack.c.bf16 %v2138, %v2136
        %v2204 = vunpack.c.l.bf16 %v2140
        %v2205 = vunpack.c.l.bf16 %v2141
        %v2206 = vunpack.c.l.bf16 %v2142
        %v2207 = vunpack.c.l.bf16 %v2143
        %v2208 = vunpack.c.l.bf16 %v2144
        %v2209 = vunpack.c.l.bf16 %v2145
        %v2210 = vunpack.c.l.bf16 %v2146
        %v2211 = vunpack.c.l.bf16 %v2147
        %v2212 = vunpack.c.h.bf16 %v2140
        %v2213 = vunpack.c.h.bf16 %v2141
        %v2214 = vunpack.c.h.bf16 %v2142
        %v2215 = vunpack.c.h.bf16 %v2143
        %v2216 = vunpack.c.h.bf16 %v2144
        %v2217 = vunpack.c.h.bf16 %v2145
        %v2218 = vunpack.c.h.bf16 %v2146
        %v2219 = vunpack.c.h.bf16 %v2147
        %v2220 = vunpack.c.l.bf16 %v2148
        %v2221 = vunpack.c.l.bf16 %v2149
        %v2222 = vunpack.c.l.bf16 %v2150
        %v2223 = vunpack.c.l.bf16 %v2151
        %v2224 = vunpack.c.l.bf16 %v2152
        %v2225 = vunpack.c.l.bf16 %v2153
        %v2226 = vunpack.c.l.bf16 %v2154
        %v2227 = vunpack.c.l.bf16 %v2155
        %v2228 = vunpack.c.h.bf16 %v2148
        %v2229 = vunpack.c.h.bf16 %v2149
        %v2230 = vunpack.c.h.bf16 %v2150
        %v2231 = vunpack.c.h.bf16 %v2151
        %v2232 = vunpack.c.h.bf16 %v2152
        %v2233 = vunpack.c.h.bf16 %v2153
        %v2234 = vunpack.c.h.bf16 %v2154
        %v2235 = vunpack.c.h.bf16 %v2155
        %v2236 = vunpack.c.l.bf16 %v2156
        %v2237 = vunpack.c.l.bf16 %v2157
        %v2238 = vunpack.c.l.bf16 %v2158
        %v2239 = vunpack.c.l.bf16 %v2159
        %v2240 = vunpack.c.l.bf16 %v2160
        %v2241 = vunpack.c.l.bf16 %v2161
        %v2242 = vunpack.c.l.bf16 %v2162
        %v2243 = vunpack.c.l.bf16 %v2163
        %v2244 = vunpack.c.h.bf16 %v2156
        %v2245 = vunpack.c.h.bf16 %v2157
        %v2246 = vunpack.c.h.bf16 %v2158
        %v2247 = vunpack.c.h.bf16 %v2159
        %v2248 = vunpack.c.h.bf16 %v2160
        %v2249 = vunpack.c.h.bf16 %v2161
        %v2250 = vunpack.c.h.bf16 %v2162
        %v2251 = vunpack.c.h.bf16 %v2163
        %v2252 = vunpack.c.l.bf16 %v2164
        %v2253 = vunpack.c.l.bf16 %v2165
        %v2254 = vunpack.c.l.bf16 %v2166
        %v2255 = vunpack.c.l.bf16 %v2167
        %v2256 = vunpack.c.l.bf16 %v2168
        %v2257 = vunpack.c.l.bf16 %v2169
        %v2258 = vunpack.c.l.bf16 %v2170
        %v2259 = vunpack.c.l.bf16 %v2171
        %v2260 = vunpack.c.h.bf16 %v2164
        %v2261 = vunpack.c.h.bf16 %v2165
        %v2262 = vunpack.c.h.bf16 %v2166
        %v2263 = vunpack.c.h.bf16 %v2167
        %v2264 = vunpack.c.h.bf16 %v2168
        %v2265 = vunpack.c.h.bf16 %v2169
        %v2266 = vunpack.c.h.bf16 %v2170
        %v2267 = vunpack.c.h.bf16 %v2171
        %v2268 = vunpack.c.l.bf16 %v2172
        %v2269 = vunpack.c.l.bf16 %v2173
        %v2270 = vunpack.c.l.bf16 %v2174
        %v2271 = vunpack.c.l.bf16 %v2175
        %v2272 = vunpack.c.l.bf16 %v2176
        %v2273 = vunpack.c.l.bf16 %v2177
        %v2274 = vunpack.c.l.bf16 %v2178
        %v2275 = vunpack.c.l.bf16 %v2179
        %v2276 = vunpack.c.h.bf16 %v2172
        %v2277 = vunpack.c.h.bf16 %v2173
        %v2278 = vunpack.c.h.bf16 %v2174
        %v2279 = vunpack.c.h.bf16 %v2175
        %v2280 = vunpack.c.h.bf16 %v2176
        %v2281 = vunpack.c.h.bf16 %v2177
        %v2282 = vunpack.c.h.bf16 %v2178
        %v2283 = vunpack.c.h.bf16 %v2179
        %v2284 = vunpack.c.l.bf16 %v2180
        %v2285 = vunpack.c.l.bf16 %v2181
        %v2286 = vunpack.c.l.bf16 %v2182
        %v2287 = vunpack.c.l.bf16 %v2183
        %v2288 = vunpack.c.l.bf16 %v2184
        %v2289 = vunpack.c.l.bf16 %v2185
        %v2290 = vunpack.c.l.bf16 %v2186
        %v2291 = vunpack.c.l.bf16 %v2187
        %v2292 = vunpack.c.h.bf16 %v2180
        %v2293 = vunpack.c.h.bf16 %v2181
        %v2294 = vunpack.c.h.bf16 %v2182
        %v2295 = vunpack.c.h.bf16 %v2183
        %v2296 = vunpack.c.h.bf16 %v2184
        %v2297 = vunpack.c.h.bf16 %v2185
        %v2298 = vunpack.c.h.bf16 %v2186
        %v2299 = vunpack.c.h.bf16 %v2187
        %v2300 = vunpack.c.l.bf16 %v2188
        %v2301 = vunpack.c.l.bf16 %v2189
        %v2302 = vunpack.c.l.bf16 %v2190
        %v2303 = vunpack.c.l.bf16 %v2191
        %v2304 = vunpack.c.l.bf16 %v2192
        %v2305 = vunpack.c.l.bf16 %v2193
        %v2306 = vunpack.c.l.bf16 %v2194
        %v2307 = vunpack.c.l.bf16 %v2195
        %v2308 = vunpack.c.h.bf16 %v2188
        %v2309 = vunpack.c.h.bf16 %v2189
        %v2310 = vunpack.c.h.bf16 %v2190
        %v2311 = vunpack.c.h.bf16 %v2191
        %v2312 = vunpack.c.h.bf16 %v2192
        %v2313 = vunpack.c.h.bf16 %v2193
        %v2314 = vunpack.c.h.bf16 %v2194
        %v2315 = vunpack.c.h.bf16 %v2195
        %v2316 = vunpack.c.l.bf16 %v2196
        %v2317 = vunpack.c.l.bf16 %v2197
        %v2318 = vunpack.c.l.bf16 %v2198
        %v2319 = vunpack.c.l.bf16 %v2199
        %v2320 = vunpack.c.l.bf16 %v2200
        %v2321 = vunpack.c.l.bf16 %v2201
        %v2322 = vunpack.c.l.bf16 %v2202
        %v2323 = vunpack.c.l.bf16 %v2203
        %v2324 = vunpack.c.h.bf16 %v2196
        %v2325 = vunpack.c.h.bf16 %v2197
        %v2326 = vunpack.c.h.bf16 %v2198
        %v2327 = vunpack.c.h.bf16 %v2199
        %v2328 = vunpack.c.h.bf16 %v2200
        %v2329 = vunpack.c.h.bf16 %v2201
        %v2330 = vunpack.c.h.bf16 %v2202
        %v2331 = vunpack.c.h.bf16 %v2203
        %v2332 = vtanh.pop %v2204
        %v2333 = vtanh.pop %v2205
        %v2334 = vtanh.pop %v2206
        %v2335 = vtanh.pop %v2207
        %v2336 = vtanh.pop %v2208
        %v2337 = vtanh.pop %v2209
        %v2338 = vtanh.pop %v2210
        %v2339 = vtanh.pop %v2211
        %v2340 = vtanh.pop %v2212
        %v2341 = vtanh.pop %v2213
        %v2342 = vtanh.pop %v2214
        %v2343 = vtanh.pop %v2215
        %v2344 = vtanh.pop %v2216
        %v2345 = vtanh.pop %v2217
        %v2346 = vtanh.pop %v2218
        %v2347 = vtanh.pop %v2219
        %v2348 = vtanh.pop %v2220
        %v2349 = vtanh.pop %v2221
        %v2350 = vtanh.pop %v2222
        %v2351 = vtanh.pop %v2223
        %v2352 = vtanh.pop %v2224
        %v2353 = vtanh.pop %v2225
        %v2354 = vtanh.pop %v2226
        %v2355 = vtanh.pop %v2227
        %v2356 = vtanh.pop %v2228
        %v2357 = vtanh.pop %v2229
        %v2358 = vtanh.pop %v2230
        %v2359 = vtanh.pop %v2231
        %v2360 = vtanh.pop %v2232
        %v2361 = vtanh.pop %v2233
        %v2362 = vtanh.pop %v2234
        %v2363 = vtanh.pop %v2235
        %v2364 = vtanh.pop %v2236
        %v2365 = vtanh.pop %v2237
        %v2366 = vtanh.pop %v2238
        %v2367 = vtanh.pop %v2239
        %v2368 = vtanh.pop %v2240
        %v2369 = vtanh.pop %v2241
        %v2370 = vtanh.pop %v2242
        %v2371 = vtanh.pop %v2243
        %v2372 = vtanh.pop %v2244
        %v2373 = vtanh.pop %v2245
        %v2374 = vtanh.pop %v2246
        %v2375 = vtanh.pop %v2247
        %v2376 = vtanh.pop %v2248
        %v2377 = vtanh.pop %v2249
        %v2378 = vtanh.pop %v2250
        %v2379 = vtanh.pop %v2251
        %v2380 = vtanh.pop %v2252
        %v2381 = vtanh.pop %v2253
        %v2382 = vtanh.pop %v2254
        %v2383 = vtanh.pop %v2255
        %v2384 = vtanh.pop %v2256
        %v2385 = vtanh.pop %v2257
        %v2386 = vtanh.pop %v2258
        %v2387 = vtanh.pop %v2259
        %v2388 = vtanh.pop %v2260
        %v2389 = vtanh.pop %v2261
        %v2390 = vtanh.pop %v2262
        %v2391 = vtanh.pop %v2263
        %v2392 = vtanh.pop %v2264
        %v2393 = vtanh.pop %v2265
        %v2394 = vtanh.pop %v2266
        %v2395 = vtanh.pop %v2267
        %v2396 = vtanh.pop %v2268
        %v2397 = vtanh.pop %v2269
        %v2398 = vtanh.pop %v2270
        %v2399 = vtanh.pop %v2271
        %v2400 = vtanh.pop %v2272
        %v2401 = vtanh.pop %v2273
        %v2402 = vtanh.pop %v2274
        %v2403 = vtanh.pop %v2275
        %v2404 = vtanh.pop %v2276
        %v2405 = vtanh.pop %v2277
        %v2406 = vtanh.pop %v2278
        %v2407 = vtanh.pop %v2279
        %v2408 = vtanh.pop %v2280
        %v2409 = vtanh.pop %v2281
        %v2410 = vtanh.pop %v2282
        %v2411 = vtanh.pop %v2283
        %v2412 = vtanh.pop %v2284
        %v2413 = vtanh.pop %v2285
        %v2414 = vtanh.pop %v2286
        %v2415 = vtanh.pop %v2287
        %v2416 = vtanh.pop %v2288
        %v2417 = vtanh.pop %v2289
        %v2418 = vtanh.pop %v2290
        %v2419 = vtanh.pop %v2291
        %v2420 = vtanh.pop %v2292
        %v2421 = vtanh.pop %v2293
        %v2422 = vtanh.pop %v2294
        %v2423 = vtanh.pop %v2295
        %v2424 = vtanh.pop %v2296
        %v2425 = vtanh.pop %v2297
        %v2426 = vtanh.pop %v2298
        %v2427 = vtanh.pop %v2299
        %v2428 = vtanh.pop %v2300
        %v2429 = vtanh.pop %v2301
        %v2430 = vtanh.pop %v2302
        %v2431 = vtanh.pop %v2303
        %v2432 = vtanh.pop %v2304
        %v2433 = vtanh.pop %v2305
        %v2434 = vtanh.pop %v2306
        %v2435 = vtanh.pop %v2307
        %v2436 = vtanh.pop %v2308
        %v2437 = vtanh.pop %v2309
        %v2438 = vtanh.pop %v2310
        %v2439 = vtanh.pop %v2311
        %v2440 = vtanh.pop %v2312
        %v2441 = vtanh.pop %v2313
        %v2442 = vtanh.pop %v2314
        %v2443 = vtanh.pop %v2315
        %v2444 = vtanh.pop %v2316
        %v2445 = vtanh.pop %v2317
        %v2446 = vtanh.pop %v2318
        %v2447 = vtanh.pop %v2319
        %v2448 = vtanh.pop %v2320
        %v2449 = vtanh.pop %v2321
        %v2450 = vtanh.pop %v2322
        %v2451 = vtanh.pop %v2323
        %v2452 = vtanh.pop %v2324
        %v2453 = vtanh.pop %v2325
        %v2454 = vtanh.pop %v2326
        %v2455 = vtanh.pop %v2327
        %v2456 = vtanh.pop %v2328
        %v2457 = vtanh.pop %v2329
        %v2458 = vtanh.pop %v2330
        %v2459 = vtanh.pop %v2331
        %v2460 = vpack.c.bf16 %v2340, %v2332
        %v2461 = vpack.c.bf16 %v2341, %v2333
        %v2462 = vpack.c.bf16 %v2342, %v2334
        %v2463 = vpack.c.bf16 %v2343, %v2335
        %v2464 = vpack.c.bf16 %v2344, %v2336
        %v2465 = vpack.c.bf16 %v2345, %v2337
        %v2466 = vpack.c.bf16 %v2346, %v2338
        %v2467 = vpack.c.bf16 %v2347, %v2339
        %v2468 = vpack.c.bf16 %v2356, %v2348
        %v2469 = vpack.c.bf16 %v2357, %v2349
        %v2470 = vpack.c.bf16 %v2358, %v2350
        %v2471 = vpack.c.bf16 %v2359, %v2351
        %v2472 = vpack.c.bf16 %v2360, %v2352
        %v2473 = vpack.c.bf16 %v2361, %v2353
        %v2474 = vpack.c.bf16 %v2362, %v2354
        %v2475 = vpack.c.bf16 %v2363, %v2355
        %v2476 = vpack.c.bf16 %v2372, %v2364
        %v2477 = vpack.c.bf16 %v2373, %v2365
        %v2478 = vpack.c.bf16 %v2374, %v2366
        %v2479 = vpack.c.bf16 %v2375, %v2367
        %v2480 = vpack.c.bf16 %v2376, %v2368
        %v2481 = vpack.c.bf16 %v2377, %v2369
        %v2482 = vpack.c.bf16 %v2378, %v2370
        %v2483 = vpack.c.bf16 %v2379, %v2371
        %v2484 = vpack.c.bf16 %v2388, %v2380
        %v2485 = vpack.c.bf16 %v2389, %v2381
        %v2486 = vpack.c.bf16 %v2390, %v2382
        %v2487 = vpack.c.bf16 %v2391, %v2383
        %v2488 = vpack.c.bf16 %v2392, %v2384
        %v2489 = vpack.c.bf16 %v2393, %v2385
        %v2490 = vpack.c.bf16 %v2394, %v2386
        %v2491 = vpack.c.bf16 %v2395, %v2387
        %v2492 = vpack.c.bf16 %v2404, %v2396
        %v2493 = vpack.c.bf16 %v2405, %v2397
        %v2494 = vpack.c.bf16 %v2406, %v2398
        %v2495 = vpack.c.bf16 %v2407, %v2399
        %v2496 = vpack.c.bf16 %v2408, %v2400
        %v2497 = vpack.c.bf16 %v2409, %v2401
        %v2498 = vpack.c.bf16 %v2410, %v2402
        %v2499 = vpack.c.bf16 %v2411, %v2403
        %v2500 = vpack.c.bf16 %v2420, %v2412
        %v2501 = vpack.c.bf16 %v2421, %v2413
        %v2502 = vpack.c.bf16 %v2422, %v2414
        %v2503 = vpack.c.bf16 %v2423, %v2415
        %v2504 = vpack.c.bf16 %v2424, %v2416
        %v2505 = vpack.c.bf16 %v2425, %v2417
        %v2506 = vpack.c.bf16 %v2426, %v2418
        %v2507 = vpack.c.bf16 %v2427, %v2419
        %v2508 = vpack.c.bf16 %v2436, %v2428
        %v2509 = vpack.c.bf16 %v2437, %v2429
        %v2510 = vpack.c.bf16 %v2438, %v2430
        %v2511 = vpack.c.bf16 %v2439, %v2431
        %v2512 = vpack.c.bf16 %v2440, %v2432
        %v2513 = vpack.c.bf16 %v2441, %v2433
        %v2514 = vpack.c.bf16 %v2442, %v2434
        %v2515 = vpack.c.bf16 %v2443, %v2435
        %v2516 = vpack.c.bf16 %v2452, %v2444
        %v2517 = vpack.c.bf16 %v2453, %v2445
        %v2518 = vpack.c.bf16 %v2454, %v2446
        %v2519 = vpack.c.bf16 %v2455, %v2447
        %v2520 = vpack.c.bf16 %v2456, %v2448
        %v2521 = vpack.c.bf16 %v2457, %v2449
        %v2522 = vpack.c.bf16 %v2458, %v2450
        %v2523 = vpack.c.bf16 %v2459, %v2451
        %v2524 = vld [vmem:[%s5] sm:$0xf]
        %v2525 = vld [vmem:[%s5 + $0x4] sm:$0xf]
        %v2526 = vld [vmem:[%s5 + $0x8] sm:$0xf]
        %v2527 = vld [vmem:[%s5 + $0xc] sm:$0xf]
        %v2528 = vld [vmem:[%s5 + $0x10] sm:$0xf]
        %v2529 = vld [vmem:[%s5 + $0x14] sm:$0xf]
        %v2530 = vld [vmem:[%s5 + $0x18] sm:$0xf]
        %v2531 = vld [vmem:[%s5 + $0x1c] sm:$0xf]
        %v2532 = vld [vmem:[%s5 + $0x20] sm:$0xf]
        %v2533 = vld [vmem:[%s5 + $0x24] sm:$0xf]
        %v2534 = vld [vmem:[%s5 + $0x28] sm:$0xf]
        %v2535 = vld [vmem:[%s5 + $0x2c] sm:$0xf]
        %v2536 = vld [vmem:[%s5 + $0x30] sm:$0xf]
        %v2537 = vld [vmem:[%s5 + $0x34] sm:$0xf]
        %v2538 = vld [vmem:[%s5 + $0x38] sm:$0xf]
        %v2539 = vld [vmem:[%s5 + $0x3c] sm:$0xf]
        %v2540 = vld [vmem:[%s6] sm:$0xff]
        %v2541 = vld [vmem:[%s6 + $0x8] sm:$0xff]
        %v2542 = vld [vmem:[%s6 + $0x10] sm:$0xff]
        %v2543 = vld [vmem:[%s6 + $0x18] sm:$0xff]
        %v2544 = vld [vmem:[%s6 + $0x20] sm:$0xff]
        %v2545 = vld [vmem:[%s6 + $0x28] sm:$0xff]
        %v2546 = vld [vmem:[%s6 + $0x30] sm:$0xff]
        %v2547 = vld [vmem:[%s6 + $0x38] sm:$0xff]
        %v2548 = vld [vmem:[%s6 + $0x40] sm:$0xff]
        %v2549 = vld [vmem:[%s6 + $0x48] sm:$0xff]
        %v2550 = vld [vmem:[%s6 + $0x50] sm:$0xff]
        %v2551 = vld [vmem:[%s6 + $0x58] sm:$0xff]
        %v2552 = vld [vmem:[%s6 + $0x60] sm:$0xff]
        %v2553 = vld [vmem:[%s6 + $0x68] sm:$0xff]
        %v2554 = vld [vmem:[%s6 + $0x70] sm:$0xff]
        %v2555 = vld [vmem:[%s6 + $0x78] sm:$0xff]
        %2557 = vset.pattern.permute.xlu0 0
        %2558 = vperm.xlu0 %2557, %v2540
        %v2559 = vpop.permute.xlu0 %2558
        %2562 = vset.pattern.permute.xlu0 0
        %2563 = vperm.xlu0 %2562, %v2541
        %v2564 = vpop.permute.xlu0 %2563
        %2567 = vset.pattern.permute.xlu0 0
        %2568 = vperm.xlu0 %2567, %v2542
        %v2569 = vpop.permute.xlu0 %2568
        %2572 = vset.pattern.permute.xlu0 0
        %2573 = vperm.xlu0 %2572, %v2543
        %v2574 = vpop.permute.xlu0 %2573
        %2577 = vset.pattern.permute.xlu0 0
        %2578 = vperm.xlu0 %2577, %v2544
        %v2579 = vpop.permute.xlu0 %2578
        %2582 = vset.pattern.permute.xlu0 0
        %2583 = vperm.xlu0 %2582, %v2545
        %v2584 = vpop.permute.xlu0 %2583
        %2587 = vset.pattern.permute.xlu0 0
        %2588 = vperm.xlu0 %2587, %v2546
        %v2589 = vpop.permute.xlu0 %2588
        %2592 = vset.pattern.permute.xlu0 0
        %2593 = vperm.xlu0 %2592, %v2547
        %v2594 = vpop.permute.xlu0 %2593
        %2597 = vset.pattern.permute.xlu0 0
        %2598 = vperm.xlu0 %2597, %v2548
        %v2599 = vpop.permute.xlu0 %2598
        %2602 = vset.pattern.permute.xlu0 0
        %2603 = vperm.xlu0 %2602, %v2549
        %v2604 = vpop.permute.xlu0 %2603
        %2607 = vset.pattern.permute.xlu0 0
        %2608 = vperm.xlu0 %2607, %v2550
        %v2609 = vpop.permute.xlu0 %2608
        %2612 = vset.pattern.permute.xlu0 0
        %2613 = vperm.xlu0 %2612, %v2551
        %v2614 = vpop.permute.xlu0 %2613
        %2617 = vset.pattern.permute.xlu0 0
        %2618 = vperm.xlu0 %2617, %v2552
        %v2619 = vpop.permute.xlu0 %2618
        %2622 = vset.pattern.permute.xlu0 0
        %2623 = vperm.xlu0 %2622, %v2553
        %v2624 = vpop.permute.xlu0 %2623
        %2627 = vset.pattern.permute.xlu0 0
        %2628 = vperm.xlu0 %2627, %v2554
        %v2629 = vpop.permute.xlu0 %2628
        %2632 = vset.pattern.permute.xlu0 0
        %2633 = vperm.xlu0 %2632, %v2555
        %v2634 = vpop.permute.xlu0 %2633
        %v2652 = vunpack.c.l.b16 %v2524
        %v2653 = vunpack.c.l.b16 %v2525
        %v2654 = vunpack.c.l.b16 %v2526
        %v2655 = vunpack.c.l.b16 %v2527
        %v2656 = vunpack.c.l.b16 %v2528
        %v2657 = vunpack.c.l.b16 %v2529
        %v2658 = vunpack.c.l.b16 %v2530
        %v2659 = vunpack.c.l.b16 %v2531
        %v2660 = vunpack.c.l.b16 %v2532
        %v2661 = vunpack.c.l.b16 %v2533
        %v2662 = vunpack.c.l.b16 %v2534
        %v2663 = vunpack.c.l.b16 %v2535
        %v2664 = vunpack.c.l.b16 %v2536
        %v2665 = vunpack.c.l.b16 %v2537
        %v2666 = vunpack.c.l.b16 %v2538
        %v2667 = vunpack.c.l.b16 %v2539
        %v2668 = vpack.c.b16 %v2653, %v2652
        %v2669 = vpack.c.b16 %v2655, %v2654
        %v2670 = vpack.c.b16 %v2657, %v2656
        %v2671 = vpack.c.b16 %v2659, %v2658
        %v2672 = vpack.c.b16 %v2661, %v2660
        %v2673 = vpack.c.b16 %v2663, %v2662
        %v2674 = vpack.c.b16 %v2665, %v2664
        %v2675 = vpack.c.b16 %v2667, %v2666
        %2684 = vmatpush.bf16.msra.mxu0 %v2516
        %2685 = vmatpush.bf16.msra.mxu0 %v2508
        %2686 = vmatpush.bf16.msra.mxu0 %v2500
        %2687 = vmatpush.bf16.msra.mxu0 %v2492
        %2688 = vmatpush.bf16.msra.mxu0 %v2484
        %2689 = vmatpush.bf16.msra.mxu0 %v2476
        %2690 = vmatpush.bf16.msra.mxu0 %v2468
        %2691 = vmatpush.bf16.msra.mxu0 %v2460
        %2692 = vmatmul.bf16.gmra.mxu0 %v2668
        %v2693 = vpop.f32.mrf.mxu0
        %v2694 = vadd.f32 %v2559, %v2693
        %v2695 = vpop.f32.mrf.mxu0
        %v2696 = vadd.f32 %v2564, %v2695
        %2697 = vmatmul.bf16.gmra.mxu0 %v2669
        %v2698 = vpop.f32.mrf.mxu0
        %v2699 = vadd.f32 %v2569, %v2698
        %v2700 = vpop.f32.mrf.mxu0
        %v2701 = vadd.f32 %v2574, %v2700
        %2702 = vmatmul.bf16.gmra.mxu0 %v2670
        %v2703 = vpop.f32.mrf.mxu0
        %v2704 = vadd.f32 %v2579, %v2703
        %v2705 = vpop.f32.mrf.mxu0
        %v2706 = vadd.f32 %v2584, %v2705
        %2707 = vmatmul.bf16.gmra.mxu0 %v2671
        %v2708 = vpop.f32.mrf.mxu0
        %v2709 = vadd.f32 %v2589, %v2708
        %v2710 = vpop.f32.mrf.mxu0
        %v2711 = vadd.f32 %v2594, %v2710
        %2712 = vmatmul.bf16.gmra.mxu0 %v2672
        %v2713 = vpop.f32.mrf.mxu0
        %v2714 = vadd.f32 %v2599, %v2713
        %v2715 = vpop.f32.mrf.mxu0
        %v2716 = vadd.f32 %v2604, %v2715
        %2717 = vmatmul.bf16.gmra.mxu0 %v2673
        %v2718 = vpop.f32.mrf.mxu0
        %v2719 = vadd.f32 %v2609, %v2718
        %v2720 = vpop.f32.mrf.mxu0
        %v2721 = vadd.f32 %v2614, %v2720
        %2722 = vmatmul.bf16.gmra.mxu0 %v2674
        %v2723 = vpop.f32.mrf.mxu0
        %v2724 = vadd.f32 %v2619, %v2723
        %v2725 = vpop.f32.mrf.mxu0
        %v2726 = vadd.f32 %v2624, %v2725
        %2727 = vmatmul.bf16.gmra.mxu0 %v2675
        %v2728 = vpop.f32.mrf.mxu0
        %v2729 = vadd.f32 %v2629, %v2728
        %v2730 = vpop.f32.mrf.mxu0
        %v2731 = vadd.f32 %v2634, %v2730
        %2732 = vdwg.mxu0
        %2733 = vmatpush.bf16.msra.mxu0 %v2517
        %2734 = vmatpush.bf16.msra.mxu0 %v2509
        %2735 = vmatpush.bf16.msra.mxu0 %v2501
        %2736 = vmatpush.bf16.msra.mxu0 %v2493
        %2737 = vmatpush.bf16.msra.mxu0 %v2485
        %2738 = vmatpush.bf16.msra.mxu0 %v2477
        %2739 = vmatpush.bf16.msra.mxu0 %v2469
        %2740 = vmatpush.bf16.msra.mxu0 %v2461
        %2741 = vmatmul.bf16.gmra.mxu0 %v2668
        %v2742 = vpop.f32.mrf.mxu0
        %v2743 = vadd.f32 %v2559, %v2742
        %v2744 = vpop.f32.mrf.mxu0
        %v2745 = vadd.f32 %v2564, %v2744
        %2746 = vmatmul.bf16.gmra.mxu0 %v2669
        %v2747 = vpop.f32.mrf.mxu0
        %v2748 = vadd.f32 %v2569, %v2747
        %v2749 = vpop.f32.mrf.mxu0
        %v2750 = vadd.f32 %v2574, %v2749
        %2751 = vmatmul.bf16.gmra.mxu0 %v2670
        %v2752 = vpop.f32.mrf.mxu0
        %v2753 = vadd.f32 %v2579, %v2752
        %v2754 = vpop.f32.mrf.mxu0
        %v2755 = vadd.f32 %v2584, %v2754
        %2756 = vmatmul.bf16.gmra.mxu0 %v2671
        %v2757 = vpop.f32.mrf.mxu0
        %v2758 = vadd.f32 %v2589, %v2757
        %v2759 = vpop.f32.mrf.mxu0
        %v2760 = vadd.f32 %v2594, %v2759
        %2761 = vmatmul.bf16.gmra.mxu0 %v2672
        %v2762 = vpop.f32.mrf.mxu0
        %v2763 = vadd.f32 %v2599, %v2762
        %v2764 = vpop.f32.mrf.mxu0
        %v2765 = vadd.f32 %v2604, %v2764
        %2766 = vmatmul.bf16.gmra.mxu0 %v2673
        %v2767 = vpop.f32.mrf.mxu0
        %v2768 = vadd.f32 %v2609, %v2767
        %v2769 = vpop.f32.mrf.mxu0
        %v2770 = vadd.f32 %v2614, %v2769
        %2771 = vmatmul.bf16.gmra.mxu0 %v2674
        %v2772 = vpop.f32.mrf.mxu0
        %v2773 = vadd.f32 %v2619, %v2772
        %v2774 = vpop.f32.mrf.mxu0
        %v2775 = vadd.f32 %v2624, %v2774
        %2776 = vmatmul.bf16.gmra.mxu0 %v2675
        %v2777 = vpop.f32.mrf.mxu0
        %v2778 = vadd.f32 %v2629, %v2777
        %v2779 = vpop.f32.mrf.mxu0
        %v2780 = vadd.f32 %v2634, %v2779
        %2781 = vdwg.mxu0
        %2782 = vmatpush.bf16.msra.mxu0 %v2518
        %2783 = vmatpush.bf16.msra.mxu0 %v2510
        %2784 = vmatpush.bf16.msra.mxu0 %v2502
        %2785 = vmatpush.bf16.msra.mxu0 %v2494
        %2786 = vmatpush.bf16.msra.mxu0 %v2486
        %2787 = vmatpush.bf16.msra.mxu0 %v2478
        %2788 = vmatpush.bf16.msra.mxu0 %v2470
        %2789 = vmatpush.bf16.msra.mxu0 %v2462
        %2790 = vmatmul.bf16.gmra.mxu0 %v2668
        %v2791 = vpop.f32.mrf.mxu0
        %v2792 = vadd.f32 %v2559, %v2791
        %v2793 = vpop.f32.mrf.mxu0
        %v2794 = vadd.f32 %v2564, %v2793
        %2795 = vmatmul.bf16.gmra.mxu0 %v2669
        %v2796 = vpop.f32.mrf.mxu0
        %v2797 = vadd.f32 %v2569, %v2796
        %v2798 = vpop.f32.mrf.mxu0
        %v2799 = vadd.f32 %v2574, %v2798
        %2800 = vmatmul.bf16.gmra.mxu0 %v2670
        %v2801 = vpop.f32.mrf.mxu0
        %v2802 = vadd.f32 %v2579, %v2801
        %v2803 = vpop.f32.mrf.mxu0
        %v2804 = vadd.f32 %v2584, %v2803
        %2805 = vmatmul.bf16.gmra.mxu0 %v2671
        %v2806 = vpop.f32.mrf.mxu0
        %v2807 = vadd.f32 %v2589, %v2806
        %v2808 = vpop.f32.mrf.mxu0
        %v2809 = vadd.f32 %v2594, %v2808
        %2810 = vmatmul.bf16.gmra.mxu0 %v2672
        %v2811 = vpop.f32.mrf.mxu0
        %v2812 = vadd.f32 %v2599, %v2811
        %v2813 = vpop.f32.mrf.mxu0
        %v2814 = vadd.f32 %v2604, %v2813
        %2815 = vmatmul.bf16.gmra.mxu0 %v2673
        %v2816 = vpop.f32.mrf.mxu0
        %v2817 = vadd.f32 %v2609, %v2816
        %v2818 = vpop.f32.mrf.mxu0
        %v2819 = vadd.f32 %v2614, %v2818
        %2820 = vmatmul.bf16.gmra.mxu0 %v2674
        %v2821 = vpop.f32.mrf.mxu0
        %v2822 = vadd.f32 %v2619, %v2821
        %v2823 = vpop.f32.mrf.mxu0
        %v2824 = vadd.f32 %v2624, %v2823
        %2825 = vmatmul.bf16.gmra.mxu0 %v2675
        %v2826 = vpop.f32.mrf.mxu0
        %v2827 = vadd.f32 %v2629, %v2826
        %v2828 = vpop.f32.mrf.mxu0
        %v2829 = vadd.f32 %v2634, %v2828
        %2830 = vdwg.mxu0
        %2831 = vmatpush.bf16.msra.mxu0 %v2519
        %2832 = vmatpush.bf16.msra.mxu0 %v2511
        %2833 = vmatpush.bf16.msra.mxu0 %v2503
        %2834 = vmatpush.bf16.msra.mxu0 %v2495
        %2835 = vmatpush.bf16.msra.mxu0 %v2487
        %2836 = vmatpush.bf16.msra.mxu0 %v2479
        %2837 = vmatpush.bf16.msra.mxu0 %v2471
        %2838 = vmatpush.bf16.msra.mxu0 %v2463
        %2839 = vmatmul.bf16.gmra.mxu0 %v2668
        %v2840 = vpop.f32.mrf.mxu0
        %v2841 = vadd.f32 %v2559, %v2840
        %v2842 = vpop.f32.mrf.mxu0
        %v2843 = vadd.f32 %v2564, %v2842
        %2844 = vmatmul.bf16.gmra.mxu0 %v2669
        %v2845 = vpop.f32.mrf.mxu0
        %v2846 = vadd.f32 %v2569, %v2845
        %v2847 = vpop.f32.mrf.mxu0
        %v2848 = vadd.f32 %v2574, %v2847
        %2849 = vmatmul.bf16.gmra.mxu0 %v2670
        %v2850 = vpop.f32.mrf.mxu0
        %v2851 = vadd.f32 %v2579, %v2850
        %v2852 = vpop.f32.mrf.mxu0
        %v2853 = vadd.f32 %v2584, %v2852
        %2854 = vmatmul.bf16.gmra.mxu0 %v2671
        %v2855 = vpop.f32.mrf.mxu0
        %v2856 = vadd.f32 %v2589, %v2855
        %v2857 = vpop.f32.mrf.mxu0
        %v2858 = vadd.f32 %v2594, %v2857
        %2859 = vmatmul.bf16.gmra.mxu0 %v2672
        %v2860 = vpop.f32.mrf.mxu0
        %v2861 = vadd.f32 %v2599, %v2860
        %v2862 = vpop.f32.mrf.mxu0
        %v2863 = vadd.f32 %v2604, %v2862
        %2864 = vmatmul.bf16.gmra.mxu0 %v2673
        %v2865 = vpop.f32.mrf.mxu0
        %v2866 = vadd.f32 %v2609, %v2865
        %v2867 = vpop.f32.mrf.mxu0
        %v2868 = vadd.f32 %v2614, %v2867
        %2869 = vmatmul.bf16.gmra.mxu0 %v2674
        %v2870 = vpop.f32.mrf.mxu0
        %v2871 = vadd.f32 %v2619, %v2870
        %v2872 = vpop.f32.mrf.mxu0
        %v2873 = vadd.f32 %v2624, %v2872
        %2874 = vmatmul.bf16.gmra.mxu0 %v2675
        %v2875 = vpop.f32.mrf.mxu0
        %v2876 = vadd.f32 %v2629, %v2875
        %v2877 = vpop.f32.mrf.mxu0
        %v2878 = vadd.f32 %v2634, %v2877
        %2879 = vdwg.mxu0
        %2880 = vmatpush.bf16.msra.mxu0 %v2520
        %2881 = vmatpush.bf16.msra.mxu0 %v2512
        %2882 = vmatpush.bf16.msra.mxu0 %v2504
        %2883 = vmatpush.bf16.msra.mxu0 %v2496
        %2884 = vmatpush.bf16.msra.mxu0 %v2488
        %2885 = vmatpush.bf16.msra.mxu0 %v2480
        %2886 = vmatpush.bf16.msra.mxu0 %v2472
        %2887 = vmatpush.bf16.msra.mxu0 %v2464
        %2888 = vmatmul.bf16.gmra.mxu0 %v2668
        %v2889 = vpop.f32.mrf.mxu0
        %v2890 = vadd.f32 %v2559, %v2889
        %v2891 = vpop.f32.mrf.mxu0
        %v2892 = vadd.f32 %v2564, %v2891
        %2893 = vmatmul.bf16.gmra.mxu0 %v2669
        %v2894 = vpop.f32.mrf.mxu0
        %v2895 = vadd.f32 %v2569, %v2894
        %v2896 = vpop.f32.mrf.mxu0
        %v2897 = vadd.f32 %v2574, %v2896
        %2898 = vmatmul.bf16.gmra.mxu0 %v2670
        %v2899 = vpop.f32.mrf.mxu0
        %v2900 = vadd.f32 %v2579, %v2899
        %v2901 = vpop.f32.mrf.mxu0
        %v2902 = vadd.f32 %v2584, %v2901
        %2903 = vmatmul.bf16.gmra.mxu0 %v2671
        %v2904 = vpop.f32.mrf.mxu0
        %v2905 = vadd.f32 %v2589, %v2904
        %v2906 = vpop.f32.mrf.mxu0
        %v2907 = vadd.f32 %v2594, %v2906
        %2908 = vmatmul.bf16.gmra.mxu0 %v2672
        %v2909 = vpop.f32.mrf.mxu0
        %v2910 = vadd.f32 %v2599, %v2909
        %v2911 = vpop.f32.mrf.mxu0
        %v2912 = vadd.f32 %v2604, %v2911
        %2913 = vmatmul.bf16.gmra.mxu0 %v2673
        %v2914 = vpop.f32.mrf.mxu0
        %v2915 = vadd.f32 %v2609, %v2914
        %v2916 = vpop.f32.mrf.mxu0
        %v2917 = vadd.f32 %v2614, %v2916
        %2918 = vmatmul.bf16.gmra.mxu0 %v2674
        %v2919 = vpop.f32.mrf.mxu0
        %v2920 = vadd.f32 %v2619, %v2919
        %v2921 = vpop.f32.mrf.mxu0
        %v2922 = vadd.f32 %v2624, %v2921
        %2923 = vmatmul.bf16.gmra.mxu0 %v2675
        %v2924 = vpop.f32.mrf.mxu0
        %v2925 = vadd.f32 %v2629, %v2924
        %v2926 = vpop.f32.mrf.mxu0
        %v2927 = vadd.f32 %v2634, %v2926
        %2928 = vdwg.mxu0
        %2929 = vmatpush.bf16.msra.mxu0 %v2521
        %2930 = vmatpush.bf16.msra.mxu0 %v2513
        %2931 = vmatpush.bf16.msra.mxu0 %v2505
        %2932 = vmatpush.bf16.msra.mxu0 %v2497
        %2933 = vmatpush.bf16.msra.mxu0 %v2489
        %2934 = vmatpush.bf16.msra.mxu0 %v2481
        %2935 = vmatpush.bf16.msra.mxu0 %v2473
        %2936 = vmatpush.bf16.msra.mxu0 %v2465
        %2937 = vmatmul.bf16.gmra.mxu0 %v2668
        %v2938 = vpop.f32.mrf.mxu0
        %v2939 = vadd.f32 %v2559, %v2938
        %v2940 = vpop.f32.mrf.mxu0
        %v2941 = vadd.f32 %v2564, %v2940
        %2942 = vmatmul.bf16.gmra.mxu0 %v2669
        %v2943 = vpop.f32.mrf.mxu0
        %v2944 = vadd.f32 %v2569, %v2943
        %v2945 = vpop.f32.mrf.mxu0
        %v2946 = vadd.f32 %v2574, %v2945
        %2947 = vmatmul.bf16.gmra.mxu0 %v2670
        %v2948 = vpop.f32.mrf.mxu0
        %v2949 = vadd.f32 %v2579, %v2948
        %v2950 = vpop.f32.mrf.mxu0
        %v2951 = vadd.f32 %v2584, %v2950
        %2952 = vmatmul.bf16.gmra.mxu0 %v2671
        %v2953 = vpop.f32.mrf.mxu0
        %v2954 = vadd.f32 %v2589, %v2953
        %v2955 = vpop.f32.mrf.mxu0
        %v2956 = vadd.f32 %v2594, %v2955
        %2957 = vmatmul.bf16.gmra.mxu0 %v2672
        %v2958 = vpop.f32.mrf.mxu0
        %v2959 = vadd.f32 %v2599, %v2958
        %v2960 = vpop.f32.mrf.mxu0
        %v2961 = vadd.f32 %v2604, %v2960
        %2962 = vmatmul.bf16.gmra.mxu0 %v2673
        %v2963 = vpop.f32.mrf.mxu0
        %v2964 = vadd.f32 %v2609, %v2963
        %v2965 = vpop.f32.mrf.mxu0
        %v2966 = vadd.f32 %v2614, %v2965
        %2967 = vmatmul.bf16.gmra.mxu0 %v2674
        %v2968 = vpop.f32.mrf.mxu0
        %v2969 = vadd.f32 %v2619, %v2968
        %v2970 = vpop.f32.mrf.mxu0
        %v2971 = vadd.f32 %v2624, %v2970
        %2972 = vmatmul.bf16.gmra.mxu0 %v2675
        %v2973 = vpop.f32.mrf.mxu0
        %v2974 = vadd.f32 %v2629, %v2973
        %v2975 = vpop.f32.mrf.mxu0
        %v2976 = vadd.f32 %v2634, %v2975
        %2977 = vdwg.mxu0
        %2978 = vmatpush.bf16.msra.mxu0 %v2522
        %2979 = vmatpush.bf16.msra.mxu0 %v2514
        %2980 = vmatpush.bf16.msra.mxu0 %v2506
        %2981 = vmatpush.bf16.msra.mxu0 %v2498
        %2982 = vmatpush.bf16.msra.mxu0 %v2490
        %2983 = vmatpush.bf16.msra.mxu0 %v2482
        %2984 = vmatpush.bf16.msra.mxu0 %v2474
        %2985 = vmatpush.bf16.msra.mxu0 %v2466
        %2986 = vmatmul.bf16.gmra.mxu0 %v2668
        %v2987 = vpop.f32.mrf.mxu0
        %v2988 = vadd.f32 %v2559, %v2987
        %v2989 = vpop.f32.mrf.mxu0
        %v2990 = vadd.f32 %v2564, %v2989
        %2991 = vmatmul.bf16.gmra.mxu0 %v2669
        %v2992 = vpop.f32.mrf.mxu0
        %v2993 = vadd.f32 %v2569, %v2992
        %v2994 = vpop.f32.mrf.mxu0
        %v2995 = vadd.f32 %v2574, %v2994
        %2996 = vmatmul.bf16.gmra.mxu0 %v2670
        %v2997 = vpop.f32.mrf.mxu0
        %v2998 = vadd.f32 %v2579, %v2997
        %v2999 = vpop.f32.mrf.mxu0
        %v3000 = vadd.f32 %v2584, %v2999
        %3001 = vmatmul.bf16.gmra.mxu0 %v2671
        %v3002 = vpop.f32.mrf.mxu0
        %v3003 = vadd.f32 %v2589, %v3002
        %v3004 = vpop.f32.mrf.mxu0
        %v3005 = vadd.f32 %v2594, %v3004
        %3006 = vmatmul.bf16.gmra.mxu0 %v2672
        %v3007 = vpop.f32.mrf.mxu0
        %v3008 = vadd.f32 %v2599, %v3007
        %v3009 = vpop.f32.mrf.mxu0
        %v3010 = vadd.f32 %v2604, %v3009
        %3011 = vmatmul.bf16.gmra.mxu0 %v2673
        %v3012 = vpop.f32.mrf.mxu0
        %v3013 = vadd.f32 %v2609, %v3012
        %v3014 = vpop.f32.mrf.mxu0
        %v3015 = vadd.f32 %v2614, %v3014
        %3016 = vmatmul.bf16.gmra.mxu0 %v2674
        %v3017 = vpop.f32.mrf.mxu0
        %v3018 = vadd.f32 %v2619, %v3017
        %v3019 = vpop.f32.mrf.mxu0
        %v3020 = vadd.f32 %v2624, %v3019
        %3021 = vmatmul.bf16.gmra.mxu0 %v2675
        %v3022 = vpop.f32.mrf.mxu0
        %v3023 = vadd.f32 %v2629, %v3022
        %v3024 = vpop.f32.mrf.mxu0
        %v3025 = vadd.f32 %v2634, %v3024
        %3026 = vdwg.mxu0
        %3027 = vmatpush.bf16.msra.mxu0 %v2523
        %3028 = vmatpush.bf16.msra.mxu0 %v2515
        %3029 = vmatpush.bf16.msra.mxu0 %v2507
        %3030 = vmatpush.bf16.msra.mxu0 %v2499
        %3031 = vmatpush.bf16.msra.mxu0 %v2491
        %3032 = vmatpush.bf16.msra.mxu0 %v2483
        %3033 = vmatpush.bf16.msra.mxu0 %v2475
        %3034 = vmatpush.bf16.msra.mxu0 %v2467
        %3035 = vmatmul.bf16.gmra.mxu0 %v2668
        %v3036 = vpop.f32.mrf.mxu0
        %v3037 = vadd.f32 %v2559, %v3036
        %v3038 = vpop.f32.mrf.mxu0
        %v3039 = vadd.f32 %v2564, %v3038
        %3040 = vmatmul.bf16.gmra.mxu0 %v2669
        %v3041 = vpop.f32.mrf.mxu0
        %v3042 = vadd.f32 %v2569, %v3041
        %v3043 = vpop.f32.mrf.mxu0
        %v3044 = vadd.f32 %v2574, %v3043
        %3045 = vmatmul.bf16.gmra.mxu0 %v2670
        %v3046 = vpop.f32.mrf.mxu0
        %v3047 = vadd.f32 %v2579, %v3046
        %v3048 = vpop.f32.mrf.mxu0
        %v3049 = vadd.f32 %v2584, %v3048
        %3050 = vmatmul.bf16.gmra.mxu0 %v2671
        %v3051 = vpop.f32.mrf.mxu0
        %v3052 = vadd.f32 %v2589, %v3051
        %v3053 = vpop.f32.mrf.mxu0
        %v3054 = vadd.f32 %v2594, %v3053
        %3055 = vmatmul.bf16.gmra.mxu0 %v2672
        %v3056 = vpop.f32.mrf.mxu0
        %v3057 = vadd.f32 %v2599, %v3056
        %v3058 = vpop.f32.mrf.mxu0
        %v3059 = vadd.f32 %v2604, %v3058
        %3060 = vmatmul.bf16.gmra.mxu0 %v2673
        %v3061 = vpop.f32.mrf.mxu0
        %v3062 = vadd.f32 %v2609, %v3061
        %v3063 = vpop.f32.mrf.mxu0
        %v3064 = vadd.f32 %v2614, %v3063
        %3065 = vmatmul.bf16.gmra.mxu0 %v2674
        %v3066 = vpop.f32.mrf.mxu0
        %v3067 = vadd.f32 %v2619, %v3066
        %v3068 = vpop.f32.mrf.mxu0
        %v3069 = vadd.f32 %v2624, %v3068
        %3070 = vmatmul.bf16.gmra.mxu0 %v2675
        %v3071 = vpop.f32.mrf.mxu0
        %v3072 = vadd.f32 %v2629, %v3071
        %v3073 = vpop.f32.mrf.mxu0
        %v3074 = vadd.f32 %v2634, %v3073
        %3075 = vdwg.mxu0
        %v3076 = vpack.c.bf16 %v2696, %v2694
        %v3077 = vpack.c.bf16 %v2745, %v2743
        %v3078 = vpack.c.bf16 %v2794, %v2792
        %v3079 = vpack.c.bf16 %v2843, %v2841
        %v3080 = vpack.c.bf16 %v2892, %v2890
        %v3081 = vpack.c.bf16 %v2941, %v2939
        %v3082 = vpack.c.bf16 %v2990, %v2988
        %v3083 = vpack.c.bf16 %v3039, %v3037
        %v3084 = vpack.c.bf16 %v2701, %v2699
        %v3085 = vpack.c.bf16 %v2750, %v2748
        %v3086 = vpack.c.bf16 %v2799, %v2797
        %v3087 = vpack.c.bf16 %v2848, %v2846
        %v3088 = vpack.c.bf16 %v2897, %v2895
        %v3089 = vpack.c.bf16 %v2946, %v2944
        %v3090 = vpack.c.bf16 %v2995, %v2993
        %v3091 = vpack.c.bf16 %v3044, %v3042
        %v3092 = vpack.c.bf16 %v2706, %v2704
        %v3093 = vpack.c.bf16 %v2755, %v2753
        %v3094 = vpack.c.bf16 %v2804, %v2802
        %v3095 = vpack.c.bf16 %v2853, %v2851
        %v3096 = vpack.c.bf16 %v2902, %v2900
        %v3097 = vpack.c.bf16 %v2951, %v2949
        %v3098 = vpack.c.bf16 %v3000, %v2998
        %v3099 = vpack.c.bf16 %v3049, %v3047
        %v3100 = vpack.c.bf16 %v2711, %v2709
        %v3101 = vpack.c.bf16 %v2760, %v2758
        %v3102 = vpack.c.bf16 %v2809, %v2807
        %v3103 = vpack.c.bf16 %v2858, %v2856
        %v3104 = vpack.c.bf16 %v2907, %v2905
        %v3105 = vpack.c.bf16 %v2956, %v2954
        %v3106 = vpack.c.bf16 %v3005, %v3003
        %v3107 = vpack.c.bf16 %v3054, %v3052
        %v3108 = vpack.c.bf16 %v2716, %v2714
        %v3109 = vpack.c.bf16 %v2765, %v2763
        %v3110 = vpack.c.bf16 %v2814, %v2812
        %v3111 = vpack.c.bf16 %v2863, %v2861
        %v3112 = vpack.c.bf16 %v2912, %v2910
        %v3113 = vpack.c.bf16 %v2961, %v2959
        %v3114 = vpack.c.bf16 %v3010, %v3008
        %v3115 = vpack.c.bf16 %v3059, %v3057
        %v3116 = vpack.c.bf16 %v2721, %v2719
        %v3117 = vpack.c.bf16 %v2770, %v2768
        %v3118 = vpack.c.bf16 %v2819, %v2817
        %v3119 = vpack.c.bf16 %v2868, %v2866
        %v3120 = vpack.c.bf16 %v2917, %v2915
        %v3121 = vpack.c.bf16 %v2966, %v2964
        %v3122 = vpack.c.bf16 %v3015, %v3013
        %v3123 = vpack.c.bf16 %v3064, %v3062
        %v3124 = vpack.c.bf16 %v2726, %v2724
        %v3125 = vpack.c.bf16 %v2775, %v2773
        %v3126 = vpack.c.bf16 %v2824, %v2822
        %v3127 = vpack.c.bf16 %v2873, %v2871
        %v3128 = vpack.c.bf16 %v2922, %v2920
        %v3129 = vpack.c.bf16 %v2971, %v2969
        %v3130 = vpack.c.bf16 %v3020, %v3018
        %v3131 = vpack.c.bf16 %v3069, %v3067
        %v3132 = vpack.c.bf16 %v2731, %v2729
        %v3133 = vpack.c.bf16 %v2780, %v2778
        %v3134 = vpack.c.bf16 %v2829, %v2827
        %v3135 = vpack.c.bf16 %v2878, %v2876
        %v3136 = vpack.c.bf16 %v2927, %v2925
        %v3137 = vpack.c.bf16 %v2976, %v2974
        %v3138 = vpack.c.bf16 %v3025, %v3023
        %v3139 = vpack.c.bf16 %v3074, %v3072
        %v3140 = vunpack.c.l.bf16 %v3076
        %v3141 = vunpack.c.l.bf16 %v3077
        %v3142 = vunpack.c.l.bf16 %v3078
        %v3143 = vunpack.c.l.bf16 %v3079
        %v3144 = vunpack.c.l.bf16 %v3080
        %v3145 = vunpack.c.l.bf16 %v3081
        %v3146 = vunpack.c.l.bf16 %v3082
        %v3147 = vunpack.c.l.bf16 %v3083
        %v3148 = vunpack.c.h.bf16 %v3076
        %v3149 = vunpack.c.h.bf16 %v3077
        %v3150 = vunpack.c.h.bf16 %v3078
        %v3151 = vunpack.c.h.bf16 %v3079
        %v3152 = vunpack.c.h.bf16 %v3080
        %v3153 = vunpack.c.h.bf16 %v3081
        %v3154 = vunpack.c.h.bf16 %v3082
        %v3155 = vunpack.c.h.bf16 %v3083
        %v3156 = vunpack.c.l.bf16 %v3084
        %v3157 = vunpack.c.l.bf16 %v3085
        %v3158 = vunpack.c.l.bf16 %v3086
        %v3159 = vunpack.c.l.bf16 %v3087
        %v3160 = vunpack.c.l.bf16 %v3088
        %v3161 = vunpack.c.l.bf16 %v3089
        %v3162 = vunpack.c.l.bf16 %v3090
        %v3163 = vunpack.c.l.bf16 %v3091
        %v3164 = vunpack.c.h.bf16 %v3084
        %v3165 = vunpack.c.h.bf16 %v3085
        %v3166 = vunpack.c.h.bf16 %v3086
        %v3167 = vunpack.c.h.bf16 %v3087
        %v3168 = vunpack.c.h.bf16 %v3088
        %v3169 = vunpack.c.h.bf16 %v3089
        %v3170 = vunpack.c.h.bf16 %v3090
        %v3171 = vunpack.c.h.bf16 %v3091
        %v3172 = vunpack.c.l.bf16 %v3092
        %v3173 = vunpack.c.l.bf16 %v3093
        %v3174 = vunpack.c.l.bf16 %v3094
        %v3175 = vunpack.c.l.bf16 %v3095
        %v3176 = vunpack.c.l.bf16 %v3096
        %v3177 = vunpack.c.l.bf16 %v3097
        %v3178 = vunpack.c.l.bf16 %v3098
        %v3179 = vunpack.c.l.bf16 %v3099
        %v3180 = vunpack.c.h.bf16 %v3092
        %v3181 = vunpack.c.h.bf16 %v3093
        %v3182 = vunpack.c.h.bf16 %v3094
        %v3183 = vunpack.c.h.bf16 %v3095
        %v3184 = vunpack.c.h.bf16 %v3096
        %v3185 = vunpack.c.h.bf16 %v3097
        %v3186 = vunpack.c.h.bf16 %v3098
        %v3187 = vunpack.c.h.bf16 %v3099
        %v3188 = vunpack.c.l.bf16 %v3100
        %v3189 = vunpack.c.l.bf16 %v3101
        %v3190 = vunpack.c.l.bf16 %v3102
        %v3191 = vunpack.c.l.bf16 %v3103
        %v3192 = vunpack.c.l.bf16 %v3104
        %v3193 = vunpack.c.l.bf16 %v3105
        %v3194 = vunpack.c.l.bf16 %v3106
        %v3195 = vunpack.c.l.bf16 %v3107
        %v3196 = vunpack.c.h.bf16 %v3100
        %v3197 = vunpack.c.h.bf16 %v3101
        %v3198 = vunpack.c.h.bf16 %v3102
        %v3199 = vunpack.c.h.bf16 %v3103
        %v3200 = vunpack.c.h.bf16 %v3104
        %v3201 = vunpack.c.h.bf16 %v3105
        %v3202 = vunpack.c.h.bf16 %v3106
        %v3203 = vunpack.c.h.bf16 %v3107
        %v3204 = vunpack.c.l.bf16 %v3108
        %v3205 = vunpack.c.l.bf16 %v3109
        %v3206 = vunpack.c.l.bf16 %v3110
        %v3207 = vunpack.c.l.bf16 %v3111
        %v3208 = vunpack.c.l.bf16 %v3112
        %v3209 = vunpack.c.l.bf16 %v3113
        %v3210 = vunpack.c.l.bf16 %v3114
        %v3211 = vunpack.c.l.bf16 %v3115
        %v3212 = vunpack.c.h.bf16 %v3108
        %v3213 = vunpack.c.h.bf16 %v3109
        %v3214 = vunpack.c.h.bf16 %v3110
        %v3215 = vunpack.c.h.bf16 %v3111
        %v3216 = vunpack.c.h.bf16 %v3112
        %v3217 = vunpack.c.h.bf16 %v3113
        %v3218 = vunpack.c.h.bf16 %v3114
        %v3219 = vunpack.c.h.bf16 %v3115
        %v3220 = vunpack.c.l.bf16 %v3116
        %v3221 = vunpack.c.l.bf16 %v3117
        %v3222 = vunpack.c.l.bf16 %v3118
        %v3223 = vunpack.c.l.bf16 %v3119
        %v3224 = vunpack.c.l.bf16 %v3120
        %v3225 = vunpack.c.l.bf16 %v3121
        %v3226 = vunpack.c.l.bf16 %v3122
        %v3227 = vunpack.c.l.bf16 %v3123
        %v3228 = vunpack.c.h.bf16 %v3116
        %v3229 = vunpack.c.h.bf16 %v3117
        %v3230 = vunpack.c.h.bf16 %v3118
        %v3231 = vunpack.c.h.bf16 %v3119
        %v3232 = vunpack.c.h.bf16 %v3120
        %v3233 = vunpack.c.h.bf16 %v3121
        %v3234 = vunpack.c.h.bf16 %v3122
        %v3235 = vunpack.c.h.bf16 %v3123
        %v3236 = vunpack.c.l.bf16 %v3124
        %v3237 = vunpack.c.l.bf16 %v3125
        %v3238 = vunpack.c.l.bf16 %v3126
        %v3239 = vunpack.c.l.bf16 %v3127
        %v3240 = vunpack.c.l.bf16 %v3128
        %v3241 = vunpack.c.l.bf16 %v3129
        %v3242 = vunpack.c.l.bf16 %v3130
        %v3243 = vunpack.c.l.bf16 %v3131
        %v3244 = vunpack.c.h.bf16 %v3124
        %v3245 = vunpack.c.h.bf16 %v3125
        %v3246 = vunpack.c.h.bf16 %v3126
        %v3247 = vunpack.c.h.bf16 %v3127
        %v3248 = vunpack.c.h.bf16 %v3128
        %v3249 = vunpack.c.h.bf16 %v3129
        %v3250 = vunpack.c.h.bf16 %v3130
        %v3251 = vunpack.c.h.bf16 %v3131
        %v3252 = vunpack.c.l.bf16 %v3132
        %v3253 = vunpack.c.l.bf16 %v3133
        %v3254 = vunpack.c.l.bf16 %v3134
        %v3255 = vunpack.c.l.bf16 %v3135
        %v3256 = vunpack.c.l.bf16 %v3136
        %v3257 = vunpack.c.l.bf16 %v3137
        %v3258 = vunpack.c.l.bf16 %v3138
        %v3259 = vunpack.c.l.bf16 %v3139
        %v3260 = vunpack.c.h.bf16 %v3132
        %v3261 = vunpack.c.h.bf16 %v3133
        %v3262 = vunpack.c.h.bf16 %v3134
        %v3263 = vunpack.c.h.bf16 %v3135
        %v3264 = vunpack.c.h.bf16 %v3136
        %v3265 = vunpack.c.h.bf16 %v3137
        %v3266 = vunpack.c.h.bf16 %v3138
        %v3267 = vunpack.c.h.bf16 %v3139
        %v3268 = vtanh.pop %v3140
        %v3269 = vtanh.pop %v3141
        %v3270 = vtanh.pop %v3142
        %v3271 = vtanh.pop %v3143
        %v3272 = vtanh.pop %v3144
        %v3273 = vtanh.pop %v3145
        %v3274 = vtanh.pop %v3146
        %v3275 = vtanh.pop %v3147
        %v3276 = vtanh.pop %v3148
        %v3277 = vtanh.pop %v3149
        %v3278 = vtanh.pop %v3150
        %v3279 = vtanh.pop %v3151
        %v3280 = vtanh.pop %v3152
        %v3281 = vtanh.pop %v3153
        %v3282 = vtanh.pop %v3154
        %v3283 = vtanh.pop %v3155
        %v3284 = vtanh.pop %v3156
        %v3285 = vtanh.pop %v3157
        %v3286 = vtanh.pop %v3158
        %v3287 = vtanh.pop %v3159
        %v3288 = vtanh.pop %v3160
        %v3289 = vtanh.pop %v3161
        %v3290 = vtanh.pop %v3162
        %v3291 = vtanh.pop %v3163
        %v3292 = vtanh.pop %v3164
        %v3293 = vtanh.pop %v3165
        %v3294 = vtanh.pop %v3166
        %v3295 = vtanh.pop %v3167
        %v3296 = vtanh.pop %v3168
        %v3297 = vtanh.pop %v3169
        %v3298 = vtanh.pop %v3170
        %v3299 = vtanh.pop %v3171
        %v3300 = vtanh.pop %v3172
        %v3301 = vtanh.pop %v3173
        %v3302 = vtanh.pop %v3174
        %v3303 = vtanh.pop %v3175
        %v3304 = vtanh.pop %v3176
        %v3305 = vtanh.pop %v3177
        %v3306 = vtanh.pop %v3178
        %v3307 = vtanh.pop %v3179
        %v3308 = vtanh.pop %v3180
        %v3309 = vtanh.pop %v3181
        %v3310 = vtanh.pop %v3182
        %v3311 = vtanh.pop %v3183
        %v3312 = vtanh.pop %v3184
        %v3313 = vtanh.pop %v3185
        %v3314 = vtanh.pop %v3186
        %v3315 = vtanh.pop %v3187
        %v3316 = vtanh.pop %v3188
        %v3317 = vtanh.pop %v3189
        %v3318 = vtanh.pop %v3190
        %v3319 = vtanh.pop %v3191
        %v3320 = vtanh.pop %v3192
        %v3321 = vtanh.pop %v3193
        %v3322 = vtanh.pop %v3194
        %v3323 = vtanh.pop %v3195
        %v3324 = vtanh.pop %v3196
        %v3325 = vtanh.pop %v3197
        %v3326 = vtanh.pop %v3198
        %v3327 = vtanh.pop %v3199
        %v3328 = vtanh.pop %v3200
        %v3329 = vtanh.pop %v3201
        %v3330 = vtanh.pop %v3202
        %v3331 = vtanh.pop %v3203
        %v3332 = vtanh.pop %v3204
        %v3333 = vtanh.pop %v3205
        %v3334 = vtanh.pop %v3206
        %v3335 = vtanh.pop %v3207
        %v3336 = vtanh.pop %v3208
        %v3337 = vtanh.pop %v3209
        %v3338 = vtanh.pop %v3210
        %v3339 = vtanh.pop %v3211
        %v3340 = vtanh.pop %v3212
        %v3341 = vtanh.pop %v3213
        %v3342 = vtanh.pop %v3214
        %v3343 = vtanh.pop %v3215
        %v3344 = vtanh.pop %v3216
        %v3345 = vtanh.pop %v3217
        %v3346 = vtanh.pop %v3218
        %v3347 = vtanh.pop %v3219
        %v3348 = vtanh.pop %v3220
        %v3349 = vtanh.pop %v3221
        %v3350 = vtanh.pop %v3222
        %v3351 = vtanh.pop %v3223
        %v3352 = vtanh.pop %v3224
        %v3353 = vtanh.pop %v3225
        %v3354 = vtanh.pop %v3226
        %v3355 = vtanh.pop %v3227
        %v3356 = vtanh.pop %v3228
        %v3357 = vtanh.pop %v3229
        %v3358 = vtanh.pop %v3230
        %v3359 = vtanh.pop %v3231
        %v3360 = vtanh.pop %v3232
        %v3361 = vtanh.pop %v3233
        %v3362 = vtanh.pop %v3234
        %v3363 = vtanh.pop %v3235
        %v3364 = vtanh.pop %v3236
        %v3365 = vtanh.pop %v3237
        %v3366 = vtanh.pop %v3238
        %v3367 = vtanh.pop %v3239
        %v3368 = vtanh.pop %v3240
        %v3369 = vtanh.pop %v3241
        %v3370 = vtanh.pop %v3242
        %v3371 = vtanh.pop %v3243
        %v3372 = vtanh.pop %v3244
        %v3373 = vtanh.pop %v3245
        %v3374 = vtanh.pop %v3246
        %v3375 = vtanh.pop %v3247
        %v3376 = vtanh.pop %v3248
        %v3377 = vtanh.pop %v3249
        %v3378 = vtanh.pop %v3250
        %v3379 = vtanh.pop %v3251
        %v3380 = vtanh.pop %v3252
        %v3381 = vtanh.pop %v3253
        %v3382 = vtanh.pop %v3254
        %v3383 = vtanh.pop %v3255
        %v3384 = vtanh.pop %v3256
        %v3385 = vtanh.pop %v3257
        %v3386 = vtanh.pop %v3258
        %v3387 = vtanh.pop %v3259
        %v3388 = vtanh.pop %v3260
        %v3389 = vtanh.pop %v3261
        %v3390 = vtanh.pop %v3262
        %v3391 = vtanh.pop %v3263
        %v3392 = vtanh.pop %v3264
        %v3393 = vtanh.pop %v3265
        %v3394 = vtanh.pop %v3266
        %v3395 = vtanh.pop %v3267
        %v3396 = vpack.c.bf16 %v3276, %v3268
        %v3397 = vpack.c.bf16 %v3277, %v3269
        %v3398 = vpack.c.bf16 %v3278, %v3270
        %v3399 = vpack.c.bf16 %v3279, %v3271
        %v3400 = vpack.c.bf16 %v3280, %v3272
        %v3401 = vpack.c.bf16 %v3281, %v3273
        %v3402 = vpack.c.bf16 %v3282, %v3274
        %v3403 = vpack.c.bf16 %v3283, %v3275
        %v3404 = vpack.c.bf16 %v3292, %v3284
        %v3405 = vpack.c.bf16 %v3293, %v3285
        %v3406 = vpack.c.bf16 %v3294, %v3286
        %v3407 = vpack.c.bf16 %v3295, %v3287
        %v3408 = vpack.c.bf16 %v3296, %v3288
        %v3409 = vpack.c.bf16 %v3297, %v3289
        %v3410 = vpack.c.bf16 %v3298, %v3290
        %v3411 = vpack.c.bf16 %v3299, %v3291
        %v3412 = vpack.c.bf16 %v3308, %v3300
        %v3413 = vpack.c.bf16 %v3309, %v3301
        %v3414 = vpack.c.bf16 %v3310, %v3302
        %v3415 = vpack.c.bf16 %v3311, %v3303
        %v3416 = vpack.c.bf16 %v3312, %v3304
        %v3417 = vpack.c.bf16 %v3313, %v3305
        %v3418 = vpack.c.bf16 %v3314, %v3306
        %v3419 = vpack.c.bf16 %v3315, %v3307
        %v3420 = vpack.c.bf16 %v3324, %v3316
        %v3421 = vpack.c.bf16 %v3325, %v3317
        %v3422 = vpack.c.bf16 %v3326, %v3318
        %v3423 = vpack.c.bf16 %v3327, %v3319
        %v3424 = vpack.c.bf16 %v3328, %v3320
        %v3425 = vpack.c.bf16 %v3329, %v3321
        %v3426 = vpack.c.bf16 %v3330, %v3322
        %v3427 = vpack.c.bf16 %v3331, %v3323
        %v3428 = vpack.c.bf16 %v3340, %v3332
        %v3429 = vpack.c.bf16 %v3341, %v3333
        %v3430 = vpack.c.bf16 %v3342, %v3334
        %v3431 = vpack.c.bf16 %v3343, %v3335
        %v3432 = vpack.c.bf16 %v3344, %v3336
        %v3433 = vpack.c.bf16 %v3345, %v3337
        %v3434 = vpack.c.bf16 %v3346, %v3338
        %v3435 = vpack.c.bf16 %v3347, %v3339
        %v3436 = vpack.c.bf16 %v3356, %v3348
        %v3437 = vpack.c.bf16 %v3357, %v3349
        %v3438 = vpack.c.bf16 %v3358, %v3350
        %v3439 = vpack.c.bf16 %v3359, %v3351
        %v3440 = vpack.c.bf16 %v3360, %v3352
        %v3441 = vpack.c.bf16 %v3361, %v3353
        %v3442 = vpack.c.bf16 %v3362, %v3354
        %v3443 = vpack.c.bf16 %v3363, %v3355
        %v3444 = vpack.c.bf16 %v3372, %v3364
        %v3445 = vpack.c.bf16 %v3373, %v3365
        %v3446 = vpack.c.bf16 %v3374, %v3366
        %v3447 = vpack.c.bf16 %v3375, %v3367
        %v3448 = vpack.c.bf16 %v3376, %v3368
        %v3449 = vpack.c.bf16 %v3377, %v3369
        %v3450 = vpack.c.bf16 %v3378, %v3370
        %v3451 = vpack.c.bf16 %v3379, %v3371
        %v3452 = vpack.c.bf16 %v3388, %v3380
        %v3453 = vpack.c.bf16 %v3389, %v3381
        %v3454 = vpack.c.bf16 %v3390, %v3382
        %v3455 = vpack.c.bf16 %v3391, %v3383
        %v3456 = vpack.c.bf16 %v3392, %v3384
        %v3457 = vpack.c.bf16 %v3393, %v3385
        %v3458 = vpack.c.bf16 %v3394, %v3386
        %v3459 = vpack.c.bf16 %v3395, %v3387
        %v3460 = vld [vmem:[%s7] sm:$0x1]
        %v3461 = vld [vmem:[#allocation2] sm:$0x1]
        %3463 = vset.pattern.permute.xlu0 0
        %3464 = vperm.xlu0 %3463, %v3461
        %v3465 = vpop.permute.xlu0 %3464
        %v3467 = vperm.slane %v3465, 0
        %3468 = vmatpush.bf16.msra.mxu0 %v3452
        %3469 = vmatpush.bf16.msra.mxu0 %v3444
        %3470 = vmatpush.bf16.msra.mxu0 %v3436
        %3471 = vmatpush.bf16.msra.mxu0 %v3428
        %3472 = vmatpush.bf16.msra.mxu0 %v3420
        %3473 = vmatpush.bf16.msra.mxu0 %v3412
        %3474 = vmatpush.bf16.msra.mxu0 %v3404
        %3475 = vmatpush.bf16.msra.mxu0 %v3396
        %3476 = vmatmul.bf16.gmra.mxu0 %v3460
        %v3477 = vpop.f32.mrf.mxu0
        %v3478 = vadd.f32 %v3467, %v3477
        %v3479 = vpop.f32.mrf.mxu0
        %3480 = vdwg.mxu0
        %3481 = vmatpush.bf16.msra.mxu0 %v3453
        %3482 = vmatpush.bf16.msra.mxu0 %v3445
        %3483 = vmatpush.bf16.msra.mxu0 %v3437
        %3484 = vmatpush.bf16.msra.mxu0 %v3429
        %3485 = vmatpush.bf16.msra.mxu0 %v3421
        %3486 = vmatpush.bf16.msra.mxu0 %v3413
        %3487 = vmatpush.bf16.msra.mxu0 %v3405
        %3488 = vmatpush.bf16.msra.mxu0 %v3397
        %3489 = vmatmul.bf16.gmra.mxu0 %v3460
        %v3490 = vpop.f32.mrf.mxu0
        %v3491 = vadd.f32 %v3467, %v3490
        %v3492 = vpop.f32.mrf.mxu0
        %3493 = vdwg.mxu0
        %3494 = vmatpush.bf16.msra.mxu0 %v3454
        %3495 = vmatpush.bf16.msra.mxu0 %v3446
        %3496 = vmatpush.bf16.msra.mxu0 %v3438
        %3497 = vmatpush.bf16.msra.mxu0 %v3430
        %3498 = vmatpush.bf16.msra.mxu0 %v3422
        %3499 = vmatpush.bf16.msra.mxu0 %v3414
        %3500 = vmatpush.bf16.msra.mxu0 %v3406
        %3501 = vmatpush.bf16.msra.mxu0 %v3398
        %3502 = vmatmul.bf16.gmra.mxu0 %v3460
        %v3503 = vpop.f32.mrf.mxu0
        %v3504 = vadd.f32 %v3467, %v3503
        %v3505 = vpop.f32.mrf.mxu0
        %3506 = vdwg.mxu0
        %3507 = vmatpush.bf16.msra.mxu0 %v3455
        %3508 = vmatpush.bf16.msra.mxu0 %v3447
        %3509 = vmatpush.bf16.msra.mxu0 %v3439
        %3510 = vmatpush.bf16.msra.mxu0 %v3431
        %3511 = vmatpush.bf16.msra.mxu0 %v3423
        %3512 = vmatpush.bf16.msra.mxu0 %v3415
        %3513 = vmatpush.bf16.msra.mxu0 %v3407
        %3514 = vmatpush.bf16.msra.mxu0 %v3399
        %3515 = vmatmul.bf16.gmra.mxu0 %v3460
        %v3516 = vpop.f32.mrf.mxu0
        %v3517 = vadd.f32 %v3467, %v3516
        %v3518 = vpop.f32.mrf.mxu0
        %3519 = vdwg.mxu0
        %3520 = vmatpush.bf16.msra.mxu0 %v3456
        %3521 = vmatpush.bf16.msra.mxu0 %v3448
        %3522 = vmatpush.bf16.msra.mxu0 %v3440
        %3523 = vmatpush.bf16.msra.mxu0 %v3432
        %3524 = vmatpush.bf16.msra.mxu0 %v3424
        %3525 = vmatpush.bf16.msra.mxu0 %v3416
        %3526 = vmatpush.bf16.msra.mxu0 %v3408
        %3527 = vmatpush.bf16.msra.mxu0 %v3400
        %3528 = vmatmul.bf16.gmra.mxu0 %v3460
        %v3529 = vpop.f32.mrf.mxu0
        %v3530 = vadd.f32 %v3467, %v3529
        %v3531 = vpop.f32.mrf.mxu0
        %3532 = vdwg.mxu0
        %3533 = vmatpush.bf16.msra.mxu0 %v3457
        %3534 = vmatpush.bf16.msra.mxu0 %v3449
        %3535 = vmatpush.bf16.msra.mxu0 %v3441
        %3536 = vmatpush.bf16.msra.mxu0 %v3433
        %3537 = vmatpush.bf16.msra.mxu0 %v3425
        %3538 = vmatpush.bf16.msra.mxu0 %v3417
        %3539 = vmatpush.bf16.msra.mxu0 %v3409
        %3540 = vmatpush.bf16.msra.mxu0 %v3401
        %3541 = vmatmul.bf16.gmra.mxu0 %v3460
        %v3542 = vpop.f32.mrf.mxu0
        %v3543 = vadd.f32 %v3467, %v3542
        %v3544 = vpop.f32.mrf.mxu0
        %3545 = vdwg.mxu0
        %3546 = vmatpush.bf16.msra.mxu0 %v3458
        %3547 = vmatpush.bf16.msra.mxu0 %v3450
        %3548 = vmatpush.bf16.msra.mxu0 %v3442
        %3549 = vmatpush.bf16.msra.mxu0 %v3434
        %3550 = vmatpush.bf16.msra.mxu0 %v3426
        %3551 = vmatpush.bf16.msra.mxu0 %v3418
        %3552 = vmatpush.bf16.msra.mxu0 %v3410
        %3553 = vmatpush.bf16.msra.mxu0 %v3402
        %3554 = vmatmul.bf16.gmra.mxu0 %v3460
        %v3555 = vpop.f32.mrf.mxu0
        %v3556 = vadd.f32 %v3467, %v3555
        %v3557 = vpop.f32.mrf.mxu0
        %3558 = vdwg.mxu0
        %3559 = vmatpush.bf16.msra.mxu0 %v3459
        %3560 = vmatpush.bf16.msra.mxu0 %v3451
        %3561 = vmatpush.bf16.msra.mxu0 %v3443
        %3562 = vmatpush.bf16.msra.mxu0 %v3435
        %3563 = vmatpush.bf16.msra.mxu0 %v3427
        %3564 = vmatpush.bf16.msra.mxu0 %v3419
        %3565 = vmatpush.bf16.msra.mxu0 %v3411
        %3566 = vmatpush.bf16.msra.mxu0 %v3403
        %3567 = vmatmul.bf16.gmra.mxu0 %v3460
        %v3568 = vpop.f32.mrf.mxu0
        %v3569 = vadd.f32 %v3467, %v3568
        %v3570 = vpop.f32.mrf.mxu0
        %3571 = vdwg.mxu0
        %v3572 = vxor.u32 %v3478, 2147483648
        %v3573 = vxor.u32 %v3491, 2147483648
        %v3574 = vxor.u32 %v3504, 2147483648
        %v3575 = vxor.u32 %v3517, 2147483648
        %v3576 = vxor.u32 %v3530, 2147483648
        %v3577 = vxor.u32 %v3543, 2147483648
        %v3578 = vxor.u32 %v3556, 2147483648
        %v3579 = vxor.u32 %v3569, 2147483648
        %v3580 = vmul.f32 %v3572, 1.442695
        %v3581 = vpow.pop %v3580
        %v3582 = vmul.f32 %v3573, 1.442695
        %v3583 = vpow.pop %v3582
        %v3584 = vmul.f32 %v3574, 1.442695
        %v3585 = vpow.pop %v3584
        %v3586 = vmul.f32 %v3575, 1.442695
        %v3587 = vpow.pop %v3586
        %v3588 = vmul.f32 %v3576, 1.442695
        %v3589 = vpow.pop %v3588
        %v3590 = vmul.f32 %v3577, 1.442695
        %v3591 = vpow.pop %v3590
        %v3592 = vmul.f32 %v3578, 1.442695
        %v3593 = vpow.pop %v3592
        %v3594 = vmul.f32 %v3579, 1.442695
        %v3595 = vpow.pop %v3594
        %v3596 = vadd.f32 %v3581, 1.0
        %v3597 = vadd.f32 %v3583, 1.0
        %v3598 = vadd.f32 %v3585, 1.0
        %v3599 = vadd.f32 %v3587, 1.0
        %v3600 = vadd.f32 %v3589, 1.0
        %v3601 = vadd.f32 %v3591, 1.0
        %v3602 = vadd.f32 %v3593, 1.0
        %v3603 = vadd.f32 %v3595, 1.0
        %v3604 = vrcp.pop %v3596
        %v3605 = vmul.f32 %v3596, %v3604
        %v3606 = vsub.f32 1.0, %v3605
        %v3607 = vmul.f32 %v3604, %v3606
        %v3608 = vadd.f32 %v3604, %v3607
        %vm3609 = vweird.f32 %v3596
        %vm3610 = vweird.f32 %v3604
        %vm3611 = vmor %vm3609, %vm3610
        %v3612 = vsel %vm3611, %v3604, %v3608
        %v3613 = vand.u32 2147483647, %v3596
        %vm3614 = vcmp.eq.f32.partialorder %v3613, 8.507059e+37
        %v3615 = vand.u32 %v3596, 2147483648
        %v3616 = vor.u32 1.1754944e-38, %v3615
        %v3617 = vsel %vm3614, %v3616, %v3612
        %v3618 = vmul.f32 1.0, %v3617
        %v3619 = vrcp.pop %v3597
        %v3620 = vmul.f32 %v3597, %v3619
        %v3621 = vsub.f32 1.0, %v3620
        %v3622 = vmul.f32 %v3619, %v3621
        %v3623 = vadd.f32 %v3619, %v3622
        %vm3624 = vweird.f32 %v3597
        %vm3625 = vweird.f32 %v3619
        %vm3626 = vmor %vm3624, %vm3625
        %v3627 = vsel %vm3626, %v3619, %v3623
        %v3628 = vand.u32 2147483647, %v3597
        %vm3629 = vcmp.eq.f32.partialorder %v3628, 8.507059e+37
        %v3630 = vand.u32 %v3597, 2147483648
        %v3631 = vor.u32 1.1754944e-38, %v3630
        %v3632 = vsel %vm3629, %v3631, %v3627
        %v3633 = vmul.f32 1.0, %v3632
        %v3634 = vrcp.pop %v3598
        %v3635 = vmul.f32 %v3598, %v3634
        %v3636 = vsub.f32 1.0, %v3635
        %v3637 = vmul.f32 %v3634, %v3636
        %v3638 = vadd.f32 %v3634, %v3637
        %vm3639 = vweird.f32 %v3598
        %vm3640 = vweird.f32 %v3634
        %vm3641 = vmor %vm3639, %vm3640
        %v3642 = vsel %vm3641, %v3634, %v3638
        %v3643 = vand.u32 2147483647, %v3598
        %vm3644 = vcmp.eq.f32.partialorder %v3643, 8.507059e+37
        %v3645 = vand.u32 %v3598, 2147483648
        %v3646 = vor.u32 1.1754944e-38, %v3645
        %v3647 = vsel %vm3644, %v3646, %v3642
        %v3648 = vmul.f32 1.0, %v3647
        %v3649 = vrcp.pop %v3599
        %v3650 = vmul.f32 %v3599, %v3649
        %v3651 = vsub.f32 1.0, %v3650
        %v3652 = vmul.f32 %v3649, %v3651
        %v3653 = vadd.f32 %v3649, %v3652
        %vm3654 = vweird.f32 %v3599
        %vm3655 = vweird.f32 %v3649
        %vm3656 = vmor %vm3654, %vm3655
        %v3657 = vsel %vm3656, %v3649, %v3653
        %v3658 = vand.u32 2147483647, %v3599
        %vm3659 = vcmp.eq.f32.partialorder %v3658, 8.507059e+37
        %v3660 = vand.u32 %v3599, 2147483648
        %v3661 = vor.u32 1.1754944e-38, %v3660
        %v3662 = vsel %vm3659, %v3661, %v3657
        %v3663 = vmul.f32 1.0, %v3662
        %v3664 = vrcp.pop %v3600
        %v3665 = vmul.f32 %v3600, %v3664
        %v3666 = vsub.f32 1.0, %v3665
        %v3667 = vmul.f32 %v3664, %v3666
        %v3668 = vadd.f32 %v3664, %v3667
        %vm3669 = vweird.f32 %v3600
        %vm3670 = vweird.f32 %v3664
        %vm3671 = vmor %vm3669, %vm3670
        %v3672 = vsel %vm3671, %v3664, %v3668
        %v3673 = vand.u32 2147483647, %v3600
        %vm3674 = vcmp.eq.f32.partialorder %v3673, 8.507059e+37
        %v3675 = vand.u32 %v3600, 2147483648
        %v3676 = vor.u32 1.1754944e-38, %v3675
        %v3677 = vsel %vm3674, %v3676, %v3672
        %v3678 = vmul.f32 1.0, %v3677
        %v3679 = vrcp.pop %v3601
        %v3680 = vmul.f32 %v3601, %v3679
        %v3681 = vsub.f32 1.0, %v3680
        %v3682 = vmul.f32 %v3679, %v3681
        %v3683 = vadd.f32 %v3679, %v3682
        %vm3684 = vweird.f32 %v3601
        %vm3685 = vweird.f32 %v3679
        %vm3686 = vmor %vm3684, %vm3685
        %v3687 = vsel %vm3686, %v3679, %v3683
        %v3688 = vand.u32 2147483647, %v3601
        %vm3689 = vcmp.eq.f32.partialorder %v3688, 8.507059e+37
        %v3690 = vand.u32 %v3601, 2147483648
        %v3691 = vor.u32 1.1754944e-38, %v3690
        %v3692 = vsel %vm3689, %v3691, %v3687
        %v3693 = vmul.f32 1.0, %v3692
        %v3694 = vrcp.pop %v3602
        %v3695 = vmul.f32 %v3602, %v3694
        %v3696 = vsub.f32 1.0, %v3695
        %v3697 = vmul.f32 %v3694, %v3696
        %v3698 = vadd.f32 %v3694, %v3697
        %vm3699 = vweird.f32 %v3602
        %vm3700 = vweird.f32 %v3694
        %vm3701 = vmor %vm3699, %vm3700
        %v3702 = vsel %vm3701, %v3694, %v3698
        %v3703 = vand.u32 2147483647, %v3602
        %vm3704 = vcmp.eq.f32.partialorder %v3703, 8.507059e+37
        %v3705 = vand.u32 %v3602, 2147483648
        %v3706 = vor.u32 1.1754944e-38, %v3705
        %v3707 = vsel %vm3704, %v3706, %v3702
        %v3708 = vmul.f32 1.0, %v3707
        %v3709 = vrcp.pop %v3603
        %v3710 = vmul.f32 %v3603, %v3709
        %v3711 = vsub.f32 1.0, %v3710
        %v3712 = vmul.f32 %v3709, %v3711
        %v3713 = vadd.f32 %v3709, %v3712
        %vm3714 = vweird.f32 %v3603
        %vm3715 = vweird.f32 %v3709
        %vm3716 = vmor %vm3714, %vm3715
        %v3717 = vsel %vm3716, %v3709, %v3713
        %v3718 = vand.u32 2147483647, %v3603
        %vm3719 = vcmp.eq.f32.partialorder %v3718, 8.507059e+37
        %v3720 = vand.u32 %v3603, 2147483648
        %v3721 = vor.u32 1.1754944e-38, %v3720
        %v3722 = vsel %vm3719, %v3721, %v3717
        %v3723 = vmul.f32 1.0, %v3722
        %v3732 = vrot.slane %v3633, 7
        %v3733 = vrot.slane %v3648, 6
        %v3734 = vrot.slane %v3663, 5
        %v3735 = vrot.slane %v3678, 4
        %v3736 = vrot.slane %v3693, 3
        %v3737 = vrot.slane %v3708, 2
        %v3738 = vrot.slane %v3723, 1
        %vm3739 = vcmask 1040384
        %v3740 = vsel %vm3739, %v3618, %v3732
        %vm3741 = vcmask 1042434
        %v3742 = vsel %vm3741, %v3733, %v3734
        %vm3743 = vcmask 1041408
        %v3744 = vsel %vm3743, %v3740, %v3742
        %vm3745 = vcmask 1044484
        %v3746 = vsel %vm3745, %v3735, %v3736
        %vm3747 = vcmask 1046534
        %v3748 = vsel %vm3747, %v3737, %v3738
        %vm3749 = vcmask 1045508
        %v3750 = vsel %vm3749, %v3746, %v3748
        %vm3751 = vcmask 1043456
        %v3752 = vsel %vm3751, %v3744, %v3750
        %3754 = vst [vmem:[%s367] sm:$0xff] %v3752
        %s3755 = sand.u32 %s248, 1
        %s3756 = scalar_lea.sflag [#allocation4], %s3755
        %s3757 = sand.u32 %s248, 1
        %s3758 = smul.addr %s3757, 8
        %s3759 = scalar_lea.vmem [#allocation3], %s3758
        // Predicated region
        $region57: #{tpu_custom_call.1} parent=55 // pred_check
          %p3760 = pneg %p258
        $region58: #{tpu_custom_call.1} parent=55 // pred_check_branch
          %3762 = sbr.rel (%p3760) target = $region60
        $region59: #{tpu_custom_call.1} parent=55 // pred_region
          %s3763 = smul.u32 8, %s30
          %3765 = vsyncadd %s3756, 0
          %s3766 = smul.addr %s29, 8
          %s3767 = sadd.s32 %s3763, %s3766
          %s3768 = scalar_lea.hbm %s9, %s3767
          %s3770 = sshll.u32 %s3759, 4
          %s3771 = int_to_ptr.vmem [resolvable:$true] %s3770
          %s3772 = sshll.u32 %s3768, 4
          %s3773 = int_to_ptr.hbm [resolvable:$true] %s3772
          %3775 = dma.vmem_to_hbm [thread:$0]  %s3771, 128, %s3773, %s3756
        $region60: #{tpu_custom_call.1} parent=55 // pred_fallthru
          _
      $region56: #{tpu_custom_call.1} parent=5 // pred_fallthru
        _
      %p3776 = scmp.le.s32.totalorder 2, %s20
      // Predicated region
      $region61: #{tpu_custom_call.1} parent=5 // pred_check
        %p3777 = pneg %p3776
      $region62: #{tpu_custom_call.1} parent=5 // pred_check_branch
        %3779 = sbr.rel (%p3777) target = $region64
      $region63: #{tpu_custom_call.1} parent=5 // pred_region
        %s3780 = ssub.s32 %s20, 2
        // Predicated region
        $region65: #{tpu_custom_call.1} parent=63 // pred_check
          %p3781 = pneg %p264
        $region66: #{tpu_custom_call.1} parent=63 // pred_check_branch
          %3783 = sbr.rel (%p3781) target = $region68
        $region67: #{tpu_custom_call.1} parent=63 // pred_region
          %s3784 = sand.u32 %s249, 1
          %s3785 = scalar_lea.sflag [#allocation4], %s3784
          %s3786 = sand.u32 %s249, 1
          %s3787 = smul.addr %s3786, 8
          %s3788 = scalar_lea.vmem [#allocation3], %s3787
          %3790 = dma.done %s3785, 128
        $region68: #{tpu_custom_call.1} parent=63 // pred_fallthru
          _
      $region64: #{tpu_custom_call.1} parent=5 // pred_fallthru
        _
    $region6: #{tpu_custom_call.1} parent=1 // loop_footer
      %s24 = sadd.s32 1, %s20
    $region7: #{tpu_custom_call.1} parent=1 // loop_footer_branch
      %19 = sbr.rel target = $region3
    $region8: #{tpu_custom_call.1} parent=1 // loop_exit
      _
    %3791 = vsyncpa [#allocation4], 1
    %s3792 = scalar_lea.sflag [#allocation4], 1
    %3793 = vsyncpa %s3792, 1

</llo_original>
